<compile_context>
chip_gen: v7x
topology: tpu7x:2x2x1
jax: 0.10.0
libtpu: 0.0.40
codegen_flags: <defaults>
</compile_context>

<pallas_src>
import functools

import jax
import jax.numpy as jnp
from jax.experimental import pallas as pl
from jax.experimental.pallas import tpu as pltpu

_VMEM = functools.partial(pl.BlockSpec, memory_space=pltpu.MemorySpace.VMEM)
_SMEM = functools.partial(pl.BlockSpec, memory_space=pltpu.MemorySpace.SMEM)


# ----------------------------- Pallas kernel -------------------------------

def _fused_forward_kernel(x_ref, prior_ref, alpha_ref,
                          wp_ref, bp_ref,
                          ln1_g_ref, ln1_b_ref,
                          wq_ref, bq_ref, wk_ref, bk_ref, wv_ref, bv_ref,
                          ln2_g_ref, ln2_b_ref,
                          w1_ref, b1_ref, w2_ref, b2_ref,
                          w1h_ref, b1h_ref, w2h_ref, b2h_ref,
                          out_ref,
                          *, num_layers, batch, nodes, heads, head_dim,
                          factor, eps):
    """lin_proj + all PriorTransformer blocks + concat-pool head, VMEM-resident."""
    hidden = heads * head_dim

    def dense(a, w, b):
        # bf16 MXU operands, f32 accumulation.
        y = jnp.dot(a.astype(w.dtype), w, preferred_element_type=jnp.float32)
        return y + b

    def layer_norm(a, g, beta):
        mu = jnp.mean(a, axis=-1, keepdims=True)
        var = jnp.mean(jnp.square(a - mu), axis=-1, keepdims=True)
        return (a - mu) * jax.lax.rsqrt(var + eps) * g + beta

    x = x_ref[...]                              # (B*N, D_in) f32
    # Softmax scale folded once into the prior (and per-layer into q):
    # softmax((qk^T + a*prior)*factor) == softmax((q*factor)k^T + a*(prior*factor))
    prior_f = prior_ref[...] * factor           # (B, N, N) f32
    out = dense(x, wp_ref[...], bp_ref[...])    # (B*N, H)  f32

    for l in range(num_layers):
        # ---------------- PriorMSA sublayer ----------------
        z1 = layer_norm(out, ln1_g_ref[l], ln1_b_ref[l])
        q = dense(z1, wq_ref[l], bq_ref[l]) * factor
        k = dense(z1, wk_ref[l], bk_ref[l])
        v = dense(z1, wv_ref[l], bv_ref[l])

        # Cast once, view as (B, N, H); heads are static lane slices.
        q3 = q.reshape(batch, nodes, hidden).astype(jnp.bfloat16)
        k3 = k.reshape(batch, nodes, hidden).astype(jnp.bfloat16)
        v3 = v.reshape(batch, nodes, hidden).astype(jnp.bfloat16)
        alpha_prior = alpha_ref[l] * prior_f    # (B, N, N), shared across heads

        head_outs = []
        for h in range(heads):
            c0 = h * head_dim
            qh = q3[:, :, c0:c0 + head_dim]     # (B, N, d)
            kh = k3[:, :, c0:c0 + head_dim]
            vh = v3[:, :, c0:c0 + head_dim]
            # scores: 'bqd,bkd->bqk', batched over B, f32 accumulate.
            s = jax.lax.dot_general(qh, kh, (((2,), (2,)), ((0,), (0,))),
                                    preferred_element_type=jnp.float32)
            s = s + alpha_prior
            s = s - jnp.max(s, axis=-1, keepdims=True)
            e = jnp.exp(s)
            att = e * pl.reciprocal(jnp.sum(e, axis=-1, keepdims=True),
                                    approx=True)
            # out: 'bqk,bkd->bqd'
            o_h = jax.lax.dot_general(att.astype(jnp.bfloat16), vh,
                                      (((2,), (1,)), ((0,), (0,))),
                                      preferred_element_type=jnp.float32)
            head_outs.append(o_h)               # (B, N, d) f32

        attn = jnp.concatenate(head_outs, axis=-1)          # (B, N, H)
        s1 = out + attn.reshape(batch * nodes, hidden)

        # ---------------- MLP sublayer ----------------
        z2 = layer_norm(s1, ln2_g_ref[l], ln2_b_ref[l])
        h1 = jnp.maximum(dense(z2, w1_ref[l], b1_ref[l]), 0.0)
        out = s1 + dense(h1, w2_ref[l], b2_ref[l])

    # ------------- concat pooling + fused head MLP -------------
    # pooled[b, n*H + h] == out[b, n, h]; head W1 is passed as (N, H, K), so
    # pooled @ W1 == sum_n out[:, n, :] @ W1[n].
    out3 = out.reshape(batch, nodes, hidden)
    head_hidden = w1h_ref.shape[-1]
    hh = jnp.zeros((batch, head_hidden), jnp.float32)
    # TODO(synk): for large num_nodes, replace this static node loop with a tiled batched matmul.
    for n_idx in range(nodes):
        w1n = w1h_ref[n_idx]                                 # (H, K) bf16
        hh = hh + jnp.dot(out3[:, n_idx, :].astype(w1n.dtype), w1n,
                          preferred_element_type=jnp.float32)
    hh = jnp.maximum(hh + b1h_ref[...], 0.0)
    w2h = w2h_ref[...]
    out_ref[...] = jnp.dot(hh.astype(w2h.dtype), w2h,
                           preferred_element_type=jnp.float32) + b2h_ref[...]


# -------------------------- parameters & forward ---------------------------

def init_params(key, *, input_dim, hidden, num_layers, mlp_hidden,
                n_nodes, head_hidden, n_classes):
    """Weights pre-cast to bf16 (MXU operand dtype); biases / LN params stay f32."""
    wdt = jnp.bfloat16

    def dense_w(k, fan_in, fan_out):
        return (jax.random.normal(k, (fan_in, fan_out), jnp.float32) * 0.02).astype(wdt)

    def stacked(k, fan_in, fan_out):
        w = (jax.random.normal(k, (num_layers, fan_in, fan_out), jnp.float32) * 0.02).astype(wdt)
        return w, jnp.zeros((num_layers, 1, fan_out), jnp.float32)

    keys = jax.random.split(key, 8)
    wq, bq = stacked(keys[1], hidden, hidden)
    wk, bk = stacked(keys[2], hidden, hidden)
    wv, bv = stacked(keys[3], hidden, hidden)
    w1, b1 = stacked(keys[4], hidden, mlp_hidden)
    w2, b2 = stacked(keys[5], mlp_hidden, hidden)
    return {
        "lin_proj_w": dense_w(keys[0], input_dim, hidden),
        "lin_proj_b": jnp.zeros((1, hidden), jnp.float32),
        "ln1_g": jnp.ones((num_layers, 1, hidden), jnp.float32),
        "ln1_b": jnp.zeros((num_layers, 1, hidden), jnp.float32),
        "ln2_g": jnp.ones((num_layers, 1, hidden), jnp.float32),
        "ln2_b": jnp.zeros((num_layers, 1, hidden), jnp.float32),
        "wq": wq, "bq": bq, "wk": wk, "bk": bk, "wv": wv, "bv": bv,
        "w1": w1, "b1": b1, "w2": w2, "b2": b2,
        "alpha": jnp.ones((num_layers,), jnp.float32),  # PriorMSAConfig.alpha default
        # pooling == 'concat': fcn1 W is (N*H, K), stored pre-reshaped as (N, H, K).
        "fcn1_w": dense_w(keys[6], n_nodes * hidden, head_hidden).reshape(
            n_nodes, hidden, head_hidden),
        "fcn1_b": jnp.zeros((1, head_hidden), jnp.float32),
        "fcn2_w": dense_w(keys[7], head_hidden, n_classes),
        "fcn2_b": jnp.zeros((1, n_classes), jnp.float32),
    }


def prior_transformer_forward(params, x, prior_attn, *, heads):
    b, n, d_in = x.shape
    hidden = params["wq"].shape[1]
    num_layers = params["wq"].shape[0]
    n_classes = params["fcn2_w"].shape[-1]
    p = hidden // heads
    factor = float(p) ** -0.5  # MSA scaling (1/sqrt(head_dim))

    x2d = x.reshape(b * n, d_in)
    args = (x2d, prior_attn, params["alpha"],
            params["lin_proj_w"], params["lin_proj_b"],
            params["ln1_g"], params["ln1_b"],
            params["wq"], params["bq"], params["wk"], params["bk"],
            params["wv"], params["bv"],
            params["ln2_g"], params["ln2_b"],
            params["w1"], params["b1"], params["w2"], params["b2"],
            params["fcn1_w"], params["fcn1_b"],
            params["fcn2_w"], params["fcn2_b"])

    # Scoped-VMEM budget from the actual resident footprint (+ headroom),
    # capped at v7x's 64 MiB physical VMEM per core.
    footprint = sum(int(a.size) * a.dtype.itemsize for a in args) + b * n_classes * 4
    vmem_limit = int(min(64 * 1024 * 1024,
                         max(32 * 1024 * 1024, 4 * footprint)))

    fused = pl.pallas_call(
        functools.partial(_fused_forward_kernel, num_layers=num_layers, batch=b,
                          nodes=n, heads=heads, head_dim=p, factor=factor,
                          eps=1e-5),
        out_shape=jax.ShapeDtypeStruct((b, n_classes), jnp.float32),
        in_specs=[_VMEM(), _VMEM(), _SMEM()] + [_VMEM()] * 20,
        out_specs=_VMEM(),
        compiler_params=pltpu.CompilerParams(vmem_limit_bytes=vmem_limit),
    )
    return fused(*args)


# --------------------------------- main -------------------------------------

if __name__ == "__main__":
    B, N, INPUT_DIM, HIDDEN, HEADS, LAYERS = 2, 8, 16, 32, 4, 2
    MLP_HIDDEN = 64     # hidden * mlp_hidden_multiplier (=2)
    HEAD_HIDDEN = 64    # head MLP hidden size
    N_CLASSES = 3

    key = jax.random.PRNGKey(0)
    kx, kp, kpar = jax.random.split(key, 3)
    x = jax.random.normal(kx, (B, N, INPUT_DIM), jnp.float32)
    prior_attn = jax.random.normal(kp, (B, N, N), jnp.float32)

    params = init_params(kpar, input_dim=INPUT_DIM, hidden=HIDDEN,
                         num_layers=LAYERS, mlp_hidden=MLP_HIDDEN,
                         n_nodes=N, head_hidden=HEAD_HIDDEN, n_classes=N_CLASSES)

    fwd = jax.jit(functools.partial(prior_transformer_forward, heads=HEADS))
    logits = fwd(params, x, prior_attn)
    jax.block_until_ready(logits)
    assert logits.shape == (B, N_CLASSES), logits.shape
    print("KERNEL_OK")
</pallas_src>

<mosaic_0001>
module attributes {stable_mosaic.version = 11 : i64} {
  func.func @_fused_forward_kernel(%arg0: memref<16x16xf32, #tpu.memory_space<vmem>>, %arg1: memref<2x8x8xf32, #tpu.memory_space<vmem>>, %arg2: memref<2xf32, #tpu.memory_space<smem>>, %arg3: memref<16x32xbf16, #tpu.memory_space<vmem>>, %arg4: memref<1x32xf32, #tpu.memory_space<vmem>>, %arg5: memref<2x1x32xf32, #tpu.memory_space<vmem>>, %arg6: memref<2x1x32xf32, #tpu.memory_space<vmem>>, %arg7: memref<2x32x32xbf16, #tpu.memory_space<vmem>>, %arg8: memref<2x1x32xf32, #tpu.memory_space<vmem>>, %arg9: memref<2x32x32xbf16, #tpu.memory_space<vmem>>, %arg10: memref<2x1x32xf32, #tpu.memory_space<vmem>>, %arg11: memref<2x32x32xbf16, #tpu.memory_space<vmem>>, %arg12: memref<2x1x32xf32, #tpu.memory_space<vmem>>, %arg13: memref<2x1x32xf32, #tpu.memory_space<vmem>>, %arg14: memref<2x1x32xf32, #tpu.memory_space<vmem>>, %arg15: memref<2x32x64xbf16, #tpu.memory_space<vmem>>, %arg16: memref<2x1x64xf32, #tpu.memory_space<vmem>>, %arg17: memref<2x64x32xbf16, #tpu.memory_space<vmem>>, %arg18: memref<2x1x32xf32, #tpu.memory_space<vmem>>, %arg19: memref<8x32x64xbf16, #tpu.memory_space<vmem>>, %arg20: memref<1x64xf32, #tpu.memory_space<vmem>>, %arg21: memref<64x3xbf16, #tpu.memory_space<vmem>>, %arg22: memref<1x3xf32, #tpu.memory_space<vmem>>, %arg23: memref<2x3xf32, #tpu.memory_space<vmem>>) attributes {dimension_semantics = [], scalar_prefetch = 0 : i64, scratch_operands = 0 : i64, tpu.core_type = #tpu.core_type<tc>} {
    %c0 = arith.constant 0 : index
    %c0_0 = arith.constant 0 : index
    %0 = vector.load %arg0[%c0, %c0_0] : memref<16x16xf32, #tpu.memory_space<vmem>>, vector<16x16xf32>
    %c0_1 = arith.constant 0 : index
    %c0_2 = arith.constant 0 : index
    %c0_3 = arith.constant 0 : index
    %1 = vector.load %arg1[%c0_1, %c0_2, %c0_3] : memref<2x8x8xf32, #tpu.memory_space<vmem>>, vector<2x8x8xf32>
    %cst = arith.constant 0.353553385 : f32
    %2 = vector.broadcast %cst : f32 to vector<2x8x8xf32>
    %3 = arith.mulf %1, %2 : vector<2x8x8xf32>
    %c0_4 = arith.constant 0 : index
    %c0_5 = arith.constant 0 : index
    %4 = vector.load %arg3[%c0_4, %c0_5] : memref<16x32xbf16, #tpu.memory_space<vmem>>, vector<16x32xbf16>
    %c0_6 = arith.constant 0 : index
    %c0_7 = arith.constant 0 : index
    %5 = vector.load %arg4[%c0_6, %c0_7] : memref<1x32xf32, #tpu.memory_space<vmem>>, vector<1x32xf32>
    %6 = arith.truncf %0 : vector<16x16xf32> to vector<16x16xbf16>
    %cst_8 = arith.constant dense<0.000000e+00> : vector<16x32xf32>
    %7 = tpu.matmul %6, %4, %cst_8 {dimension_numbers = #tpu.dot_dimension_numbers<[1], [0], [0], [1], [0, 0, 1, 1], [], []>} : vector<16x16xbf16>, vector<16x32xbf16>, vector<16x32xf32> -> vector<16x32xf32>
    %8 = vector.broadcast %5 : vector<1x32xf32> to vector<16x32xf32>
    %9 = arith.addf %7, %8 : vector<16x32xf32>
    %c0_9 = arith.constant 0 : index
    %c0_10 = arith.constant 0 : index
    %c0_11 = arith.constant 0 : index
    %10 = vector.load %arg5[%c0_9, %c0_10, %c0_11] : memref<2x1x32xf32, #tpu.memory_space<vmem>>, vector<1x1x32xf32>
    %11 = vector.shape_cast %10 : vector<1x1x32xf32> to vector<1x32xf32>
    %c0_12 = arith.constant 0 : index
    %c0_13 = arith.constant 0 : index
    %c0_14 = arith.constant 0 : index
    %12 = vector.load %arg6[%c0_12, %c0_13, %c0_14] : memref<2x1x32xf32, #tpu.memory_space<vmem>>, vector<1x1x32xf32>
    %13 = vector.shape_cast %12 : vector<1x1x32xf32> to vector<1x32xf32>
    %cst_15 = arith.constant dense<0.000000e+00> : vector<16xf32>
    %14 = vector.multi_reduction <add>, %9, %cst_15 [1] : vector<16x32xf32> to vector<16xf32>
    %15 = vector.shape_cast %14 : vector<16xf32> to vector<16x1xf32>
    %cst_16 = arith.constant 3.200000e+01 : f32
    %16 = vector.broadcast %cst_16 : f32 to vector<16x1xf32>
    %17 = arith.divf %15, %16 : vector<16x1xf32>
    %18 = vector.broadcast %17 : vector<16x1xf32> to vector<16x32xf32>
    %19 = arith.subf %9, %18 : vector<16x32xf32>
    %20 = arith.mulf %19, %19 : vector<16x32xf32>
    %cst_17 = arith.constant dense<0.000000e+00> : vector<16xf32>
    %21 = vector.multi_reduction <add>, %20, %cst_17 [1] : vector<16x32xf32> to vector<16xf32>
    %22 = vector.shape_cast %21 : vector<16xf32> to vector<16x1xf32>
    %cst_18 = arith.constant 3.200000e+01 : f32
    %23 = vector.broadcast %cst_18 : f32 to vector<16x1xf32>
    %24 = arith.divf %22, %23 : vector<16x1xf32>
    %25 = vector.broadcast %17 : vector<16x1xf32> to vector<16x32xf32>
    %26 = arith.subf %9, %25 : vector<16x32xf32>
    %cst_19 = arith.constant 9.99999974E-6 : f32
    %27 = vector.broadcast %cst_19 : f32 to vector<16x1xf32>
    %28 = arith.addf %24, %27 : vector<16x1xf32>
    %29 = math.rsqrt %28 : vector<16x1xf32>
    %30 = vector.broadcast %29 : vector<16x1xf32> to vector<16x32xf32>
    %31 = arith.mulf %26, %30 : vector<16x32xf32>
    %32 = vector.broadcast %11 : vector<1x32xf32> to vector<16x32xf32>
    %33 = arith.mulf %31, %32 : vector<16x32xf32>
    %34 = vector.broadcast %13 : vector<1x32xf32> to vector<16x32xf32>
    %35 = arith.addf %33, %34 : vector<16x32xf32>
    %c0_20 = arith.constant 0 : index
    %c0_21 = arith.constant 0 : index
    %c0_22 = arith.constant 0 : index
    %36 = vector.load %arg7[%c0_20, %c0_21, %c0_22] : memref<2x32x32xbf16, #tpu.memory_space<vmem>>, vector<1x32x32xbf16>
    %37 = vector.shape_cast %36 : vector<1x32x32xbf16> to vector<32x32xbf16>
    %c0_23 = arith.constant 0 : index
    %c0_24 = arith.constant 0 : index
    %c0_25 = arith.constant 0 : index
    %38 = vector.load %arg8[%c0_23, %c0_24, %c0_25] : memref<2x1x32xf32, #tpu.memory_space<vmem>>, vector<1x1x32xf32>
    %39 = vector.shape_cast %38 : vector<1x1x32xf32> to vector<1x32xf32>
    %40 = arith.truncf %35 : vector<16x32xf32> to vector<16x32xbf16>
    %cst_26 = arith.constant dense<0.000000e+00> : vector<16x32xf32>
    %41 = tpu.matmul %40, %37, %cst_26 {dimension_numbers = #tpu.dot_dimension_numbers<[1], [0], [0], [1], [0, 0, 1, 1], [], []>} : vector<16x32xbf16>, vector<32x32xbf16>, vector<16x32xf32> -> vector<16x32xf32>
    %42 = vector.broadcast %39 : vector<1x32xf32> to vector<16x32xf32>
    %43 = arith.addf %41, %42 : vector<16x32xf32>
    %cst_27 = arith.constant 0.353553385 : f32
    %44 = vector.broadcast %cst_27 : f32 to vector<16x32xf32>
    %45 = arith.mulf %43, %44 : vector<16x32xf32>
    %c0_28 = arith.constant 0 : index
    %c0_29 = arith.constant 0 : index
    %c0_30 = arith.constant 0 : index
    %46 = vector.load %arg9[%c0_28, %c0_29, %c0_30] : memref<2x32x32xbf16, #tpu.memory_space<vmem>>, vector<1x32x32xbf16>
    %47 = vector.shape_cast %46 : vector<1x32x32xbf16> to vector<32x32xbf16>
    %c0_31 = arith.constant 0 : index
    %c0_32 = arith.constant 0 : index
    %c0_33 = arith.constant 0 : index
    %48 = vector.load %arg10[%c0_31, %c0_32, %c0_33] : memref<2x1x32xf32, #tpu.memory_space<vmem>>, vector<1x1x32xf32>
    %49 = vector.shape_cast %48 : vector<1x1x32xf32> to vector<1x32xf32>
    %50 = arith.truncf %35 : vector<16x32xf32> to vector<16x32xbf16>
    %cst_34 = arith.constant dense<0.000000e+00> : vector<16x32xf32>
    %51 = tpu.matmul %50, %47, %cst_34 {dimension_numbers = #tpu.dot_dimension_numbers<[1], [0], [0], [1], [0, 0, 1, 1], [], []>} : vector<16x32xbf16>, vector<32x32xbf16>, vector<16x32xf32> -> vector<16x32xf32>
    %52 = vector.broadcast %49 : vector<1x32xf32> to vector<16x32xf32>
    %53 = arith.addf %51, %52 : vector<16x32xf32>
    %c0_35 = arith.constant 0 : index
    %c0_36 = arith.constant 0 : index
    %c0_37 = arith.constant 0 : index
    %54 = vector.load %arg11[%c0_35, %c0_36, %c0_37] : memref<2x32x32xbf16, #tpu.memory_space<vmem>>, vector<1x32x32xbf16>
    %55 = vector.shape_cast %54 : vector<1x32x32xbf16> to vector<32x32xbf16>
    %c0_38 = arith.constant 0 : index
    %c0_39 = arith.constant 0 : index
    %c0_40 = arith.constant 0 : index
    %56 = vector.load %arg12[%c0_38, %c0_39, %c0_40] : memref<2x1x32xf32, #tpu.memory_space<vmem>>, vector<1x1x32xf32>
    %57 = vector.shape_cast %56 : vector<1x1x32xf32> to vector<1x32xf32>
    %58 = arith.truncf %35 : vector<16x32xf32> to vector<16x32xbf16>
    %cst_41 = arith.constant dense<0.000000e+00> : vector<16x32xf32>
    %59 = tpu.matmul %58, %55, %cst_41 {dimension_numbers = #tpu.dot_dimension_numbers<[1], [0], [0], [1], [0, 0, 1, 1], [], []>} : vector<16x32xbf16>, vector<32x32xbf16>, vector<16x32xf32> -> vector<16x32xf32>
    %60 = vector.broadcast %57 : vector<1x32xf32> to vector<16x32xf32>
    %61 = arith.addf %59, %60 : vector<16x32xf32>
    %62 = vector.shape_cast %45 : vector<16x32xf32> to vector<2x8x32xf32>
    %63 = arith.truncf %62 : vector<2x8x32xf32> to vector<2x8x32xbf16>
    %64 = vector.shape_cast %53 : vector<16x32xf32> to vector<2x8x32xf32>
    %65 = arith.truncf %64 : vector<2x8x32xf32> to vector<2x8x32xbf16>
    %66 = vector.shape_cast %61 : vector<16x32xf32> to vector<2x8x32xf32>
    %67 = arith.truncf %66 : vector<2x8x32xf32> to vector<2x8x32xbf16>
    %c0_42 = arith.constant 0 : index
    %68 = memref.load %arg2[%c0_42] : memref<2xf32, #tpu.memory_space<smem>>
    %69 = vector.broadcast %68 : f32 to vector<2x8x8xf32>
    %70 = arith.mulf %69, %3 : vector<2x8x8xf32>
    %71 = vector.extract_strided_slice %63 {offsets = [0, 0, 0], sizes = [2, 8, 8], strides = [1, 1, 1]} : vector<2x8x32xbf16> to vector<2x8x8xbf16>
    %72 = vector.extract_strided_slice %65 {offsets = [0, 0, 0], sizes = [2, 8, 8], strides = [1, 1, 1]} : vector<2x8x32xbf16> to vector<2x8x8xbf16>
    %73 = vector.extract_strided_slice %67 {offsets = [0, 0, 0], sizes = [2, 8, 8], strides = [1, 1, 1]} : vector<2x8x32xbf16> to vector<2x8x8xbf16>
    %cst_43 = arith.constant dense<0.000000e+00> : vector<2x8x8xf32>
    %74 = tpu.matmul %71, %72, %cst_43 {dimension_numbers = #tpu.dot_dimension_numbers<[2], [2], [1], [1], [0, 0, 0, 1, 1, 1], [0], [0]>} : vector<2x8x8xbf16>, vector<2x8x8xbf16>, vector<2x8x8xf32> -> vector<2x8x8xf32>
    %75 = arith.addf %74, %70 : vector<2x8x8xf32>
    %cst_44 = arith.constant dense<0xFF800000> : vector<2x8xf32>
    %76 = vector.multi_reduction <maximumf>, %75, %cst_44 [2] : vector<2x8x8xf32> to vector<2x8xf32>
    %77 = vector.shape_cast %76 : vector<2x8xf32> to vector<2x8x1xf32>
    %78 = vector.broadcast %77 : vector<2x8x1xf32> to vector<2x8x8xf32>
    %79 = arith.subf %75, %78 : vector<2x8x8xf32>
    %80 = math.exp %79 : vector<2x8x8xf32>
    %cst_45 = arith.constant dense<0.000000e+00> : vector<2x8xf32>
    %81 = vector.multi_reduction <add>, %80, %cst_45 [2] : vector<2x8x8xf32> to vector<2x8xf32>
    %82 = vector.shape_cast %81 : vector<2x8xf32> to vector<2x8x1xf32>
    %83 = tpu.reciprocal %82 {approx = true} : vector<2x8x1xf32> -> vector<2x8x1xf32>
    %84 = vector.broadcast %83 : vector<2x8x1xf32> to vector<2x8x8xf32>
    %85 = arith.mulf %80, %84 : vector<2x8x8xf32>
    %86 = arith.truncf %85 : vector<2x8x8xf32> to vector<2x8x8xbf16>
    %cst_46 = arith.constant dense<0.000000e+00> : vector<2x8x8xf32>
    %87 = tpu.matmul %86, %73, %cst_46 {dimension_numbers = #tpu.dot_dimension_numbers<[2], [1], [1], [2], [0, 0, 0, 1, 1, 2], [0], [0]>} : vector<2x8x8xbf16>, vector<2x8x8xbf16>, vector<2x8x8xf32> -> vector<2x8x8xf32>
    %88 = vector.extract_strided_slice %63 {offsets = [0, 0, 8], sizes = [2, 8, 8], strides = [1, 1, 1]} : vector<2x8x32xbf16> to vector<2x8x8xbf16>
    %89 = vector.extract_strided_slice %65 {offsets = [0, 0, 8], sizes = [2, 8, 8], strides = [1, 1, 1]} : vector<2x8x32xbf16> to vector<2x8x8xbf16>
    %90 = vector.extract_strided_slice %67 {offsets = [0, 0, 8], sizes = [2, 8, 8], strides = [1, 1, 1]} : vector<2x8x32xbf16> to vector<2x8x8xbf16>
    %cst_47 = arith.constant dense<0.000000e+00> : vector<2x8x8xf32>
    %91 = tpu.matmul %88, %89, %cst_47 {dimension_numbers = #tpu.dot_dimension_numbers<[2], [2], [1], [1], [0, 0, 0, 1, 1, 1], [0], [0]>} : vector<2x8x8xbf16>, vector<2x8x8xbf16>, vector<2x8x8xf32> -> vector<2x8x8xf32>
    %92 = arith.addf %91, %70 : vector<2x8x8xf32>
    %cst_48 = arith.constant dense<0xFF800000> : vector<2x8xf32>
    %93 = vector.multi_reduction <maximumf>, %92, %cst_48 [2] : vector<2x8x8xf32> to vector<2x8xf32>
    %94 = vector.shape_cast %93 : vector<2x8xf32> to vector<2x8x1xf32>
    %95 = vector.broadcast %94 : vector<2x8x1xf32> to vector<2x8x8xf32>
    %96 = arith.subf %92, %95 : vector<2x8x8xf32>
    %97 = math.exp %96 : vector<2x8x8xf32>
    %cst_49 = arith.constant dense<0.000000e+00> : vector<2x8xf32>
    %98 = vector.multi_reduction <add>, %97, %cst_49 [2] : vector<2x8x8xf32> to vector<2x8xf32>
    %99 = vector.shape_cast %98 : vector<2x8xf32> to vector<2x8x1xf32>
    %100 = tpu.reciprocal %99 {approx = true} : vector<2x8x1xf32> -> vector<2x8x1xf32>
    %101 = vector.broadcast %100 : vector<2x8x1xf32> to vector<2x8x8xf32>
    %102 = arith.mulf %97, %101 : vector<2x8x8xf32>
    %103 = arith.truncf %102 : vector<2x8x8xf32> to vector<2x8x8xbf16>
    %cst_50 = arith.constant dense<0.000000e+00> : vector<2x8x8xf32>
    %104 = tpu.matmul %103, %90, %cst_50 {dimension_numbers = #tpu.dot_dimension_numbers<[2], [1], [1], [2], [0, 0, 0, 1, 1, 2], [0], [0]>} : vector<2x8x8xbf16>, vector<2x8x8xbf16>, vector<2x8x8xf32> -> vector<2x8x8xf32>
    %105 = vector.extract_strided_slice %63 {offsets = [0, 0, 16], sizes = [2, 8, 8], strides = [1, 1, 1]} : vector<2x8x32xbf16> to vector<2x8x8xbf16>
    %106 = vector.extract_strided_slice %65 {offsets = [0, 0, 16], sizes = [2, 8, 8], strides = [1, 1, 1]} : vector<2x8x32xbf16> to vector<2x8x8xbf16>
    %107 = vector.extract_strided_slice %67 {offsets = [0, 0, 16], sizes = [2, 8, 8], strides = [1, 1, 1]} : vector<2x8x32xbf16> to vector<2x8x8xbf16>
    %cst_51 = arith.constant dense<0.000000e+00> : vector<2x8x8xf32>
    %108 = tpu.matmul %105, %106, %cst_51 {dimension_numbers = #tpu.dot_dimension_numbers<[2], [2], [1], [1], [0, 0, 0, 1, 1, 1], [0], [0]>} : vector<2x8x8xbf16>, vector<2x8x8xbf16>, vector<2x8x8xf32> -> vector<2x8x8xf32>
    %109 = arith.addf %108, %70 : vector<2x8x8xf32>
    %cst_52 = arith.constant dense<0xFF800000> : vector<2x8xf32>
    %110 = vector.multi_reduction <maximumf>, %109, %cst_52 [2] : vector<2x8x8xf32> to vector<2x8xf32>
    %111 = vector.shape_cast %110 : vector<2x8xf32> to vector<2x8x1xf32>
    %112 = vector.broadcast %111 : vector<2x8x1xf32> to vector<2x8x8xf32>
    %113 = arith.subf %109, %112 : vector<2x8x8xf32>
    %114 = math.exp %113 : vector<2x8x8xf32>
    %cst_53 = arith.constant dense<0.000000e+00> : vector<2x8xf32>
    %115 = vector.multi_reduction <add>, %114, %cst_53 [2] : vector<2x8x8xf32> to vector<2x8xf32>
    %116 = vector.shape_cast %115 : vector<2x8xf32> to vector<2x8x1xf32>
    %117 = tpu.reciprocal %116 {approx = true} : vector<2x8x1xf32> -> vector<2x8x1xf32>
    %118 = vector.broadcast %117 : vector<2x8x1xf32> to vector<2x8x8xf32>
    %119 = arith.mulf %114, %118 : vector<2x8x8xf32>
    %120 = arith.truncf %119 : vector<2x8x8xf32> to vector<2x8x8xbf16>
    %cst_54 = arith.constant dense<0.000000e+00> : vector<2x8x8xf32>
    %121 = tpu.matmul %120, %107, %cst_54 {dimension_numbers = #tpu.dot_dimension_numbers<[2], [1], [1], [2], [0, 0, 0, 1, 1, 2], [0], [0]>} : vector<2x8x8xbf16>, vector<2x8x8xbf16>, vector<2x8x8xf32> -> vector<2x8x8xf32>
    %122 = vector.extract_strided_slice %63 {offsets = [0, 0, 24], sizes = [2, 8, 8], strides = [1, 1, 1]} : vector<2x8x32xbf16> to vector<2x8x8xbf16>
    %123 = vector.extract_strided_slice %65 {offsets = [0, 0, 24], sizes = [2, 8, 8], strides = [1, 1, 1]} : vector<2x8x32xbf16> to vector<2x8x8xbf16>
    %124 = vector.extract_strided_slice %67 {offsets = [0, 0, 24], sizes = [2, 8, 8], strides = [1, 1, 1]} : vector<2x8x32xbf16> to vector<2x8x8xbf16>
    %cst_55 = arith.constant dense<0.000000e+00> : vector<2x8x8xf32>
    %125 = tpu.matmul %122, %123, %cst_55 {dimension_numbers = #tpu.dot_dimension_numbers<[2], [2], [1], [1], [0, 0, 0, 1, 1, 1], [0], [0]>} : vector<2x8x8xbf16>, vector<2x8x8xbf16>, vector<2x8x8xf32> -> vector<2x8x8xf32>
    %126 = arith.addf %125, %70 : vector<2x8x8xf32>
    %cst_56 = arith.constant dense<0xFF800000> : vector<2x8xf32>
    %127 = vector.multi_reduction <maximumf>, %126, %cst_56 [2] : vector<2x8x8xf32> to vector<2x8xf32>
    %128 = vector.shape_cast %127 : vector<2x8xf32> to vector<2x8x1xf32>
    %129 = vector.broadcast %128 : vector<2x8x1xf32> to vector<2x8x8xf32>
    %130 = arith.subf %126, %129 : vector<2x8x8xf32>
    %131 = math.exp %130 : vector<2x8x8xf32>
    %cst_57 = arith.constant dense<0.000000e+00> : vector<2x8xf32>
    %132 = vector.multi_reduction <add>, %131, %cst_57 [2] : vector<2x8x8xf32> to vector<2x8xf32>
    %133 = vector.shape_cast %132 : vector<2x8xf32> to vector<2x8x1xf32>
    %134 = tpu.reciprocal %133 {approx = true} : vector<2x8x1xf32> -> vector<2x8x1xf32>
    %135 = vector.broadcast %134 : vector<2x8x1xf32> to vector<2x8x8xf32>
    %136 = arith.mulf %131, %135 : vector<2x8x8xf32>
    %137 = arith.truncf %136 : vector<2x8x8xf32> to vector<2x8x8xbf16>
    %cst_58 = arith.constant dense<0.000000e+00> : vector<2x8x8xf32>
    %138 = tpu.matmul %137, %124, %cst_58 {dimension_numbers = #tpu.dot_dimension_numbers<[2], [1], [1], [2], [0, 0, 0, 1, 1, 2], [0], [0]>} : vector<2x8x8xbf16>, vector<2x8x8xbf16>, vector<2x8x8xf32> -> vector<2x8x8xf32>
    %139 = tpu.concatenate %87, %104, %121, %138 in 2 : vector<2x8x8xf32>, vector<2x8x8xf32>, vector<2x8x8xf32>, vector<2x8x8xf32> -> vector<2x8x32xf32>
    %140 = vector.shape_cast %139 : vector<2x8x32xf32> to vector<16x32xf32>
    %141 = arith.addf %9, %140 : vector<16x32xf32>
    %c0_59 = arith.constant 0 : index
    %c0_60 = arith.constant 0 : index
    %c0_61 = arith.constant 0 : index
    %142 = vector.load %arg13[%c0_59, %c0_60, %c0_61] : memref<2x1x32xf32, #tpu.memory_space<vmem>>, vector<1x1x32xf32>
    %143 = vector.shape_cast %142 : vector<1x1x32xf32> to vector<1x32xf32>
    %c0_62 = arith.constant 0 : index
    %c0_63 = arith.constant 0 : index
    %c0_64 = arith.constant 0 : index
    %144 = vector.load %arg14[%c0_62, %c0_63, %c0_64] : memref<2x1x32xf32, #tpu.memory_space<vmem>>, vector<1x1x32xf32>
    %145 = vector.shape_cast %144 : vector<1x1x32xf32> to vector<1x32xf32>
    %cst_65 = arith.constant dense<0.000000e+00> : vector<16xf32>
    %146 = vector.multi_reduction <add>, %141, %cst_65 [1] : vector<16x32xf32> to vector<16xf32>
    %147 = vector.shape_cast %146 : vector<16xf32> to vector<16x1xf32>
    %cst_66 = arith.constant 3.200000e+01 : f32
    %148 = vector.broadcast %cst_66 : f32 to vector<16x1xf32>
    %149 = arith.divf %147, %148 : vector<16x1xf32>
    %150 = vector.broadcast %149 : vector<16x1xf32> to vector<16x32xf32>
    %151 = arith.subf %141, %150 : vector<16x32xf32>
    %152 = arith.mulf %151, %151 : vector<16x32xf32>
    %cst_67 = arith.constant dense<0.000000e+00> : vector<16xf32>
    %153 = vector.multi_reduction <add>, %152, %cst_67 [1] : vector<16x32xf32> to vector<16xf32>
    %154 = vector.shape_cast %153 : vector<16xf32> to vector<16x1xf32>
    %cst_68 = arith.constant 3.200000e+01 : f32
    %155 = vector.broadcast %cst_68 : f32 to vector<16x1xf32>
    %156 = arith.divf %154, %155 : vector<16x1xf32>
    %157 = vector.broadcast %149 : vector<16x1xf32> to vector<16x32xf32>
    %158 = arith.subf %141, %157 : vector<16x32xf32>
    %cst_69 = arith.constant 9.99999974E-6 : f32
    %159 = vector.broadcast %cst_69 : f32 to vector<16x1xf32>
    %160 = arith.addf %156, %159 : vector<16x1xf32>
    %161 = math.rsqrt %160 : vector<16x1xf32>
    %162 = vector.broadcast %161 : vector<16x1xf32> to vector<16x32xf32>
    %163 = arith.mulf %158, %162 : vector<16x32xf32>
    %164 = vector.broadcast %143 : vector<1x32xf32> to vector<16x32xf32>
    %165 = arith.mulf %163, %164 : vector<16x32xf32>
    %166 = vector.broadcast %145 : vector<1x32xf32> to vector<16x32xf32>
    %167 = arith.addf %165, %166 : vector<16x32xf32>
    %c0_70 = arith.constant 0 : index
    %c0_71 = arith.constant 0 : index
    %c0_72 = arith.constant 0 : index
    %168 = vector.load %arg15[%c0_70, %c0_71, %c0_72] : memref<2x32x64xbf16, #tpu.memory_space<vmem>>, vector<1x32x64xbf16>
    %169 = vector.shape_cast %168 : vector<1x32x64xbf16> to vector<32x64xbf16>
    %c0_73 = arith.constant 0 : index
    %c0_74 = arith.constant 0 : index
    %c0_75 = arith.constant 0 : index
    %170 = vector.load %arg16[%c0_73, %c0_74, %c0_75] : memref<2x1x64xf32, #tpu.memory_space<vmem>>, vector<1x1x64xf32>
    %171 = vector.shape_cast %170 : vector<1x1x64xf32> to vector<1x64xf32>
    %172 = arith.truncf %167 : vector<16x32xf32> to vector<16x32xbf16>
    %cst_76 = arith.constant dense<0.000000e+00> : vector<16x64xf32>
    %173 = tpu.matmul %172, %169, %cst_76 {dimension_numbers = #tpu.dot_dimension_numbers<[1], [0], [0], [1], [0, 0, 1, 1], [], []>} : vector<16x32xbf16>, vector<32x64xbf16>, vector<16x64xf32> -> vector<16x64xf32>
    %174 = vector.broadcast %171 : vector<1x64xf32> to vector<16x64xf32>
    %175 = arith.addf %173, %174 : vector<16x64xf32>
    %cst_77 = arith.constant 0.000000e+00 : f32
    %176 = vector.broadcast %cst_77 : f32 to vector<16x64xf32>
    %177 = arith.maximumf %175, %176 : vector<16x64xf32>
    %c0_78 = arith.constant 0 : index
    %c0_79 = arith.constant 0 : index
    %c0_80 = arith.constant 0 : index
    %178 = vector.load %arg17[%c0_78, %c0_79, %c0_80] : memref<2x64x32xbf16, #tpu.memory_space<vmem>>, vector<1x64x32xbf16>
    %179 = vector.shape_cast %178 : vector<1x64x32xbf16> to vector<64x32xbf16>
    %c0_81 = arith.constant 0 : index
    %c0_82 = arith.constant 0 : index
    %c0_83 = arith.constant 0 : index
    %180 = vector.load %arg18[%c0_81, %c0_82, %c0_83] : memref<2x1x32xf32, #tpu.memory_space<vmem>>, vector<1x1x32xf32>
    %181 = vector.shape_cast %180 : vector<1x1x32xf32> to vector<1x32xf32>
    %182 = arith.truncf %177 : vector<16x64xf32> to vector<16x64xbf16>
    %cst_84 = arith.constant dense<0.000000e+00> : vector<16x32xf32>
    %183 = tpu.matmul %182, %179, %cst_84 {dimension_numbers = #tpu.dot_dimension_numbers<[1], [0], [0], [1], [0, 0, 1, 1], [], []>} : vector<16x64xbf16>, vector<64x32xbf16>, vector<16x32xf32> -> vector<16x32xf32>
    %184 = vector.broadcast %181 : vector<1x32xf32> to vector<16x32xf32>
    %185 = arith.addf %183, %184 : vector<16x32xf32>
    %186 = arith.addf %141, %185 : vector<16x32xf32>
    %c1 = arith.constant 1 : index
    %c0_85 = arith.constant 0 : index
    %c0_86 = arith.constant 0 : index
    %187 = vector.load %arg5[%c1, %c0_85, %c0_86] : memref<2x1x32xf32, #tpu.memory_space<vmem>>, vector<1x1x32xf32>
    %188 = vector.shape_cast %187 : vector<1x1x32xf32> to vector<1x32xf32>
    %c1_87 = arith.constant 1 : index
    %c0_88 = arith.constant 0 : index
    %c0_89 = arith.constant 0 : index
    %189 = vector.load %arg6[%c1_87, %c0_88, %c0_89] : memref<2x1x32xf32, #tpu.memory_space<vmem>>, vector<1x1x32xf32>
    %190 = vector.shape_cast %189 : vector<1x1x32xf32> to vector<1x32xf32>
    %cst_90 = arith.constant dense<0.000000e+00> : vector<16xf32>
    %191 = vector.multi_reduction <add>, %186, %cst_90 [1] : vector<16x32xf32> to vector<16xf32>
    %192 = vector.shape_cast %191 : vector<16xf32> to vector<16x1xf32>
    %cst_91 = arith.constant 3.200000e+01 : f32
    %193 = vector.broadcast %cst_91 : f32 to vector<16x1xf32>
    %194 = arith.divf %192, %193 : vector<16x1xf32>
    %195 = vector.broadcast %194 : vector<16x1xf32> to vector<16x32xf32>
    %196 = arith.subf %186, %195 : vector<16x32xf32>
    %197 = arith.mulf %196, %196 : vector<16x32xf32>
    %cst_92 = arith.constant dense<0.000000e+00> : vector<16xf32>
    %198 = vector.multi_reduction <add>, %197, %cst_92 [1] : vector<16x32xf32> to vector<16xf32>
    %199 = vector.shape_cast %198 : vector<16xf32> to vector<16x1xf32>
    %cst_93 = arith.constant 3.200000e+01 : f32
    %200 = vector.broadcast %cst_93 : f32 to vector<16x1xf32>
    %201 = arith.divf %199, %200 : vector<16x1xf32>
    %202 = vector.broadcast %194 : vector<16x1xf32> to vector<16x32xf32>
    %203 = arith.subf %186, %202 : vector<16x32xf32>
    %cst_94 = arith.constant 9.99999974E-6 : f32
    %204 = vector.broadcast %cst_94 : f32 to vector<16x1xf32>
    %205 = arith.addf %201, %204 : vector<16x1xf32>
    %206 = math.rsqrt %205 : vector<16x1xf32>
    %207 = vector.broadcast %206 : vector<16x1xf32> to vector<16x32xf32>
    %208 = arith.mulf %203, %207 : vector<16x32xf32>
    %209 = vector.broadcast %188 : vector<1x32xf32> to vector<16x32xf32>
    %210 = arith.mulf %208, %209 : vector<16x32xf32>
    %211 = vector.broadcast %190 : vector<1x32xf32> to vector<16x32xf32>
    %212 = arith.addf %210, %211 : vector<16x32xf32>
    %c1_95 = arith.constant 1 : index
    %c0_96 = arith.constant 0 : index
    %c0_97 = arith.constant 0 : index
    %213 = vector.load %arg7[%c1_95, %c0_96, %c0_97] : memref<2x32x32xbf16, #tpu.memory_space<vmem>>, vector<1x32x32xbf16>
    %214 = vector.shape_cast %213 : vector<1x32x32xbf16> to vector<32x32xbf16>
    %c1_98 = arith.constant 1 : index
    %c0_99 = arith.constant 0 : index
    %c0_100 = arith.constant 0 : index
    %215 = vector.load %arg8[%c1_98, %c0_99, %c0_100] : memref<2x1x32xf32, #tpu.memory_space<vmem>>, vector<1x1x32xf32>
    %216 = vector.shape_cast %215 : vector<1x1x32xf32> to vector<1x32xf32>
    %217 = arith.truncf %212 : vector<16x32xf32> to vector<16x32xbf16>
    %cst_101 = arith.constant dense<0.000000e+00> : vector<16x32xf32>
    %218 = tpu.matmul %217, %214, %cst_101 {dimension_numbers = #tpu.dot_dimension_numbers<[1], [0], [0], [1], [0, 0, 1, 1], [], []>} : vector<16x32xbf16>, vector<32x32xbf16>, vector<16x32xf32> -> vector<16x32xf32>
    %219 = vector.broadcast %216 : vector<1x32xf32> to vector<16x32xf32>
    %220 = arith.addf %218, %219 : vector<16x32xf32>
    %cst_102 = arith.constant 0.353553385 : f32
    %221 = vector.broadcast %cst_102 : f32 to vector<16x32xf32>
    %222 = arith.mulf %220, %221 : vector<16x32xf32>
    %c1_103 = arith.constant 1 : index
    %c0_104 = arith.constant 0 : index
    %c0_105 = arith.constant 0 : index
    %223 = vector.load %arg9[%c1_103, %c0_104, %c0_105] : memref<2x32x32xbf16, #tpu.memory_space<vmem>>, vector<1x32x32xbf16>
    %224 = vector.shape_cast %223 : vector<1x32x32xbf16> to vector<32x32xbf16>
    %c1_106 = arith.constant 1 : index
    %c0_107 = arith.constant 0 : index
    %c0_108 = arith.constant 0 : index
    %225 = vector.load %arg10[%c1_106, %c0_107, %c0_108] : memref<2x1x32xf32, #tpu.memory_space<vmem>>, vector<1x1x32xf32>
    %226 = vector.shape_cast %225 : vector<1x1x32xf32> to vector<1x32xf32>
    %227 = arith.truncf %212 : vector<16x32xf32> to vector<16x32xbf16>
    %cst_109 = arith.constant dense<0.000000e+00> : vector<16x32xf32>
    %228 = tpu.matmul %227, %224, %cst_109 {dimension_numbers = #tpu.dot_dimension_numbers<[1], [0], [0], [1], [0, 0, 1, 1], [], []>} : vector<16x32xbf16>, vector<32x32xbf16>, vector<16x32xf32> -> vector<16x32xf32>
    %229 = vector.broadcast %226 : vector<1x32xf32> to vector<16x32xf32>
    %230 = arith.addf %228, %229 : vector<16x32xf32>
    %c1_110 = arith.constant 1 : index
    %c0_111 = arith.constant 0 : index
    %c0_112 = arith.constant 0 : index
    %231 = vector.load %arg11[%c1_110, %c0_111, %c0_112] : memref<2x32x32xbf16, #tpu.memory_space<vmem>>, vector<1x32x32xbf16>
    %232 = vector.shape_cast %231 : vector<1x32x32xbf16> to vector<32x32xbf16>
    %c1_113 = arith.constant 1 : index
    %c0_114 = arith.constant 0 : index
    %c0_115 = arith.constant 0 : index
    %233 = vector.load %arg12[%c1_113, %c0_114, %c0_115] : memref<2x1x32xf32, #tpu.memory_space<vmem>>, vector<1x1x32xf32>
    %234 = vector.shape_cast %233 : vector<1x1x32xf32> to vector<1x32xf32>
    %235 = arith.truncf %212 : vector<16x32xf32> to vector<16x32xbf16>
    %cst_116 = arith.constant dense<0.000000e+00> : vector<16x32xf32>
    %236 = tpu.matmul %235, %232, %cst_116 {dimension_numbers = #tpu.dot_dimension_numbers<[1], [0], [0], [1], [0, 0, 1, 1], [], []>} : vector<16x32xbf16>, vector<32x32xbf16>, vector<16x32xf32> -> vector<16x32xf32>
    %237 = vector.broadcast %234 : vector<1x32xf32> to vector<16x32xf32>
    %238 = arith.addf %236, %237 : vector<16x32xf32>
    %239 = vector.shape_cast %222 : vector<16x32xf32> to vector<2x8x32xf32>
    %240 = arith.truncf %239 : vector<2x8x32xf32> to vector<2x8x32xbf16>
    %241 = vector.shape_cast %230 : vector<16x32xf32> to vector<2x8x32xf32>
    %242 = arith.truncf %241 : vector<2x8x32xf32> to vector<2x8x32xbf16>
    %243 = vector.shape_cast %238 : vector<16x32xf32> to vector<2x8x32xf32>
    %244 = arith.truncf %243 : vector<2x8x32xf32> to vector<2x8x32xbf16>
    %c1_117 = arith.constant 1 : index
    %245 = memref.load %arg2[%c1_117] : memref<2xf32, #tpu.memory_space<smem>>
    %246 = vector.broadcast %245 : f32 to vector<2x8x8xf32>
    %247 = arith.mulf %246, %3 : vector<2x8x8xf32>
    %248 = vector.extract_strided_slice %240 {offsets = [0, 0, 0], sizes = [2, 8, 8], strides = [1, 1, 1]} : vector<2x8x32xbf16> to vector<2x8x8xbf16>
    %249 = vector.extract_strided_slice %242 {offsets = [0, 0, 0], sizes = [2, 8, 8], strides = [1, 1, 1]} : vector<2x8x32xbf16> to vector<2x8x8xbf16>
    %250 = vector.extract_strided_slice %244 {offsets = [0, 0, 0], sizes = [2, 8, 8], strides = [1, 1, 1]} : vector<2x8x32xbf16> to vector<2x8x8xbf16>
    %cst_118 = arith.constant dense<0.000000e+00> : vector<2x8x8xf32>
    %251 = tpu.matmul %248, %249, %cst_118 {dimension_numbers = #tpu.dot_dimension_numbers<[2], [2], [1], [1], [0, 0, 0, 1, 1, 1], [0], [0]>} : vector<2x8x8xbf16>, vector<2x8x8xbf16>, vector<2x8x8xf32> -> vector<2x8x8xf32>
    %252 = arith.addf %251, %247 : vector<2x8x8xf32>
    %cst_119 = arith.constant dense<0xFF800000> : vector<2x8xf32>
    %253 = vector.multi_reduction <maximumf>, %252, %cst_119 [2] : vector<2x8x8xf32> to vector<2x8xf32>
    %254 = vector.shape_cast %253 : vector<2x8xf32> to vector<2x8x1xf32>
    %255 = vector.broadcast %254 : vector<2x8x1xf32> to vector<2x8x8xf32>
    %256 = arith.subf %252, %255 : vector<2x8x8xf32>
    %257 = math.exp %256 : vector<2x8x8xf32>
    %cst_120 = arith.constant dense<0.000000e+00> : vector<2x8xf32>
    %258 = vector.multi_reduction <add>, %257, %cst_120 [2] : vector<2x8x8xf32> to vector<2x8xf32>
    %259 = vector.shape_cast %258 : vector<2x8xf32> to vector<2x8x1xf32>
    %260 = tpu.reciprocal %259 {approx = true} : vector<2x8x1xf32> -> vector<2x8x1xf32>
    %261 = vector.broadcast %260 : vector<2x8x1xf32> to vector<2x8x8xf32>
    %262 = arith.mulf %257, %261 : vector<2x8x8xf32>
    %263 = arith.truncf %262 : vector<2x8x8xf32> to vector<2x8x8xbf16>
    %cst_121 = arith.constant dense<0.000000e+00> : vector<2x8x8xf32>
    %264 = tpu.matmul %263, %250, %cst_121 {dimension_numbers = #tpu.dot_dimension_numbers<[2], [1], [1], [2], [0, 0, 0, 1, 1, 2], [0], [0]>} : vector<2x8x8xbf16>, vector<2x8x8xbf16>, vector<2x8x8xf32> -> vector<2x8x8xf32>
    %265 = vector.extract_strided_slice %240 {offsets = [0, 0, 8], sizes = [2, 8, 8], strides = [1, 1, 1]} : vector<2x8x32xbf16> to vector<2x8x8xbf16>
    %266 = vector.extract_strided_slice %242 {offsets = [0, 0, 8], sizes = [2, 8, 8], strides = [1, 1, 1]} : vector<2x8x32xbf16> to vector<2x8x8xbf16>
    %267 = vector.extract_strided_slice %244 {offsets = [0, 0, 8], sizes = [2, 8, 8], strides = [1, 1, 1]} : vector<2x8x32xbf16> to vector<2x8x8xbf16>
    %cst_122 = arith.constant dense<0.000000e+00> : vector<2x8x8xf32>
    %268 = tpu.matmul %265, %266, %cst_122 {dimension_numbers = #tpu.dot_dimension_numbers<[2], [2], [1], [1], [0, 0, 0, 1, 1, 1], [0], [0]>} : vector<2x8x8xbf16>, vector<2x8x8xbf16>, vector<2x8x8xf32> -> vector<2x8x8xf32>
    %269 = arith.addf %268, %247 : vector<2x8x8xf32>
    %cst_123 = arith.constant dense<0xFF800000> : vector<2x8xf32>
    %270 = vector.multi_reduction <maximumf>, %269, %cst_123 [2] : vector<2x8x8xf32> to vector<2x8xf32>
    %271 = vector.shape_cast %270 : vector<2x8xf32> to vector<2x8x1xf32>
    %272 = vector.broadcast %271 : vector<2x8x1xf32> to vector<2x8x8xf32>
    %273 = arith.subf %269, %272 : vector<2x8x8xf32>
    %274 = math.exp %273 : vector<2x8x8xf32>
    %cst_124 = arith.constant dense<0.000000e+00> : vector<2x8xf32>
    %275 = vector.multi_reduction <add>, %274, %cst_124 [2] : vector<2x8x8xf32> to vector<2x8xf32>
    %276 = vector.shape_cast %275 : vector<2x8xf32> to vector<2x8x1xf32>
    %277 = tpu.reciprocal %276 {approx = true} : vector<2x8x1xf32> -> vector<2x8x1xf32>
    %278 = vector.broadcast %277 : vector<2x8x1xf32> to vector<2x8x8xf32>
    %279 = arith.mulf %274, %278 : vector<2x8x8xf32>
    %280 = arith.truncf %279 : vector<2x8x8xf32> to vector<2x8x8xbf16>
    %cst_125 = arith.constant dense<0.000000e+00> : vector<2x8x8xf32>
    %281 = tpu.matmul %280, %267, %cst_125 {dimension_numbers = #tpu.dot_dimension_numbers<[2], [1], [1], [2], [0, 0, 0, 1, 1, 2], [0], [0]>} : vector<2x8x8xbf16>, vector<2x8x8xbf16>, vector<2x8x8xf32> -> vector<2x8x8xf32>
    %282 = vector.extract_strided_slice %240 {offsets = [0, 0, 16], sizes = [2, 8, 8], strides = [1, 1, 1]} : vector<2x8x32xbf16> to vector<2x8x8xbf16>
    %283 = vector.extract_strided_slice %242 {offsets = [0, 0, 16], sizes = [2, 8, 8], strides = [1, 1, 1]} : vector<2x8x32xbf16> to vector<2x8x8xbf16>
    %284 = vector.extract_strided_slice %244 {offsets = [0, 0, 16], sizes = [2, 8, 8], strides = [1, 1, 1]} : vector<2x8x32xbf16> to vector<2x8x8xbf16>
    %cst_126 = arith.constant dense<0.000000e+00> : vector<2x8x8xf32>
    %285 = tpu.matmul %282, %283, %cst_126 {dimension_numbers = #tpu.dot_dimension_numbers<[2], [2], [1], [1], [0, 0, 0, 1, 1, 1], [0], [0]>} : vector<2x8x8xbf16>, vector<2x8x8xbf16>, vector<2x8x8xf32> -> vector<2x8x8xf32>
    %286 = arith.addf %285, %247 : vector<2x8x8xf32>
    %cst_127 = arith.constant dense<0xFF800000> : vector<2x8xf32>
    %287 = vector.multi_reduction <maximumf>, %286, %cst_127 [2] : vector<2x8x8xf32> to vector<2x8xf32>
    %288 = vector.shape_cast %287 : vector<2x8xf32> to vector<2x8x1xf32>
    %289 = vector.broadcast %288 : vector<2x8x1xf32> to vector<2x8x8xf32>
    %290 = arith.subf %286, %289 : vector<2x8x8xf32>
    %291 = math.exp %290 : vector<2x8x8xf32>
    %cst_128 = arith.constant dense<0.000000e+00> : vector<2x8xf32>
    %292 = vector.multi_reduction <add>, %291, %cst_128 [2] : vector<2x8x8xf32> to vector<2x8xf32>
    %293 = vector.shape_cast %292 : vector<2x8xf32> to vector<2x8x1xf32>
    %294 = tpu.reciprocal %293 {approx = true} : vector<2x8x1xf32> -> vector<2x8x1xf32>
    %295 = vector.broadcast %294 : vector<2x8x1xf32> to vector<2x8x8xf32>
    %296 = arith.mulf %291, %295 : vector<2x8x8xf32>
    %297 = arith.truncf %296 : vector<2x8x8xf32> to vector<2x8x8xbf16>
    %cst_129 = arith.constant dense<0.000000e+00> : vector<2x8x8xf32>
    %298 = tpu.matmul %297, %284, %cst_129 {dimension_numbers = #tpu.dot_dimension_numbers<[2], [1], [1], [2], [0, 0, 0, 1, 1, 2], [0], [0]>} : vector<2x8x8xbf16>, vector<2x8x8xbf16>, vector<2x8x8xf32> -> vector<2x8x8xf32>
    %299 = vector.extract_strided_slice %240 {offsets = [0, 0, 24], sizes = [2, 8, 8], strides = [1, 1, 1]} : vector<2x8x32xbf16> to vector<2x8x8xbf16>
    %300 = vector.extract_strided_slice %242 {offsets = [0, 0, 24], sizes = [2, 8, 8], strides = [1, 1, 1]} : vector<2x8x32xbf16> to vector<2x8x8xbf16>
    %301 = vector.extract_strided_slice %244 {offsets = [0, 0, 24], sizes = [2, 8, 8], strides = [1, 1, 1]} : vector<2x8x32xbf16> to vector<2x8x8xbf16>
    %cst_130 = arith.constant dense<0.000000e+00> : vector<2x8x8xf32>
    %302 = tpu.matmul %299, %300, %cst_130 {dimension_numbers = #tpu.dot_dimension_numbers<[2], [2], [1], [1], [0, 0, 0, 1, 1, 1], [0], [0]>} : vector<2x8x8xbf16>, vector<2x8x8xbf16>, vector<2x8x8xf32> -> vector<2x8x8xf32>
    %303 = arith.addf %302, %247 : vector<2x8x8xf32>
    %cst_131 = arith.constant dense<0xFF800000> : vector<2x8xf32>
    %304 = vector.multi_reduction <maximumf>, %303, %cst_131 [2] : vector<2x8x8xf32> to vector<2x8xf32>
    %305 = vector.shape_cast %304 : vector<2x8xf32> to vector<2x8x1xf32>
    %306 = vector.broadcast %305 : vector<2x8x1xf32> to vector<2x8x8xf32>
    %307 = arith.subf %303, %306 : vector<2x8x8xf32>
    %308 = math.exp %307 : vector<2x8x8xf32>
    %cst_132 = arith.constant dense<0.000000e+00> : vector<2x8xf32>
    %309 = vector.multi_reduction <add>, %308, %cst_132 [2] : vector<2x8x8xf32> to vector<2x8xf32>
    %310 = vector.shape_cast %309 : vector<2x8xf32> to vector<2x8x1xf32>
    %311 = tpu.reciprocal %310 {approx = true} : vector<2x8x1xf32> -> vector<2x8x1xf32>
    %312 = vector.broadcast %311 : vector<2x8x1xf32> to vector<2x8x8xf32>
    %313 = arith.mulf %308, %312 : vector<2x8x8xf32>
    %314 = arith.truncf %313 : vector<2x8x8xf32> to vector<2x8x8xbf16>
    %cst_133 = arith.constant dense<0.000000e+00> : vector<2x8x8xf32>
    %315 = tpu.matmul %314, %301, %cst_133 {dimension_numbers = #tpu.dot_dimension_numbers<[2], [1], [1], [2], [0, 0, 0, 1, 1, 2], [0], [0]>} : vector<2x8x8xbf16>, vector<2x8x8xbf16>, vector<2x8x8xf32> -> vector<2x8x8xf32>
    %316 = tpu.concatenate %264, %281, %298, %315 in 2 : vector<2x8x8xf32>, vector<2x8x8xf32>, vector<2x8x8xf32>, vector<2x8x8xf32> -> vector<2x8x32xf32>
    %317 = vector.shape_cast %316 : vector<2x8x32xf32> to vector<16x32xf32>
    %318 = arith.addf %186, %317 : vector<16x32xf32>
    %c1_134 = arith.constant 1 : index
    %c0_135 = arith.constant 0 : index
    %c0_136 = arith.constant 0 : index
    %319 = vector.load %arg13[%c1_134, %c0_135, %c0_136] : memref<2x1x32xf32, #tpu.memory_space<vmem>>, vector<1x1x32xf32>
    %320 = vector.shape_cast %319 : vector<1x1x32xf32> to vector<1x32xf32>
    %c1_137 = arith.constant 1 : index
    %c0_138 = arith.constant 0 : index
    %c0_139 = arith.constant 0 : index
    %321 = vector.load %arg14[%c1_137, %c0_138, %c0_139] : memref<2x1x32xf32, #tpu.memory_space<vmem>>, vector<1x1x32xf32>
    %322 = vector.shape_cast %321 : vector<1x1x32xf32> to vector<1x32xf32>
    %cst_140 = arith.constant dense<0.000000e+00> : vector<16xf32>
    %323 = vector.multi_reduction <add>, %318, %cst_140 [1] : vector<16x32xf32> to vector<16xf32>
    %324 = vector.shape_cast %323 : vector<16xf32> to vector<16x1xf32>
    %cst_141 = arith.constant 3.200000e+01 : f32
    %325 = vector.broadcast %cst_141 : f32 to vector<16x1xf32>
    %326 = arith.divf %324, %325 : vector<16x1xf32>
    %327 = vector.broadcast %326 : vector<16x1xf32> to vector<16x32xf32>
    %328 = arith.subf %318, %327 : vector<16x32xf32>
    %329 = arith.mulf %328, %328 : vector<16x32xf32>
    %cst_142 = arith.constant dense<0.000000e+00> : vector<16xf32>
    %330 = vector.multi_reduction <add>, %329, %cst_142 [1] : vector<16x32xf32> to vector<16xf32>
    %331 = vector.shape_cast %330 : vector<16xf32> to vector<16x1xf32>
    %cst_143 = arith.constant 3.200000e+01 : f32
    %332 = vector.broadcast %cst_143 : f32 to vector<16x1xf32>
    %333 = arith.divf %331, %332 : vector<16x1xf32>
    %334 = vector.broadcast %326 : vector<16x1xf32> to vector<16x32xf32>
    %335 = arith.subf %318, %334 : vector<16x32xf32>
    %cst_144 = arith.constant 9.99999974E-6 : f32
    %336 = vector.broadcast %cst_144 : f32 to vector<16x1xf32>
    %337 = arith.addf %333, %336 : vector<16x1xf32>
    %338 = math.rsqrt %337 : vector<16x1xf32>
    %339 = vector.broadcast %338 : vector<16x1xf32> to vector<16x32xf32>
    %340 = arith.mulf %335, %339 : vector<16x32xf32>
    %341 = vector.broadcast %320 : vector<1x32xf32> to vector<16x32xf32>
    %342 = arith.mulf %340, %341 : vector<16x32xf32>
    %343 = vector.broadcast %322 : vector<1x32xf32> to vector<16x32xf32>
    %344 = arith.addf %342, %343 : vector<16x32xf32>
    %c1_145 = arith.constant 1 : index
    %c0_146 = arith.constant 0 : index
    %c0_147 = arith.constant 0 : index
    %345 = vector.load %arg15[%c1_145, %c0_146, %c0_147] : memref<2x32x64xbf16, #tpu.memory_space<vmem>>, vector<1x32x64xbf16>
    %346 = vector.shape_cast %345 : vector<1x32x64xbf16> to vector<32x64xbf16>
    %c1_148 = arith.constant 1 : index
    %c0_149 = arith.constant 0 : index
    %c0_150 = arith.constant 0 : index
    %347 = vector.load %arg16[%c1_148, %c0_149, %c0_150] : memref<2x1x64xf32, #tpu.memory_space<vmem>>, vector<1x1x64xf32>
    %348 = vector.shape_cast %347 : vector<1x1x64xf32> to vector<1x64xf32>
    %349 = arith.truncf %344 : vector<16x32xf32> to vector<16x32xbf16>
    %cst_151 = arith.constant dense<0.000000e+00> : vector<16x64xf32>
    %350 = tpu.matmul %349, %346, %cst_151 {dimension_numbers = #tpu.dot_dimension_numbers<[1], [0], [0], [1], [0, 0, 1, 1], [], []>} : vector<16x32xbf16>, vector<32x64xbf16>, vector<16x64xf32> -> vector<16x64xf32>
    %351 = vector.broadcast %348 : vector<1x64xf32> to vector<16x64xf32>
    %352 = arith.addf %350, %351 : vector<16x64xf32>
    %cst_152 = arith.constant 0.000000e+00 : f32
    %353 = vector.broadcast %cst_152 : f32 to vector<16x64xf32>
    %354 = arith.maximumf %352, %353 : vector<16x64xf32>
    %c1_153 = arith.constant 1 : index
    %c0_154 = arith.constant 0 : index
    %c0_155 = arith.constant 0 : index
    %355 = vector.load %arg17[%c1_153, %c0_154, %c0_155] : memref<2x64x32xbf16, #tpu.memory_space<vmem>>, vector<1x64x32xbf16>
    %356 = vector.shape_cast %355 : vector<1x64x32xbf16> to vector<64x32xbf16>
    %c1_156 = arith.constant 1 : index
    %c0_157 = arith.constant 0 : index
    %c0_158 = arith.constant 0 : index
    %357 = vector.load %arg18[%c1_156, %c0_157, %c0_158] : memref<2x1x32xf32, #tpu.memory_space<vmem>>, vector<1x1x32xf32>
    %358 = vector.shape_cast %357 : vector<1x1x32xf32> to vector<1x32xf32>
    %359 = arith.truncf %354 : vector<16x64xf32> to vector<16x64xbf16>
    %cst_159 = arith.constant dense<0.000000e+00> : vector<16x32xf32>
    %360 = tpu.matmul %359, %356, %cst_159 {dimension_numbers = #tpu.dot_dimension_numbers<[1], [0], [0], [1], [0, 0, 1, 1], [], []>} : vector<16x64xbf16>, vector<64x32xbf16>, vector<16x32xf32> -> vector<16x32xf32>
    %361 = vector.broadcast %358 : vector<1x32xf32> to vector<16x32xf32>
    %362 = arith.addf %360, %361 : vector<16x32xf32>
    %363 = arith.addf %318, %362 : vector<16x32xf32>
    %364 = vector.shape_cast %363 : vector<16x32xf32> to vector<2x8x32xf32>
    %cst_160 = arith.constant 0.000000e+00 : f32
    %365 = vector.broadcast %cst_160 : f32 to vector<2x64xf32>
    %c0_161 = arith.constant 0 : index
    %c0_162 = arith.constant 0 : index
    %c0_163 = arith.constant 0 : index
    %366 = vector.load %arg19[%c0_161, %c0_162, %c0_163] : memref<8x32x64xbf16, #tpu.memory_space<vmem>>, vector<1x32x64xbf16>
    %367 = vector.shape_cast %366 : vector<1x32x64xbf16> to vector<32x64xbf16>
    %368 = vector.extract_strided_slice %364 {offsets = [0, 0, 0], sizes = [2, 1, 32], strides = [1, 1, 1]} : vector<2x8x32xf32> to vector<2x1x32xf32>
    %369 = vector.shape_cast %368 : vector<2x1x32xf32> to vector<2x32xf32>
    %370 = arith.truncf %369 : vector<2x32xf32> to vector<2x32xbf16>
    %cst_164 = arith.constant dense<0.000000e+00> : vector<2x64xf32>
    %371 = tpu.matmul %370, %367, %cst_164 {dimension_numbers = #tpu.dot_dimension_numbers<[1], [0], [0], [1], [0, 0, 1, 1], [], []>} : vector<2x32xbf16>, vector<32x64xbf16>, vector<2x64xf32> -> vector<2x64xf32>
    %372 = arith.addf %365, %371 : vector<2x64xf32>
    %c1_165 = arith.constant 1 : index
    %c0_166 = arith.constant 0 : index
    %c0_167 = arith.constant 0 : index
    %373 = vector.load %arg19[%c1_165, %c0_166, %c0_167] : memref<8x32x64xbf16, #tpu.memory_space<vmem>>, vector<1x32x64xbf16>
    %374 = vector.shape_cast %373 : vector<1x32x64xbf16> to vector<32x64xbf16>
    %375 = vector.extract_strided_slice %364 {offsets = [0, 1, 0], sizes = [2, 1, 32], strides = [1, 1, 1]} : vector<2x8x32xf32> to vector<2x1x32xf32>
    %376 = vector.shape_cast %375 : vector<2x1x32xf32> to vector<2x32xf32>
    %377 = arith.truncf %376 : vector<2x32xf32> to vector<2x32xbf16>
    %cst_168 = arith.constant dense<0.000000e+00> : vector<2x64xf32>
    %378 = tpu.matmul %377, %374, %cst_168 {dimension_numbers = #tpu.dot_dimension_numbers<[1], [0], [0], [1], [0, 0, 1, 1], [], []>} : vector<2x32xbf16>, vector<32x64xbf16>, vector<2x64xf32> -> vector<2x64xf32>
    %379 = arith.addf %372, %378 : vector<2x64xf32>
    %c2 = arith.constant 2 : index
    %c0_169 = arith.constant 0 : index
    %c0_170 = arith.constant 0 : index
    %380 = vector.load %arg19[%c2, %c0_169, %c0_170] : memref<8x32x64xbf16, #tpu.memory_space<vmem>>, vector<1x32x64xbf16>
    %381 = vector.shape_cast %380 : vector<1x32x64xbf16> to vector<32x64xbf16>
    %382 = vector.extract_strided_slice %364 {offsets = [0, 2, 0], sizes = [2, 1, 32], strides = [1, 1, 1]} : vector<2x8x32xf32> to vector<2x1x32xf32>
    %383 = vector.shape_cast %382 : vector<2x1x32xf32> to vector<2x32xf32>
    %384 = arith.truncf %383 : vector<2x32xf32> to vector<2x32xbf16>
    %cst_171 = arith.constant dense<0.000000e+00> : vector<2x64xf32>
    %385 = tpu.matmul %384, %381, %cst_171 {dimension_numbers = #tpu.dot_dimension_numbers<[1], [0], [0], [1], [0, 0, 1, 1], [], []>} : vector<2x32xbf16>, vector<32x64xbf16>, vector<2x64xf32> -> vector<2x64xf32>
    %386 = arith.addf %379, %385 : vector<2x64xf32>
    %c3 = arith.constant 3 : index
    %c0_172 = arith.constant 0 : index
    %c0_173 = arith.constant 0 : index
    %387 = vector.load %arg19[%c3, %c0_172, %c0_173] : memref<8x32x64xbf16, #tpu.memory_space<vmem>>, vector<1x32x64xbf16>
    %388 = vector.shape_cast %387 : vector<1x32x64xbf16> to vector<32x64xbf16>
    %389 = vector.extract_strided_slice %364 {offsets = [0, 3, 0], sizes = [2, 1, 32], strides = [1, 1, 1]} : vector<2x8x32xf32> to vector<2x1x32xf32>
    %390 = vector.shape_cast %389 : vector<2x1x32xf32> to vector<2x32xf32>
    %391 = arith.truncf %390 : vector<2x32xf32> to vector<2x32xbf16>
    %cst_174 = arith.constant dense<0.000000e+00> : vector<2x64xf32>
    %392 = tpu.matmul %391, %388, %cst_174 {dimension_numbers = #tpu.dot_dimension_numbers<[1], [0], [0], [1], [0, 0, 1, 1], [], []>} : vector<2x32xbf16>, vector<32x64xbf16>, vector<2x64xf32> -> vector<2x64xf32>
    %393 = arith.addf %386, %392 : vector<2x64xf32>
    %c4 = arith.constant 4 : index
    %c0_175 = arith.constant 0 : index
    %c0_176 = arith.constant 0 : index
    %394 = vector.load %arg19[%c4, %c0_175, %c0_176] : memref<8x32x64xbf16, #tpu.memory_space<vmem>>, vector<1x32x64xbf16>
    %395 = vector.shape_cast %394 : vector<1x32x64xbf16> to vector<32x64xbf16>
    %396 = vector.extract_strided_slice %364 {offsets = [0, 4, 0], sizes = [2, 1, 32], strides = [1, 1, 1]} : vector<2x8x32xf32> to vector<2x1x32xf32>
    %397 = vector.shape_cast %396 : vector<2x1x32xf32> to vector<2x32xf32>
    %398 = arith.truncf %397 : vector<2x32xf32> to vector<2x32xbf16>
    %cst_177 = arith.constant dense<0.000000e+00> : vector<2x64xf32>
    %399 = tpu.matmul %398, %395, %cst_177 {dimension_numbers = #tpu.dot_dimension_numbers<[1], [0], [0], [1], [0, 0, 1, 1], [], []>} : vector<2x32xbf16>, vector<32x64xbf16>, vector<2x64xf32> -> vector<2x64xf32>
    %400 = arith.addf %393, %399 : vector<2x64xf32>
    %c5 = arith.constant 5 : index
    %c0_178 = arith.constant 0 : index
    %c0_179 = arith.constant 0 : index
    %401 = vector.load %arg19[%c5, %c0_178, %c0_179] : memref<8x32x64xbf16, #tpu.memory_space<vmem>>, vector<1x32x64xbf16>
    %402 = vector.shape_cast %401 : vector<1x32x64xbf16> to vector<32x64xbf16>
    %403 = vector.extract_strided_slice %364 {offsets = [0, 5, 0], sizes = [2, 1, 32], strides = [1, 1, 1]} : vector<2x8x32xf32> to vector<2x1x32xf32>
    %404 = vector.shape_cast %403 : vector<2x1x32xf32> to vector<2x32xf32>
    %405 = arith.truncf %404 : vector<2x32xf32> to vector<2x32xbf16>
    %cst_180 = arith.constant dense<0.000000e+00> : vector<2x64xf32>
    %406 = tpu.matmul %405, %402, %cst_180 {dimension_numbers = #tpu.dot_dimension_numbers<[1], [0], [0], [1], [0, 0, 1, 1], [], []>} : vector<2x32xbf16>, vector<32x64xbf16>, vector<2x64xf32> -> vector<2x64xf32>
    %407 = arith.addf %400, %406 : vector<2x64xf32>
    %c6 = arith.constant 6 : index
    %c0_181 = arith.constant 0 : index
    %c0_182 = arith.constant 0 : index
    %408 = vector.load %arg19[%c6, %c0_181, %c0_182] : memref<8x32x64xbf16, #tpu.memory_space<vmem>>, vector<1x32x64xbf16>
    %409 = vector.shape_cast %408 : vector<1x32x64xbf16> to vector<32x64xbf16>
    %410 = vector.extract_strided_slice %364 {offsets = [0, 6, 0], sizes = [2, 1, 32], strides = [1, 1, 1]} : vector<2x8x32xf32> to vector<2x1x32xf32>
    %411 = vector.shape_cast %410 : vector<2x1x32xf32> to vector<2x32xf32>
    %412 = arith.truncf %411 : vector<2x32xf32> to vector<2x32xbf16>
    %cst_183 = arith.constant dense<0.000000e+00> : vector<2x64xf32>
    %413 = tpu.matmul %412, %409, %cst_183 {dimension_numbers = #tpu.dot_dimension_numbers<[1], [0], [0], [1], [0, 0, 1, 1], [], []>} : vector<2x32xbf16>, vector<32x64xbf16>, vector<2x64xf32> -> vector<2x64xf32>
    %414 = arith.addf %407, %413 : vector<2x64xf32>
    %c7 = arith.constant 7 : index
    %c0_184 = arith.constant 0 : index
    %c0_185 = arith.constant 0 : index
    %415 = vector.load %arg19[%c7, %c0_184, %c0_185] : memref<8x32x64xbf16, #tpu.memory_space<vmem>>, vector<1x32x64xbf16>
    %416 = vector.shape_cast %415 : vector<1x32x64xbf16> to vector<32x64xbf16>
    %417 = vector.extract_strided_slice %364 {offsets = [0, 7, 0], sizes = [2, 1, 32], strides = [1, 1, 1]} : vector<2x8x32xf32> to vector<2x1x32xf32>
    %418 = vector.shape_cast %417 : vector<2x1x32xf32> to vector<2x32xf32>
    %419 = arith.truncf %418 : vector<2x32xf32> to vector<2x32xbf16>
    %cst_186 = arith.constant dense<0.000000e+00> : vector<2x64xf32>
    %420 = tpu.matmul %419, %416, %cst_186 {dimension_numbers = #tpu.dot_dimension_numbers<[1], [0], [0], [1], [0, 0, 1, 1], [], []>} : vector<2x32xbf16>, vector<32x64xbf16>, vector<2x64xf32> -> vector<2x64xf32>
    %421 = arith.addf %414, %420 : vector<2x64xf32>
    %c0_187 = arith.constant 0 : index
    %c0_188 = arith.constant 0 : index
    %422 = vector.load %arg20[%c0_187, %c0_188] : memref<1x64xf32, #tpu.memory_space<vmem>>, vector<1x64xf32>
    %423 = vector.broadcast %422 : vector<1x64xf32> to vector<2x64xf32>
    %424 = arith.addf %421, %423 : vector<2x64xf32>
    %cst_189 = arith.constant 0.000000e+00 : f32
    %425 = vector.broadcast %cst_189 : f32 to vector<2x64xf32>
    %426 = arith.maximumf %424, %425 : vector<2x64xf32>
    %c0_190 = arith.constant 0 : index
    %c0_191 = arith.constant 0 : index
    %427 = vector.load %arg21[%c0_190, %c0_191] : memref<64x3xbf16, #tpu.memory_space<vmem>>, vector<64x3xbf16>
    %428 = arith.truncf %426 : vector<2x64xf32> to vector<2x64xbf16>
    %cst_192 = arith.constant dense<0.000000e+00> : vector<2x3xf32>
    %429 = tpu.matmul %428, %427, %cst_192 {dimension_numbers = #tpu.dot_dimension_numbers<[1], [0], [0], [1], [0, 0, 1, 1], [], []>} : vector<2x64xbf16>, vector<64x3xbf16>, vector<2x3xf32> -> vector<2x3xf32>
    %c0_193 = arith.constant 0 : index
    %c0_194 = arith.constant 0 : index
    %430 = vector.load %arg22[%c0_193, %c0_194] : memref<1x3xf32, #tpu.memory_space<vmem>>, vector<1x3xf32>
    %431 = vector.broadcast %430 : vector<1x3xf32> to vector<2x3xf32>
    %432 = arith.addf %429, %431 : vector<2x3xf32>
    %c0_195 = arith.constant 0 : index
    %c0_196 = arith.constant 0 : index
    %433 = vector.load %arg23[%c0_195, %c0_196] : memref<2x3xf32, #tpu.memory_space<vmem>>, vector<2x3xf32>
    tpu.vector_store %arg23[%c0_195, %c0_196], %432 {strides = array<i32>} : memref<2x3xf32, #tpu.memory_space<vmem>>, vector<2x3xf32>,
    return
  }
}

</mosaic_0001>

<llo_original>
// kernel: prior_transformer_forward.1
$region0: #{prior_transformer_forward.1}
  #allocation0 [shape = 'u32[]', space=smem, size = 0x4, offset = 0x4, fixed_abs, tag = 'smem constant byte address 0x4 - core index']
  #allocation1 [shape = 'u32[144,128]{1,0:T(1,128)}', space=vmem, size = 0x12000, scoped, tag = 'internal scratch']
  %s0 = inlined_call_operand.vmem [shape: f32[16,16], index: 0, kind: input, shape index: {}]
  %s1 = inlined_call_operand.hbm [shape: f32[2,8,8], index: 1, kind: input, shape index: {}]
  %s2 = inlined_call_operand.vmem [shape: f32[2], index: 2, kind: input, shape index: {}]
  %s3 = inlined_call_operand.hbm [shape: bf16[16,32], index: 3, kind: input, shape index: {}]
  %s4 = inlined_call_operand.hbm [shape: f32[1,32], index: 4, kind: input, shape index: {}]
  %s5 = inlined_call_operand.hbm [shape: f32[2,1,32], index: 5, kind: input, shape index: {}]
  %s6 = inlined_call_operand.hbm [shape: f32[2,1,32], index: 6, kind: input, shape index: {}]
  %s7 = inlined_call_operand.vmem [shape: bf16[2,32,32], index: 7, kind: input, shape index: {}]
  %s8 = inlined_call_operand.hbm [shape: f32[2,1,32], index: 8, kind: input, shape index: {}]
  %s9 = inlined_call_operand.hbm [shape: bf16[2,32,32], index: 9, kind: input, shape index: {}]
  %s10 = inlined_call_operand.hbm [shape: f32[2,1,32], index: 10, kind: input, shape index: {}]
  %s11 = inlined_call_operand.hbm [shape: bf16[2,32,32], index: 11, kind: input, shape index: {}]
  %s12 = inlined_call_operand.hbm [shape: f32[2,1,32], index: 12, kind: input, shape index: {}]
  %s13 = inlined_call_operand.hbm [shape: f32[2,1,32], index: 13, kind: input, shape index: {}]
  %s14 = inlined_call_operand.hbm [shape: f32[2,1,32], index: 14, kind: input, shape index: {}]
  %s15 = inlined_call_operand.hbm [shape: bf16[2,32,64], index: 15, kind: input, shape index: {}]
  %s16 = inlined_call_operand.hbm [shape: f32[2,1,64], index: 16, kind: input, shape index: {}]
  %s17 = inlined_call_operand.vmem [shape: bf16[2,64,32], index: 17, kind: input, shape index: {}]
  %s18 = inlined_call_operand.hbm [shape: f32[2,1,32], index: 18, kind: input, shape index: {}]
  %s19 = inlined_call_operand.vmem [shape: bf16[8,32,64], index: 19, kind: input, shape index: {}]
  %s20 = inlined_call_operand.hbm [shape: f32[1,64], index: 20, kind: input, shape index: {}]
  %s21 = inlined_call_operand.vmem [shape: bf16[64,3], index: 21, kind: input, shape index: {}]
  %s22 = inlined_call_operand.hbm [shape: f32[1,3], index: 22, kind: input, shape index: {}]
  %s23 = inlined_call_operand.hbm [shape: f32[2,3], index: 23, kind: output, shape index: {}]
  %s24 = sld [smem:[#allocation0]]
  $region174: #{prior_transformer_forward.1} parent=0
    _
  %s26 = ssub.s32 1, %s24
  %s27 = scalar_select 0, %s26, %s24
  $region1: #{prior_transformer_forward.1} parent=0
    #allocation2 [shape = 'u8[8192]{0}', space=vmem, size = 0x2000, scoped, tag = 'input window, operand 1, single buffered']
    #allocation3 [shape = 's32[1]{0}', space=sflag, size = 0x4, scoped, tag = 'scoped memory for prior_transformer_forward.1']
    #allocation4 [shape = 's32[1]{0}', space=sflag, size = 0x4, scoped, tag = 'scoped memory for prior_transformer_forward.1']
    #allocation5 [shape = 's32[1]{0}', space=sflag, size = 0x4, scoped, tag = 'scoped memory for prior_transformer_forward.1']
    #allocation6 [shape = 'u8[512]{0}', space=smem, size = 0x200, scoped, tag = 'input window, operand 2, single buffered']
    #allocation7 [shape = 'u8[4096]{0}', space=vmem, size = 0x1000, scoped, tag = 'input window, operand 3, single buffered']
    #allocation8 [shape = 's32[1]{0}', space=sflag, size = 0x4, scoped, tag = 'scoped memory for prior_transformer_forward.1']
    #allocation9 [shape = 'u8[512]{0}', space=vmem, size = 0x400, scoped, tag = 'input window, operand 4, single buffered']
    #allocation10 [shape = 'u8[1024]{0}', space=vmem, size = 0x400, scoped, tag = 'input window, operand 5, single buffered']
    #allocation11 [shape = 's32[1]{0}', space=sflag, size = 0x4, scoped, tag = 'scoped memory for prior_transformer_forward.1']
    #allocation12 [shape = 'u8[1024]{0}', space=vmem, size = 0x400, scoped, tag = 'input window, operand 6, single buffered']
    #allocation13 [shape = 'u8[1024]{0}', space=vmem, size = 0x400, scoped, tag = 'input window, operand 8, single buffered']
    #allocation14 [shape = 's32[1]{0}', space=sflag, size = 0x4, scoped, tag = 'scoped memory for prior_transformer_forward.1']
    #allocation15 [shape = 'u8[16384]{0}', space=vmem, size = 0x4000, scoped, tag = 'input window, operand 9, single buffered']
    #allocation16 [shape = 'u8[1024]{0}', space=vmem, size = 0x400, scoped, tag = 'input window, operand 10, single buffered']
    #allocation17 [shape = 's32[1]{0}', space=sflag, size = 0x4, scoped, tag = 'scoped memory for prior_transformer_forward.1']
    #allocation18 [shape = 'u8[16384]{0}', space=vmem, size = 0x4000, scoped, tag = 'input window, operand 11, single buffered']
    #allocation19 [shape = 'u8[1024]{0}', space=vmem, size = 0x400, scoped, tag = 'input window, operand 12, single buffered']
    #allocation20 [shape = 's32[1]{0}', space=sflag, size = 0x4, scoped, tag = 'scoped memory for prior_transformer_forward.1']
    #allocation21 [shape = 'u8[1024]{0}', space=vmem, size = 0x400, scoped, tag = 'input window, operand 13, single buffered']
    #allocation22 [shape = 'u8[1024]{0}', space=vmem, size = 0x400, scoped, tag = 'input window, operand 14, single buffered']
    #allocation23 [shape = 's32[1]{0}', space=sflag, size = 0x4, scoped, tag = 'scoped memory for prior_transformer_forward.1']
    #allocation24 [shape = 'u8[16384]{0}', space=vmem, size = 0x4000, scoped, tag = 'input window, operand 15, single buffered']
    #allocation25 [shape = 'u8[1024]{0}', space=vmem, size = 0x400, scoped, tag = 'input window, operand 16, single buffered']
    #allocation26 [shape = 's32[1]{0}', space=sflag, size = 0x4, scoped, tag = 'scoped memory for prior_transformer_forward.1']
    #allocation27 [shape = 'u8[1024]{0}', space=vmem, size = 0x400, scoped, tag = 'input window, operand 18, single buffered']
    #allocation28 [shape = 'u8[512]{0}', space=vmem, size = 0x400, scoped, tag = 'input window, operand 20, single buffered']
    #allocation29 [shape = 's32[1]{0}', space=sflag, size = 0x4, scoped, tag = 'scoped memory for prior_transformer_forward.1']
    #allocation30 [shape = 'u8[512]{0}', space=vmem, size = 0x400, scoped, tag = 'input window, operand 22, single buffered']
    #allocation31 [shape = 'u8[1024]{0}', space=vmem, size = 0x400, scoped, tag = 'output window, operand 0, single buffered']
    %28 = vsyncpa [#allocation3], 0
    %29 = vsyncpa [#allocation5], 0
    %30 = vsyncpa [#allocation8], 0
    %31 = vsyncpa [#allocation11], 0
    %32 = vsyncpa [#allocation14], 0
    %33 = vsyncpa [#allocation17], 0
    %34 = vsyncpa [#allocation20], 0
    %35 = vsyncpa [#allocation23], 0
    %36 = vsyncpa [#allocation26], 0
    %37 = vsyncpa [#allocation29], 0
    %38 = vsyncpa [#allocation4], 0
    // Predicated region
    $region2: #{prior_transformer_forward.1} parent=1 // pred_check
      _
    $region3: #{prior_transformer_forward.1} parent=1 // pred_check_branch
      %40 = sbr.rel (0) target = $region5
    $region4: #{prior_transformer_forward.1} parent=1 // pred_region
      _
    $region5: #{prior_transformer_forward.1} parent=1 // pred_fallthru
      _
    // Predicated region
    $region6: #{prior_transformer_forward.1} parent=1 // pred_check
      _
    $region7: #{prior_transformer_forward.1} parent=1 // pred_check_branch
      %42 = sbr.rel (0) target = $region9
    $region8: #{prior_transformer_forward.1} parent=1 // pred_region
      %s44 = ssub.s32 256, 256
      %45 = vsyncadd [#allocation3], %s44
      %s46 = sshll.u32 [#allocation2], 4
      %s47 = int_to_ptr.vmem [resolvable:$true] %s46
      %52 = dma.hbm_to_vmem [thread:$0]  %s1, 256, %s47, [#allocation3], 128, 128, 8
    $region9: #{prior_transformer_forward.1} parent=1 // pred_fallthru
      _
    // Predicated region
    $region10: #{prior_transformer_forward.1} parent=1 // pred_check
      _
    $region11: #{prior_transformer_forward.1} parent=1 // pred_check_branch
      %54 = sbr.rel (0) target = $region13
    $region12: #{prior_transformer_forward.1} parent=1 // pred_region
      %s56 = ssub.s32 16, 16
      %57 = vsyncadd [#allocation5], %s56
      %s59 = sshll.u32 %s2, 4
      %s60 = int_to_ptr.vmem [resolvable:$true] %s59
      %62 = dma.vmem_to_smem %s60, 16, [#allocation6], [#allocation5]
    $region13: #{prior_transformer_forward.1} parent=1 // pred_fallthru
      _
    // Predicated region
    $region14: #{prior_transformer_forward.1} parent=1 // pred_check
      _
    $region15: #{prior_transformer_forward.1} parent=1 // pred_check_branch
      %64 = sbr.rel (0) target = $region17
    $region16: #{prior_transformer_forward.1} parent=1 // pred_region
      %s66 = ssub.s32 128, 128
      %67 = vsyncadd [#allocation8], %s66
      %s68 = sshll.u32 [#allocation7], 4
      %s69 = int_to_ptr.vmem [resolvable:$true] %s68
      %74 = dma.hbm_to_vmem [thread:$0]  %s3, 128, %s69, [#allocation8], 64, 64, 4
    $region17: #{prior_transformer_forward.1} parent=1 // pred_fallthru
      _
    // Predicated region
    $region18: #{prior_transformer_forward.1} parent=1 // pred_check
      _
    $region19: #{prior_transformer_forward.1} parent=1 // pred_check_branch
      %76 = sbr.rel (0) target = $region21
    $region20: #{prior_transformer_forward.1} parent=1 // pred_region
      %s78 = ssub.s32 16, 16
      %79 = vsyncadd [#allocation8], %s78
      %s81 = sshll.u32 [#allocation9], 4
      %s82 = int_to_ptr.vmem [resolvable:$true] %s81
      %84 = dma.hbm_to_vmem [thread:$0]  %s4, 16, %s82, [#allocation8]
    $region21: #{prior_transformer_forward.1} parent=1 // pred_fallthru
      _
    // Predicated region
    $region22: #{prior_transformer_forward.1} parent=1 // pred_check
      _
    $region23: #{prior_transformer_forward.1} parent=1 // pred_check_branch
      %86 = sbr.rel (0) target = $region25
    $region24: #{prior_transformer_forward.1} parent=1 // pred_region
      %s88 = ssub.s32 32, 32
      %89 = vsyncadd [#allocation11], %s88
      %s90 = sshll.u32 [#allocation10], 4
      %s91 = int_to_ptr.vmem [resolvable:$true] %s90
      %96 = dma.hbm_to_vmem [thread:$0]  %s5, 32, %s91, [#allocation11], 16, 16, 1
    $region25: #{prior_transformer_forward.1} parent=1 // pred_fallthru
      _
    // Predicated region
    $region26: #{prior_transformer_forward.1} parent=1 // pred_check
      _
    $region27: #{prior_transformer_forward.1} parent=1 // pred_check_branch
      %98 = sbr.rel (0) target = $region29
    $region28: #{prior_transformer_forward.1} parent=1 // pred_region
      %s100 = ssub.s32 32, 32
      %101 = vsyncadd [#allocation11], %s100
      %s102 = sshll.u32 [#allocation12], 4
      %s103 = int_to_ptr.vmem [resolvable:$true] %s102
      %108 = dma.hbm_to_vmem [thread:$0]  %s6, 32, %s103, [#allocation11], 16, 16, 1
    $region29: #{prior_transformer_forward.1} parent=1 // pred_fallthru
      _
    // Predicated region
    $region30: #{prior_transformer_forward.1} parent=1 // pred_check
      _
    $region31: #{prior_transformer_forward.1} parent=1 // pred_check_branch
      %110 = sbr.rel (0) target = $region33
    $region32: #{prior_transformer_forward.1} parent=1 // pred_region
      _
    $region33: #{prior_transformer_forward.1} parent=1 // pred_fallthru
      _
    // Predicated region
    $region34: #{prior_transformer_forward.1} parent=1 // pred_check
      _
    $region35: #{prior_transformer_forward.1} parent=1 // pred_check_branch
      %112 = sbr.rel (0) target = $region37
    $region36: #{prior_transformer_forward.1} parent=1 // pred_region
      %s114 = ssub.s32 32, 32
      %115 = vsyncadd [#allocation14], %s114
      %s116 = sshll.u32 [#allocation13], 4
      %s117 = int_to_ptr.vmem [resolvable:$true] %s116
      %122 = dma.hbm_to_vmem [thread:$0]  %s8, 32, %s117, [#allocation14], 16, 16, 1
    $region37: #{prior_transformer_forward.1} parent=1 // pred_fallthru
      _
    // Predicated region
    $region38: #{prior_transformer_forward.1} parent=1 // pred_check
      _
    $region39: #{prior_transformer_forward.1} parent=1 // pred_check_branch
      %124 = sbr.rel (0) target = $region41
    $region40: #{prior_transformer_forward.1} parent=1 // pred_region
      %s126 = ssub.s32 512, 512
      %127 = vsyncadd [#allocation14], %s126
      %s128 = sshll.u32 [#allocation15], 4
      %s129 = int_to_ptr.vmem [resolvable:$true] %s128
      %134 = dma.hbm_to_vmem [thread:$0]  %s9, 512, %s129, [#allocation14], 64, 64, 4
    $region41: #{prior_transformer_forward.1} parent=1 // pred_fallthru
      _
    // Predicated region
    $region42: #{prior_transformer_forward.1} parent=1 // pred_check
      _
    $region43: #{prior_transformer_forward.1} parent=1 // pred_check_branch
      %136 = sbr.rel (0) target = $region45
    $region44: #{prior_transformer_forward.1} parent=1 // pred_region
      %s138 = ssub.s32 32, 32
      %139 = vsyncadd [#allocation17], %s138
      %s140 = sshll.u32 [#allocation16], 4
      %s141 = int_to_ptr.vmem [resolvable:$true] %s140
      %146 = dma.hbm_to_vmem [thread:$0]  %s10, 32, %s141, [#allocation17], 16, 16, 1
    $region45: #{prior_transformer_forward.1} parent=1 // pred_fallthru
      _
    // Predicated region
    $region46: #{prior_transformer_forward.1} parent=1 // pred_check
      _
    $region47: #{prior_transformer_forward.1} parent=1 // pred_check_branch
      %148 = sbr.rel (0) target = $region49
    $region48: #{prior_transformer_forward.1} parent=1 // pred_region
      %s150 = ssub.s32 512, 512
      %151 = vsyncadd [#allocation17], %s150
      %s152 = sshll.u32 [#allocation18], 4
      %s153 = int_to_ptr.vmem [resolvable:$true] %s152
      %158 = dma.hbm_to_vmem [thread:$0]  %s11, 512, %s153, [#allocation17], 64, 64, 4
    $region49: #{prior_transformer_forward.1} parent=1 // pred_fallthru
      _
    // Predicated region
    $region50: #{prior_transformer_forward.1} parent=1 // pred_check
      _
    $region51: #{prior_transformer_forward.1} parent=1 // pred_check_branch
      %160 = sbr.rel (0) target = $region53
    $region52: #{prior_transformer_forward.1} parent=1 // pred_region
      %s162 = ssub.s32 32, 32
      %163 = vsyncadd [#allocation20], %s162
      %s164 = sshll.u32 [#allocation19], 4
      %s165 = int_to_ptr.vmem [resolvable:$true] %s164
      %170 = dma.hbm_to_vmem [thread:$0]  %s12, 32, %s165, [#allocation20], 16, 16, 1
    $region53: #{prior_transformer_forward.1} parent=1 // pred_fallthru
      _
    // Predicated region
    $region54: #{prior_transformer_forward.1} parent=1 // pred_check
      _
    $region55: #{prior_transformer_forward.1} parent=1 // pred_check_branch
      %172 = sbr.rel (0) target = $region57
    $region56: #{prior_transformer_forward.1} parent=1 // pred_region
      %s174 = ssub.s32 32, 32
      %175 = vsyncadd [#allocation20], %s174
      %s176 = sshll.u32 [#allocation21], 4
      %s177 = int_to_ptr.vmem [resolvable:$true] %s176
      %182 = dma.hbm_to_vmem [thread:$0]  %s13, 32, %s177, [#allocation20], 16, 16, 1
    $region57: #{prior_transformer_forward.1} parent=1 // pred_fallthru
      _
    // Predicated region
    $region58: #{prior_transformer_forward.1} parent=1 // pred_check
      _
    $region59: #{prior_transformer_forward.1} parent=1 // pred_check_branch
      %184 = sbr.rel (0) target = $region61
    $region60: #{prior_transformer_forward.1} parent=1 // pred_region
      %s186 = ssub.s32 32, 32
      %187 = vsyncadd [#allocation23], %s186
      %s188 = sshll.u32 [#allocation22], 4
      %s189 = int_to_ptr.vmem [resolvable:$true] %s188
      %194 = dma.hbm_to_vmem [thread:$0]  %s14, 32, %s189, [#allocation23], 16, 16, 1
    $region61: #{prior_transformer_forward.1} parent=1 // pred_fallthru
      _
    // Predicated region
    $region62: #{prior_transformer_forward.1} parent=1 // pred_check
      _
    $region63: #{prior_transformer_forward.1} parent=1 // pred_check_branch
      %196 = sbr.rel (0) target = $region65
    $region64: #{prior_transformer_forward.1} parent=1 // pred_region
      %s198 = ssub.s32 512, 512
      %199 = vsyncadd [#allocation23], %s198
      %s200 = sshll.u32 [#allocation24], 4
      %s201 = int_to_ptr.vmem [resolvable:$true] %s200
      %206 = dma.hbm_to_vmem [thread:$0]  %s15, 512, %s201, [#allocation23], 64, 64, 4
    $region65: #{prior_transformer_forward.1} parent=1 // pred_fallthru
      _
    // Predicated region
    $region66: #{prior_transformer_forward.1} parent=1 // pred_check
      _
    $region67: #{prior_transformer_forward.1} parent=1 // pred_check_branch
      %208 = sbr.rel (0) target = $region69
    $region68: #{prior_transformer_forward.1} parent=1 // pred_region
      %s210 = ssub.s32 32, 32
      %211 = vsyncadd [#allocation26], %s210
      %s212 = sshll.u32 [#allocation25], 4
      %s213 = int_to_ptr.vmem [resolvable:$true] %s212
      %218 = dma.hbm_to_vmem [thread:$0]  %s16, 32, %s213, [#allocation26], 16, 16, 1
    $region69: #{prior_transformer_forward.1} parent=1 // pred_fallthru
      _
    // Predicated region
    $region70: #{prior_transformer_forward.1} parent=1 // pred_check
      _
    $region71: #{prior_transformer_forward.1} parent=1 // pred_check_branch
      %220 = sbr.rel (0) target = $region73
    $region72: #{prior_transformer_forward.1} parent=1 // pred_region
      _
    $region73: #{prior_transformer_forward.1} parent=1 // pred_fallthru
      _
    // Predicated region
    $region74: #{prior_transformer_forward.1} parent=1 // pred_check
      _
    $region75: #{prior_transformer_forward.1} parent=1 // pred_check_branch
      %222 = sbr.rel (0) target = $region77
    $region76: #{prior_transformer_forward.1} parent=1 // pred_region
      %s224 = ssub.s32 32, 32
      %225 = vsyncadd [#allocation26], %s224
      %s226 = sshll.u32 [#allocation27], 4
      %s227 = int_to_ptr.vmem [resolvable:$true] %s226
      %232 = dma.hbm_to_vmem [thread:$0]  %s18, 32, %s227, [#allocation26], 16, 16, 1
    $region77: #{prior_transformer_forward.1} parent=1 // pred_fallthru
      _
    // Predicated region
    $region78: #{prior_transformer_forward.1} parent=1 // pred_check
      _
    $region79: #{prior_transformer_forward.1} parent=1 // pred_check_branch
      %234 = sbr.rel (0) target = $region81
    $region80: #{prior_transformer_forward.1} parent=1 // pred_region
      _
    $region81: #{prior_transformer_forward.1} parent=1 // pred_fallthru
      _
    // Predicated region
    $region82: #{prior_transformer_forward.1} parent=1 // pred_check
      _
    $region83: #{prior_transformer_forward.1} parent=1 // pred_check_branch
      %236 = sbr.rel (0) target = $region85
    $region84: #{prior_transformer_forward.1} parent=1 // pred_region
      %s238 = ssub.s32 16, 16
      %239 = vsyncadd [#allocation29], %s238
      %s241 = sshll.u32 [#allocation28], 4
      %s242 = int_to_ptr.vmem [resolvable:$true] %s241
      %244 = dma.hbm_to_vmem [thread:$0]  %s20, 16, %s242, [#allocation29]
    $region85: #{prior_transformer_forward.1} parent=1 // pred_fallthru
      _
    // Predicated region
    $region86: #{prior_transformer_forward.1} parent=1 // pred_check
      _
    $region87: #{prior_transformer_forward.1} parent=1 // pred_check_branch
      %246 = sbr.rel (0) target = $region89
    $region88: #{prior_transformer_forward.1} parent=1 // pred_region
      _
    $region89: #{prior_transformer_forward.1} parent=1 // pred_fallthru
      _
    // Predicated region
    $region90: #{prior_transformer_forward.1} parent=1 // pred_check
      _
    $region91: #{prior_transformer_forward.1} parent=1 // pred_check_branch
      %248 = sbr.rel (0) target = $region93
    $region92: #{prior_transformer_forward.1} parent=1 // pred_region
      %s250 = ssub.s32 16, 16
      %251 = vsyncadd [#allocation29], %s250
      %s253 = sshll.u32 [#allocation30], 4
      %s254 = int_to_ptr.vmem [resolvable:$true] %s253
      %256 = dma.hbm_to_vmem [thread:$0]  %s22, 16, %s254, [#allocation29]
    $region93: #{prior_transformer_forward.1} parent=1 // pred_fallthru
      _
    // Predicated region
    $region94: #{prior_transformer_forward.1} parent=1 // pred_check
      _
    $region95: #{prior_transformer_forward.1} parent=1 // pred_check_branch
      %258 = sbr.rel (0) target = $region97
    $region96: #{prior_transformer_forward.1} parent=1 // pred_region
      %259 = dma.done [#allocation3], 256
    $region97: #{prior_transformer_forward.1} parent=1 // pred_fallthru
      _
    // Predicated region
    $region98: #{prior_transformer_forward.1} parent=1 // pred_check
      _
    $region99: #{prior_transformer_forward.1} parent=1 // pred_check_branch
      %261 = sbr.rel (0) target = $region101
    $region100: #{prior_transformer_forward.1} parent=1 // pred_region
      %262 = dma.done [#allocation5], 16
    $region101: #{prior_transformer_forward.1} parent=1 // pred_fallthru
      _
    // Predicated region
    $region102: #{prior_transformer_forward.1} parent=1 // pred_check
      _
    $region103: #{prior_transformer_forward.1} parent=1 // pred_check_branch
      %264 = sbr.rel (0) target = $region105
    $region104: #{prior_transformer_forward.1} parent=1 // pred_region
      %265 = dma.done [#allocation8], 128
    $region105: #{prior_transformer_forward.1} parent=1 // pred_fallthru
      _
    // Predicated region
    $region106: #{prior_transformer_forward.1} parent=1 // pred_check
      _
    $region107: #{prior_transformer_forward.1} parent=1 // pred_check_branch
      %267 = sbr.rel (0) target = $region109
    $region108: #{prior_transformer_forward.1} parent=1 // pred_region
      %268 = dma.done [#allocation8], 16
    $region109: #{prior_transformer_forward.1} parent=1 // pred_fallthru
      _
    // Predicated region
    $region110: #{prior_transformer_forward.1} parent=1 // pred_check
      _
    $region111: #{prior_transformer_forward.1} parent=1 // pred_check_branch
      %270 = sbr.rel (0) target = $region113
    $region112: #{prior_transformer_forward.1} parent=1 // pred_region
      %271 = dma.done [#allocation11], 32
    $region113: #{prior_transformer_forward.1} parent=1 // pred_fallthru
      _
    // Predicated region
    $region114: #{prior_transformer_forward.1} parent=1 // pred_check
      _
    $region115: #{prior_transformer_forward.1} parent=1 // pred_check_branch
      %273 = sbr.rel (0) target = $region117
    $region116: #{prior_transformer_forward.1} parent=1 // pred_region
      %274 = dma.done [#allocation11], 32
    $region117: #{prior_transformer_forward.1} parent=1 // pred_fallthru
      _
    // Predicated region
    $region118: #{prior_transformer_forward.1} parent=1 // pred_check
      _
    $region119: #{prior_transformer_forward.1} parent=1 // pred_check_branch
      %276 = sbr.rel (0) target = $region121
    $region120: #{prior_transformer_forward.1} parent=1 // pred_region
      %277 = dma.done [#allocation14], 32
    $region121: #{prior_transformer_forward.1} parent=1 // pred_fallthru
      _
    // Predicated region
    $region122: #{prior_transformer_forward.1} parent=1 // pred_check
      _
    $region123: #{prior_transformer_forward.1} parent=1 // pred_check_branch
      %279 = sbr.rel (0) target = $region125
    $region124: #{prior_transformer_forward.1} parent=1 // pred_region
      %280 = dma.done [#allocation14], 512
    $region125: #{prior_transformer_forward.1} parent=1 // pred_fallthru
      _
    // Predicated region
    $region126: #{prior_transformer_forward.1} parent=1 // pred_check
      _
    $region127: #{prior_transformer_forward.1} parent=1 // pred_check_branch
      %282 = sbr.rel (0) target = $region129
    $region128: #{prior_transformer_forward.1} parent=1 // pred_region
      %283 = dma.done [#allocation17], 32
    $region129: #{prior_transformer_forward.1} parent=1 // pred_fallthru
      _
    // Predicated region
    $region130: #{prior_transformer_forward.1} parent=1 // pred_check
      _
    $region131: #{prior_transformer_forward.1} parent=1 // pred_check_branch
      %285 = sbr.rel (0) target = $region133
    $region132: #{prior_transformer_forward.1} parent=1 // pred_region
      %286 = dma.done [#allocation17], 512
    $region133: #{prior_transformer_forward.1} parent=1 // pred_fallthru
      _
    // Predicated region
    $region134: #{prior_transformer_forward.1} parent=1 // pred_check
      _
    $region135: #{prior_transformer_forward.1} parent=1 // pred_check_branch
      %288 = sbr.rel (0) target = $region137
    $region136: #{prior_transformer_forward.1} parent=1 // pred_region
      %289 = dma.done [#allocation20], 32
    $region137: #{prior_transformer_forward.1} parent=1 // pred_fallthru
      _
    // Predicated region
    $region138: #{prior_transformer_forward.1} parent=1 // pred_check
      _
    $region139: #{prior_transformer_forward.1} parent=1 // pred_check_branch
      %291 = sbr.rel (0) target = $region141
    $region140: #{prior_transformer_forward.1} parent=1 // pred_region
      %292 = dma.done [#allocation20], 32
    $region141: #{prior_transformer_forward.1} parent=1 // pred_fallthru
      _
    // Predicated region
    $region142: #{prior_transformer_forward.1} parent=1 // pred_check
      _
    $region143: #{prior_transformer_forward.1} parent=1 // pred_check_branch
      %294 = sbr.rel (0) target = $region145
    $region144: #{prior_transformer_forward.1} parent=1 // pred_region
      %295 = dma.done [#allocation23], 32
    $region145: #{prior_transformer_forward.1} parent=1 // pred_fallthru
      _
    // Predicated region
    $region146: #{prior_transformer_forward.1} parent=1 // pred_check
      _
    $region147: #{prior_transformer_forward.1} parent=1 // pred_check_branch
      %297 = sbr.rel (0) target = $region149
    $region148: #{prior_transformer_forward.1} parent=1 // pred_region
      %298 = dma.done [#allocation23], 512
    $region149: #{prior_transformer_forward.1} parent=1 // pred_fallthru
      _
    // Predicated region
    $region150: #{prior_transformer_forward.1} parent=1 // pred_check
      _
    $region151: #{prior_transformer_forward.1} parent=1 // pred_check_branch
      %300 = sbr.rel (0) target = $region153
    $region152: #{prior_transformer_forward.1} parent=1 // pred_region
      %301 = dma.done [#allocation26], 32
    $region153: #{prior_transformer_forward.1} parent=1 // pred_fallthru
      _
    // Predicated region
    $region154: #{prior_transformer_forward.1} parent=1 // pred_check
      _
    $region155: #{prior_transformer_forward.1} parent=1 // pred_check_branch
      %303 = sbr.rel (0) target = $region157
    $region156: #{prior_transformer_forward.1} parent=1 // pred_region
      %304 = dma.done [#allocation26], 32
    $region157: #{prior_transformer_forward.1} parent=1 // pred_fallthru
      _
    // Predicated region
    $region158: #{prior_transformer_forward.1} parent=1 // pred_check
      _
    $region159: #{prior_transformer_forward.1} parent=1 // pred_check_branch
      %306 = sbr.rel (0) target = $region161
    $region160: #{prior_transformer_forward.1} parent=1 // pred_region
      %307 = dma.done [#allocation29], 16
    $region161: #{prior_transformer_forward.1} parent=1 // pred_fallthru
      _
    // Predicated region
    $region162: #{prior_transformer_forward.1} parent=1 // pred_check
      _
    $region163: #{prior_transformer_forward.1} parent=1 // pred_check_branch
      %309 = sbr.rel (0) target = $region165
    $region164: #{prior_transformer_forward.1} parent=1 // pred_region
      %310 = dma.done [#allocation29], 16
    $region165: #{prior_transformer_forward.1} parent=1 // pred_fallthru
      _
    %311 = sfence
    %v313 = vld [vmem:[%s0] sm:$0xff]
    %v314 = vld [vmem:[%s0 + $0x8] sm:$0xff]
    %v315 = vld [vmem:[#allocation2] sm:$0xff]
    %v316 = vld [vmem:[#allocation2 + $0x8] sm:$0xff]
    %v317 = vmul.f32 %v315, 0.35355338
    %v318 = vmul.f32 %v316, 0.35355338
    %v319 = vld [vmem:[#allocation7] sm:$0xf]
    %v320 = vld [vmem:[#allocation7 + $0x4] sm:$0xf]
    %v321 = vld [vmem:[#allocation9] sm:$0x1]
    %v322 = vpack.c.bf16 %v314, %v313
    %v324 = vlaneseq
    %v325 = vshrl.u32 %v324, 7
    %v326 = vsub.s32 0, %v325
    %v327 = vrot.slane %v321, %v326
    %v331 = vunpack.c.l.b16 %v319
    %v332 = vunpack.c.l.b16 %v320
    %v333 = vpack.c.b16 %v332, %v331
    %vm335 = vcmask 130048
    %v337 = vsel %vm335, %v322, 0
    %339 = vmatprep.subr.bf16.mxu0 0
    %340 = vmatpush1.bf16.msra.mxu0 %v333
    %341 = vmatprep.subr.bf16.mxu0 0
    %342 = vmatpush1.bf16.msra.mxu0 0
    %343 = vmatprep.subr.bf16.mxu0 0
    %344 = vmatpush1.bf16.msra.mxu0 0
    %345 = vmatprep.subr.bf16.mxu0 0
    %346 = vmatpush1.bf16.msra.mxu0 0
    %347 = vmatprep.subr.bf16.mxu0 0
    %348 = vmatpush1.bf16.msra.mxu0 0
    %349 = vmatprep.subr.bf16.mxu0 0
    %350 = vmatpush1.bf16.msra.mxu0 0
    %351 = vmatprep.subr.bf16.mxu0 0
    %352 = vmatpush1.bf16.msra.mxu0 0
    %353 = vmatprep.subr.bf16.mxu0 0
    %354 = vmatpush1.bf16.msra.mxu0 0
    %355 = vmatprep.subr.bf16.mxu0 0
    %356 = vmatpush1.bf16.msra.mxu0 0
    %357 = vmatprep.subr.bf16.mxu0 0
    %358 = vmatpush1.bf16.msra.mxu0 0
    %359 = vmatprep.subr.bf16.mxu0 0
    %360 = vmatpush1.bf16.msra.mxu0 0
    %361 = vmatprep.subr.bf16.mxu0 0
    %362 = vmatpush1.bf16.msra.mxu0 0
    %363 = vmatprep.subr.bf16.mxu0 0
    %364 = vmatpush1.bf16.msra.mxu0 0
    %365 = vmatprep.subr.bf16.mxu0 0
    %366 = vmatpush1.bf16.msra.mxu0 0
    %367 = vmatprep.subr.bf16.mxu0 0
    %368 = vmatpush1.bf16.msra.mxu0 0
    %369 = vmatprep.subr.bf16.mxu0 0
    %370 = vmatpush1.bf16.msra.mxu0 0
    %371 = vmatprep.mubr.bf16.mxu0 0
    %372 = vmatmul.mubr.bf16.gmra.mrb[0].mxu0 %v337
    %v373 = vpop.f32.mrb[0].mxu0
    %v374 = vadd.f32 %v327, %v373
    %v375 = vpop.f32.mrb[0].mxu0
    %v376 = vpop.f32.mrb[0].mxu0
    %v377 = vadd.f32 %v327, %v376
    %v378 = vpop.f32.mrb[0].mxu0
    %379 = vdwg.mxu0
    %v380 = vld [vmem:[#allocation10] sm:$0x1]
    %v381 = vld [vmem:[#allocation12] sm:$0x1]
    %vm382 = vcmask 261120
    %v383 = vsel %vm382, %v374, 0.0
    %384 = vadd.xlane.f32.xlu0 %v383
    %v385 = vpop.xlane.xlu0 %384
    %v386 = vsel %vm382, %v377, 0.0
    %387 = vadd.xlane.f32.xlu0 %v386
    %v388 = vpop.xlane.xlu0 %387
    %v389 = vrcp.pop 32.0
    %v390 = vmul.f32 %v385, %v389
    %v391 = vmul.f32 %v388, %v389
    %v392 = vsub.f32 %v374, %v390
    %v393 = vsub.f32 %v377, %v391
    %v394 = vmul.f32 %v392, %v392
    %v395 = vmul.f32 %v393, %v393
    %v396 = vsel %vm382, %v394, 0.0
    %397 = vadd.xlane.f32.xlu0 %v396
    %v398 = vpop.xlane.xlu0 %397
    %v399 = vsel %vm382, %v395, 0.0
    %400 = vadd.xlane.f32.xlu0 %v399
    %v401 = vpop.xlane.xlu0 %400
    %v402 = vmul.f32 %v398, %v389
    %v403 = vmul.f32 %v401, %v389
    %v404 = vadd.f32 %v402, 1e-05
    %v405 = vadd.f32 %v403, 1e-05
    %v406 = vrsqrt.pop %v404
    %v407 = vrsqrt.pop %v405
    %v408 = vmul.f32 %v392, %v406
    %v409 = vmul.f32 %v393, %v407
    %v411 = vlaneseq
    %v412 = vshrl.u32 %v411, 7
    %v413 = vsub.s32 0, %v412
    %v414 = vrot.slane %v380, %v413
    %v416 = vmul.f32 %v408, %v414
    %v417 = vmul.f32 %v409, %v414
    %v419 = vlaneseq
    %v420 = vshrl.u32 %v419, 7
    %v421 = vsub.s32 0, %v420
    %v422 = vrot.slane %v381, %v421
    %v424 = vadd.f32 %v416, %v422
    %v425 = vadd.f32 %v417, %v422
    %v426 = vld [vmem:[%s7] sm:$0xf]
    %v427 = vld [vmem:[%s7 + $0x4] sm:$0xf]
    %v428 = vld [vmem:[%s7 + $0x8] sm:$0xf]
    %v429 = vld [vmem:[%s7 + $0xc] sm:$0xf]
    %v430 = vld [vmem:[#allocation13] sm:$0x1]
    %v431 = vpack.c.bf16 %v425, %v424
    %v433 = vlaneseq
    %v434 = vshrl.u32 %v433, 7
    %v435 = vsub.s32 0, %v434
    %v436 = vrot.slane %v430, %v435
    %v442 = vunpack.c.l.b16 %v426
    %v443 = vunpack.c.l.b16 %v427
    %v444 = vunpack.c.l.b16 %v428
    %v445 = vunpack.c.l.b16 %v429
    %v446 = vpack.c.b16 %v443, %v442
    %v447 = vpack.c.b16 %v445, %v444
    %v451 = vsel %vm382, %v431, 0
    %453 = vmatprep.subr.bf16.mxu0 0
    %454 = vmatpush1.bf16.msra.mxu0 %v446
    %455 = vmatprep.subr.bf16.mxu0 0
    %456 = vmatpush1.bf16.msra.mxu0 %v447
    %457 = vmatprep.subr.bf16.mxu0 0
    %458 = vmatpush1.bf16.msra.mxu0 0
    %459 = vmatprep.subr.bf16.mxu0 0
    %460 = vmatpush1.bf16.msra.mxu0 0
    %461 = vmatprep.subr.bf16.mxu0 0
    %462 = vmatpush1.bf16.msra.mxu0 0
    %463 = vmatprep.subr.bf16.mxu0 0
    %464 = vmatpush1.bf16.msra.mxu0 0
    %465 = vmatprep.subr.bf16.mxu0 0
    %466 = vmatpush1.bf16.msra.mxu0 0
    %467 = vmatprep.subr.bf16.mxu0 0
    %468 = vmatpush1.bf16.msra.mxu0 0
    %469 = vmatprep.subr.bf16.mxu0 0
    %470 = vmatpush1.bf16.msra.mxu0 0
    %471 = vmatprep.subr.bf16.mxu0 0
    %472 = vmatpush1.bf16.msra.mxu0 0
    %473 = vmatprep.subr.bf16.mxu0 0
    %474 = vmatpush1.bf16.msra.mxu0 0
    %475 = vmatprep.subr.bf16.mxu0 0
    %476 = vmatpush1.bf16.msra.mxu0 0
    %477 = vmatprep.subr.bf16.mxu0 0
    %478 = vmatpush1.bf16.msra.mxu0 0
    %479 = vmatprep.subr.bf16.mxu0 0
    %480 = vmatpush1.bf16.msra.mxu0 0
    %481 = vmatprep.subr.bf16.mxu0 0
    %482 = vmatpush1.bf16.msra.mxu0 0
    %483 = vmatprep.subr.bf16.mxu0 0
    %484 = vmatpush1.bf16.msra.mxu0 0
    %485 = vmatprep.mubr.bf16.mxu0 0
    %486 = vmatmul.mubr.bf16.gmra.mrb[0].mxu0 %v451
    %v487 = vpop.f32.mrb[0].mxu0
    %v488 = vadd.f32 %v436, %v487
    %v489 = vpop.f32.mrb[0].mxu0
    %v490 = vpop.f32.mrb[0].mxu0
    %v491 = vadd.f32 %v436, %v490
    %v492 = vpop.f32.mrb[0].mxu0
    %493 = vdwg.mxu0
    %v494 = vmul.f32 %v488, 0.35355338
    %v495 = vmul.f32 %v491, 0.35355338
    %v496 = vld [vmem:[#allocation15] sm:$0xf]
    %v497 = vld [vmem:[#allocation15 + $0x4] sm:$0xf]
    %v498 = vld [vmem:[#allocation15 + $0x8] sm:$0xf]
    %v499 = vld [vmem:[#allocation15 + $0xc] sm:$0xf]
    %v500 = vld [vmem:[#allocation16] sm:$0x1]
    %v502 = vlaneseq
    %v503 = vshrl.u32 %v502, 7
    %v504 = vsub.s32 0, %v503
    %v505 = vrot.slane %v500, %v504
    %v511 = vunpack.c.l.b16 %v496
    %v512 = vunpack.c.l.b16 %v497
    %v513 = vunpack.c.l.b16 %v498
    %v514 = vunpack.c.l.b16 %v499
    %v515 = vpack.c.b16 %v512, %v511
    %v516 = vpack.c.b16 %v514, %v513
    %519 = vmatprep.subr.bf16.mxu0 0
    %520 = vmatpush1.bf16.msra.mxu0 %v515
    %521 = vmatprep.subr.bf16.mxu0 0
    %522 = vmatpush1.bf16.msra.mxu0 %v516
    %523 = vmatprep.subr.bf16.mxu0 0
    %524 = vmatpush1.bf16.msra.mxu0 0
    %525 = vmatprep.subr.bf16.mxu0 0
    %526 = vmatpush1.bf16.msra.mxu0 0
    %527 = vmatprep.subr.bf16.mxu0 0
    %528 = vmatpush1.bf16.msra.mxu0 0
    %529 = vmatprep.subr.bf16.mxu0 0
    %530 = vmatpush1.bf16.msra.mxu0 0
    %531 = vmatprep.subr.bf16.mxu0 0
    %532 = vmatpush1.bf16.msra.mxu0 0
    %533 = vmatprep.subr.bf16.mxu0 0
    %534 = vmatpush1.bf16.msra.mxu0 0
    %535 = vmatprep.subr.bf16.mxu0 0
    %536 = vmatpush1.bf16.msra.mxu0 0
    %537 = vmatprep.subr.bf16.mxu0 0
    %538 = vmatpush1.bf16.msra.mxu0 0
    %539 = vmatprep.subr.bf16.mxu0 0
    %540 = vmatpush1.bf16.msra.mxu0 0
    %541 = vmatprep.subr.bf16.mxu0 0
    %542 = vmatpush1.bf16.msra.mxu0 0
    %543 = vmatprep.subr.bf16.mxu0 0
    %544 = vmatpush1.bf16.msra.mxu0 0
    %545 = vmatprep.subr.bf16.mxu0 0
    %546 = vmatpush1.bf16.msra.mxu0 0
    %547 = vmatprep.subr.bf16.mxu0 0
    %548 = vmatpush1.bf16.msra.mxu0 0
    %549 = vmatprep.subr.bf16.mxu0 0
    %550 = vmatpush1.bf16.msra.mxu0 0
    %551 = vmatprep.mubr.bf16.mxu0 0
    %552 = vmatmul.mubr.bf16.gmra.mrb[0].mxu0 %v451
    %v553 = vpop.f32.mrb[0].mxu0
    %v554 = vadd.f32 %v505, %v553
    %v555 = vpop.f32.mrb[0].mxu0
    %v556 = vpop.f32.mrb[0].mxu0
    %v557 = vadd.f32 %v505, %v556
    %v558 = vpop.f32.mrb[0].mxu0
    %559 = vdwg.mxu0
    %v560 = vld [vmem:[#allocation18] sm:$0xf]
    %v561 = vld [vmem:[#allocation18 + $0x4] sm:$0xf]
    %v562 = vld [vmem:[#allocation18 + $0x8] sm:$0xf]
    %v563 = vld [vmem:[#allocation18 + $0xc] sm:$0xf]
    %v564 = vld [vmem:[#allocation19] sm:$0x1]
    %v566 = vlaneseq
    %v567 = vshrl.u32 %v566, 7
    %v568 = vsub.s32 0, %v567
    %v569 = vrot.slane %v564, %v568
    %v575 = vunpack.c.l.b16 %v560
    %v576 = vunpack.c.l.b16 %v561
    %v577 = vunpack.c.l.b16 %v562
    %v578 = vunpack.c.l.b16 %v563
    %v579 = vpack.c.b16 %v576, %v575
    %v580 = vpack.c.b16 %v578, %v577
    %583 = vmatprep.subr.bf16.mxu0 0
    %584 = vmatpush1.bf16.msra.mxu0 %v579
    %585 = vmatprep.subr.bf16.mxu0 0
    %586 = vmatpush1.bf16.msra.mxu0 %v580
    %587 = vmatprep.subr.bf16.mxu0 0
    %588 = vmatpush1.bf16.msra.mxu0 0
    %589 = vmatprep.subr.bf16.mxu0 0
    %590 = vmatpush1.bf16.msra.mxu0 0
    %591 = vmatprep.subr.bf16.mxu0 0
    %592 = vmatpush1.bf16.msra.mxu0 0
    %593 = vmatprep.subr.bf16.mxu0 0
    %594 = vmatpush1.bf16.msra.mxu0 0
    %595 = vmatprep.subr.bf16.mxu0 0
    %596 = vmatpush1.bf16.msra.mxu0 0
    %597 = vmatprep.subr.bf16.mxu0 0
    %598 = vmatpush1.bf16.msra.mxu0 0
    %599 = vmatprep.subr.bf16.mxu0 0
    %600 = vmatpush1.bf16.msra.mxu0 0
    %601 = vmatprep.subr.bf16.mxu0 0
    %602 = vmatpush1.bf16.msra.mxu0 0
    %603 = vmatprep.subr.bf16.mxu0 0
    %604 = vmatpush1.bf16.msra.mxu0 0
    %605 = vmatprep.subr.bf16.mxu0 0
    %606 = vmatpush1.bf16.msra.mxu0 0
    %607 = vmatprep.subr.bf16.mxu0 0
    %608 = vmatpush1.bf16.msra.mxu0 0
    %609 = vmatprep.subr.bf16.mxu0 0
    %610 = vmatpush1.bf16.msra.mxu0 0
    %611 = vmatprep.subr.bf16.mxu0 0
    %612 = vmatpush1.bf16.msra.mxu0 0
    %613 = vmatprep.subr.bf16.mxu0 0
    %614 = vmatpush1.bf16.msra.mxu0 0
    %615 = vmatprep.mubr.bf16.mxu0 0
    %616 = vmatmul.mubr.bf16.gmra.mrb[0].mxu0 %v451
    %v617 = vpop.f32.mrb[0].mxu0
    %v618 = vadd.f32 %v569, %v617
    %v619 = vpop.f32.mrb[0].mxu0
    %v620 = vpop.f32.mrb[0].mxu0
    %v621 = vadd.f32 %v569, %v620
    %v622 = vpop.f32.mrb[0].mxu0
    %623 = vdwg.mxu0
    %v624 = vpack.c.bf16 %v494, %v494
    %v625 = vpack.c.bf16 %v495, %v495
    %v626 = vpack.c.bf16 %v554, %v554
    %v627 = vpack.c.bf16 %v557, %v557
    %v628 = vpack.c.bf16 %v618, %v618
    %v629 = vpack.c.bf16 %v621, %v621
    %s630 = sld [smem:[#allocation6]]
    %v631 = vstv %s630
    %v632 = vmul.f32 %v631, %v317
    %v633 = vmul.f32 %v631, %v318
    %vm634 = vcmask 64512
    %v636 = vsel %vm634, %v624, 0
    %v639 = vsel %vm634, %v626, 0
    %641 = vmatprep.subr.bf16.mxu0 0
    %642 = vmatpush1.bf16.xpose.msra.mxu0 %v639
    %643 = vmatprep.subr.bf16.mxu0 0
    %644 = vmatpush1.bf16.xpose.msra.mxu0 0
    %645 = vmatprep.subr.bf16.mxu0 0
    %646 = vmatpush1.bf16.xpose.msra.mxu0 0
    %647 = vmatprep.subr.bf16.mxu0 0
    %648 = vmatpush1.bf16.xpose.msra.mxu0 0
    %649 = vmatprep.subr.bf16.mxu0 0
    %650 = vmatpush1.bf16.xpose.msra.mxu0 0
    %651 = vmatprep.subr.bf16.mxu0 0
    %652 = vmatpush1.bf16.xpose.msra.mxu0 0
    %653 = vmatprep.subr.bf16.mxu0 0
    %654 = vmatpush1.bf16.xpose.msra.mxu0 0
    %655 = vmatprep.subr.bf16.mxu0 0
    %656 = vmatpush1.bf16.xpose.msra.mxu0 0
    %657 = vmatprep.subr.bf16.mxu0 0
    %658 = vmatpush1.bf16.xpose.msra.mxu0 0
    %659 = vmatprep.subr.bf16.mxu0 0
    %660 = vmatpush1.bf16.xpose.msra.mxu0 0
    %661 = vmatprep.subr.bf16.mxu0 0
    %662 = vmatpush1.bf16.xpose.msra.mxu0 0
    %663 = vmatprep.subr.bf16.mxu0 0
    %664 = vmatpush1.bf16.xpose.msra.mxu0 0
    %665 = vmatprep.subr.bf16.mxu0 0
    %666 = vmatpush1.bf16.xpose.msra.mxu0 0
    %667 = vmatprep.subr.bf16.mxu0 0
    %668 = vmatpush1.bf16.xpose.msra.mxu0 0
    %669 = vmatprep.subr.bf16.mxu0 0
    %670 = vmatpush1.bf16.xpose.msra.mxu0 0
    %671 = vmatprep.subr.bf16.mxu0 0
    %672 = vmatpush1.bf16.xpose.msra.mxu0 0
    %673 = vmatprep.mubr.bf16.mxu0 0
    %674 = vmatmul.mubr.bf16.gmra.mrb[0].mxu0 %v636
    %v675 = vpop.f32.mrb[0].mxu0
    %v676 = vadd.f32 %v632, %v675
    %v677 = vpop.f32.mrb[0].mxu0
    %v678 = vpop.f32.mrb[0].mxu0
    %v679 = vpop.f32.mrb[0].mxu0
    %680 = vdwg.mxu0
    %v682 = vsel %vm634, %v625, 0
    %v685 = vsel %vm634, %v627, 0
    %687 = vmatprep.subr.bf16.mxu0 0
    %688 = vmatpush1.bf16.xpose.msra.mxu0 %v685
    %689 = vmatprep.subr.bf16.mxu0 0
    %690 = vmatpush1.bf16.xpose.msra.mxu0 0
    %691 = vmatprep.subr.bf16.mxu0 0
    %692 = vmatpush1.bf16.xpose.msra.mxu0 0
    %693 = vmatprep.subr.bf16.mxu0 0
    %694 = vmatpush1.bf16.xpose.msra.mxu0 0
    %695 = vmatprep.subr.bf16.mxu0 0
    %696 = vmatpush1.bf16.xpose.msra.mxu0 0
    %697 = vmatprep.subr.bf16.mxu0 0
    %698 = vmatpush1.bf16.xpose.msra.mxu0 0
    %699 = vmatprep.subr.bf16.mxu0 0
    %700 = vmatpush1.bf16.xpose.msra.mxu0 0
    %701 = vmatprep.subr.bf16.mxu0 0
    %702 = vmatpush1.bf16.xpose.msra.mxu0 0
    %703 = vmatprep.subr.bf16.mxu0 0
    %704 = vmatpush1.bf16.xpose.msra.mxu0 0
    %705 = vmatprep.subr.bf16.mxu0 0
    %706 = vmatpush1.bf16.xpose.msra.mxu0 0
    %707 = vmatprep.subr.bf16.mxu0 0
    %708 = vmatpush1.bf16.xpose.msra.mxu0 0
    %709 = vmatprep.subr.bf16.mxu0 0
    %710 = vmatpush1.bf16.xpose.msra.mxu0 0
    %711 = vmatprep.subr.bf16.mxu0 0
    %712 = vmatpush1.bf16.xpose.msra.mxu0 0
    %713 = vmatprep.subr.bf16.mxu0 0
    %714 = vmatpush1.bf16.xpose.msra.mxu0 0
    %715 = vmatprep.subr.bf16.mxu0 0
    %716 = vmatpush1.bf16.xpose.msra.mxu0 0
    %717 = vmatprep.subr.bf16.mxu0 0
    %718 = vmatpush1.bf16.xpose.msra.mxu0 0
    %719 = vmatprep.mubr.bf16.mxu0 0
    %720 = vmatmul.mubr.bf16.gmra.mrb[0].mxu0 %v682
    %v721 = vpop.f32.mrb[0].mxu0
    %v722 = vadd.f32 %v633, %v721
    %v723 = vpop.f32.mrb[0].mxu0
    %v724 = vpop.f32.mrb[0].mxu0
    %v725 = vpop.f32.mrb[0].mxu0
    %726 = vdwg.mxu0
    %v727 = vsel %vm634, %v676, -inf
    %728 = vmax.xlane.f32.xlu0 %v727
    %v729 = vpop.xlane.xlu0 %728
    %v730 = vsel %vm634, %v722, -inf
    %731 = vmax.xlane.f32.xlu0 %v730
    %v732 = vpop.xlane.xlu0 %731
    %v733 = vsub.f32 %v676, %v729
    %v734 = vsub.f32 %v722, %v732
    %v735 = vmul.f32 %v733, 1.442695
    %v736 = vpow.pop %v735
    %v737 = vmul.f32 %v734, 1.442695
    %v738 = vpow.pop %v737
    %v739 = vsel %vm634, %v736, 0.0
    %740 = vadd.xlane.f32.xlu0 %v739
    %v741 = vpop.xlane.xlu0 %740
    %v742 = vsel %vm634, %v738, 0.0
    %743 = vadd.xlane.f32.xlu0 %v742
    %v744 = vpop.xlane.xlu0 %743
    %v745 = vrcp.pop %v741
    %v746 = vrcp.pop %v744
    %v747 = vmul.f32 %v736, %v745
    %v748 = vmul.f32 %v738, %v746
    %v749 = vpack.c.bf16 %v747, %v747
    %v750 = vpack.c.bf16 %v748, %v748
    %v752 = vsel %vm634, %v749, 0
    %vm754 = vcmask 1043456
    %v756 = vsel %vm754, %v628, 0
    %758 = vmatprep.subr.bf16.mxu0 0
    %759 = vmatpush1.bf16.msra.mxu0 %v756
    %760 = vmatprep.subr.bf16.mxu0 0
    %761 = vmatpush1.bf16.msra.mxu0 0
    %762 = vmatprep.subr.bf16.mxu0 0
    %763 = vmatpush1.bf16.msra.mxu0 0
    %764 = vmatprep.subr.bf16.mxu0 0
    %765 = vmatpush1.bf16.msra.mxu0 0
    %766 = vmatprep.subr.bf16.mxu0 0
    %767 = vmatpush1.bf16.msra.mxu0 0
    %768 = vmatprep.subr.bf16.mxu0 0
    %769 = vmatpush1.bf16.msra.mxu0 0
    %770 = vmatprep.subr.bf16.mxu0 0
    %771 = vmatpush1.bf16.msra.mxu0 0
    %772 = vmatprep.subr.bf16.mxu0 0
    %773 = vmatpush1.bf16.msra.mxu0 0
    %774 = vmatprep.subr.bf16.mxu0 0
    %775 = vmatpush1.bf16.msra.mxu0 0
    %776 = vmatprep.subr.bf16.mxu0 0
    %777 = vmatpush1.bf16.msra.mxu0 0
    %778 = vmatprep.subr.bf16.mxu0 0
    %779 = vmatpush1.bf16.msra.mxu0 0
    %780 = vmatprep.subr.bf16.mxu0 0
    %781 = vmatpush1.bf16.msra.mxu0 0
    %782 = vmatprep.subr.bf16.mxu0 0
    %783 = vmatpush1.bf16.msra.mxu0 0
    %784 = vmatprep.subr.bf16.mxu0 0
    %785 = vmatpush1.bf16.msra.mxu0 0
    %786 = vmatprep.subr.bf16.mxu0 0
    %787 = vmatpush1.bf16.msra.mxu0 0
    %788 = vmatprep.subr.bf16.mxu0 0
    %789 = vmatpush1.bf16.msra.mxu0 0
    %790 = vmatprep.mubr.bf16.mxu0 0
    %791 = vmatmul.mubr.bf16.gmra.mrb[0].mxu0 %v752
    %v792 = vpop.f32.mrb[0].mxu0
    %v793 = vadd.f32 0.0, %v792
    %v794 = vpop.f32.mrb[0].mxu0
    %v795 = vpop.f32.mrb[0].mxu0
    %v796 = vpop.f32.mrb[0].mxu0
    %797 = vdwg.mxu0
    %v799 = vsel %vm634, %v750, 0
    %v802 = vsel %vm754, %v629, 0
    %804 = vmatprep.subr.bf16.mxu0 0
    %805 = vmatpush1.bf16.msra.mxu0 %v802
    %806 = vmatprep.subr.bf16.mxu0 0
    %807 = vmatpush1.bf16.msra.mxu0 0
    %808 = vmatprep.subr.bf16.mxu0 0
    %809 = vmatpush1.bf16.msra.mxu0 0
    %810 = vmatprep.subr.bf16.mxu0 0
    %811 = vmatpush1.bf16.msra.mxu0 0
    %812 = vmatprep.subr.bf16.mxu0 0
    %813 = vmatpush1.bf16.msra.mxu0 0
    %814 = vmatprep.subr.bf16.mxu0 0
    %815 = vmatpush1.bf16.msra.mxu0 0
    %816 = vmatprep.subr.bf16.mxu0 0
    %817 = vmatpush1.bf16.msra.mxu0 0
    %818 = vmatprep.subr.bf16.mxu0 0
    %819 = vmatpush1.bf16.msra.mxu0 0
    %820 = vmatprep.subr.bf16.mxu0 0
    %821 = vmatpush1.bf16.msra.mxu0 0
    %822 = vmatprep.subr.bf16.mxu0 0
    %823 = vmatpush1.bf16.msra.mxu0 0
    %824 = vmatprep.subr.bf16.mxu0 0
    %825 = vmatpush1.bf16.msra.mxu0 0
    %826 = vmatprep.subr.bf16.mxu0 0
    %827 = vmatpush1.bf16.msra.mxu0 0
    %828 = vmatprep.subr.bf16.mxu0 0
    %829 = vmatpush1.bf16.msra.mxu0 0
    %830 = vmatprep.subr.bf16.mxu0 0
    %831 = vmatpush1.bf16.msra.mxu0 0
    %832 = vmatprep.subr.bf16.mxu0 0
    %833 = vmatpush1.bf16.msra.mxu0 0
    %834 = vmatprep.subr.bf16.mxu0 0
    %835 = vmatpush1.bf16.msra.mxu0 0
    %836 = vmatprep.mubr.bf16.mxu0 0
    %837 = vmatmul.mubr.bf16.gmra.mrb[0].mxu0 %v799
    %v838 = vpop.f32.mrb[0].mxu0
    %v839 = vadd.f32 0.0, %v838
    %v840 = vpop.f32.mrb[0].mxu0
    %v841 = vpop.f32.mrb[0].mxu0
    %v842 = vpop.f32.mrb[0].mxu0
    %843 = vdwg.mxu0
    %845 = vrot.lane.b32.xlu0 %v624, 120
    %v846 = vpop.permute.xlu0 %845
    %848 = vrot.lane.b32.xlu0 %v626, 120
    %v849 = vpop.permute.xlu0 %848
    %v851 = vsel %vm634, %v846, 0
    %v854 = vsel %vm634, %v849, 0
    %856 = vmatprep.subr.bf16.mxu0 0
    %857 = vmatpush1.bf16.xpose.msra.mxu0 %v854
    %858 = vmatprep.subr.bf16.mxu0 0
    %859 = vmatpush1.bf16.xpose.msra.mxu0 0
    %860 = vmatprep.subr.bf16.mxu0 0
    %861 = vmatpush1.bf16.xpose.msra.mxu0 0
    %862 = vmatprep.subr.bf16.mxu0 0
    %863 = vmatpush1.bf16.xpose.msra.mxu0 0
    %864 = vmatprep.subr.bf16.mxu0 0
    %865 = vmatpush1.bf16.xpose.msra.mxu0 0
    %866 = vmatprep.subr.bf16.mxu0 0
    %867 = vmatpush1.bf16.xpose.msra.mxu0 0
    %868 = vmatprep.subr.bf16.mxu0 0
    %869 = vmatpush1.bf16.xpose.msra.mxu0 0
    %870 = vmatprep.subr.bf16.mxu0 0
    %871 = vmatpush1.bf16.xpose.msra.mxu0 0
    %872 = vmatprep.subr.bf16.mxu0 0
    %873 = vmatpush1.bf16.xpose.msra.mxu0 0
    %874 = vmatprep.subr.bf16.mxu0 0
    %875 = vmatpush1.bf16.xpose.msra.mxu0 0
    %876 = vmatprep.subr.bf16.mxu0 0
    %877 = vmatpush1.bf16.xpose.msra.mxu0 0
    %878 = vmatprep.subr.bf16.mxu0 0
    %879 = vmatpush1.bf16.xpose.msra.mxu0 0
    %880 = vmatprep.subr.bf16.mxu0 0
    %881 = vmatpush1.bf16.xpose.msra.mxu0 0
    %882 = vmatprep.subr.bf16.mxu0 0
    %883 = vmatpush1.bf16.xpose.msra.mxu0 0
    %884 = vmatprep.subr.bf16.mxu0 0
    %885 = vmatpush1.bf16.xpose.msra.mxu0 0
    %886 = vmatprep.subr.bf16.mxu0 0
    %887 = vmatpush1.bf16.xpose.msra.mxu0 0
    %888 = vmatprep.mubr.bf16.mxu0 0
    %889 = vmatmul.mubr.bf16.gmra.mrb[0].mxu0 %v851
    %v890 = vpop.f32.mrb[0].mxu0
    %v891 = vadd.f32 %v632, %v890
    %v892 = vpop.f32.mrb[0].mxu0
    %v893 = vpop.f32.mrb[0].mxu0
    %v894 = vpop.f32.mrb[0].mxu0
    %895 = vdwg.mxu0
    %897 = vrot.lane.b32.xlu0 %v625, 120
    %v898 = vpop.permute.xlu0 %897
    %900 = vrot.lane.b32.xlu0 %v627, 120
    %v901 = vpop.permute.xlu0 %900
    %v903 = vsel %vm634, %v898, 0
    %v906 = vsel %vm634, %v901, 0
    %908 = vmatprep.subr.bf16.mxu0 0
    %909 = vmatpush1.bf16.xpose.msra.mxu0 %v906
    %910 = vmatprep.subr.bf16.mxu0 0
    %911 = vmatpush1.bf16.xpose.msra.mxu0 0
    %912 = vmatprep.subr.bf16.mxu0 0
    %913 = vmatpush1.bf16.xpose.msra.mxu0 0
    %914 = vmatprep.subr.bf16.mxu0 0
    %915 = vmatpush1.bf16.xpose.msra.mxu0 0
    %916 = vmatprep.subr.bf16.mxu0 0
    %917 = vmatpush1.bf16.xpose.msra.mxu0 0
    %918 = vmatprep.subr.bf16.mxu0 0
    %919 = vmatpush1.bf16.xpose.msra.mxu0 0
    %920 = vmatprep.subr.bf16.mxu0 0
    %921 = vmatpush1.bf16.xpose.msra.mxu0 0
    %922 = vmatprep.subr.bf16.mxu0 0
    %923 = vmatpush1.bf16.xpose.msra.mxu0 0
    %924 = vmatprep.subr.bf16.mxu0 0
    %925 = vmatpush1.bf16.xpose.msra.mxu0 0
    %926 = vmatprep.subr.bf16.mxu0 0
    %927 = vmatpush1.bf16.xpose.msra.mxu0 0
    %928 = vmatprep.subr.bf16.mxu0 0
    %929 = vmatpush1.bf16.xpose.msra.mxu0 0
    %930 = vmatprep.subr.bf16.mxu0 0
    %931 = vmatpush1.bf16.xpose.msra.mxu0 0
    %932 = vmatprep.subr.bf16.mxu0 0
    %933 = vmatpush1.bf16.xpose.msra.mxu0 0
    %934 = vmatprep.subr.bf16.mxu0 0
    %935 = vmatpush1.bf16.xpose.msra.mxu0 0
    %936 = vmatprep.subr.bf16.mxu0 0
    %937 = vmatpush1.bf16.xpose.msra.mxu0 0
    %938 = vmatprep.subr.bf16.mxu0 0
    %939 = vmatpush1.bf16.xpose.msra.mxu0 0
    %940 = vmatprep.mubr.bf16.mxu0 0
    %941 = vmatmul.mubr.bf16.gmra.mrb[0].mxu0 %v903
    %v942 = vpop.f32.mrb[0].mxu0
    %v943 = vadd.f32 %v633, %v942
    %v944 = vpop.f32.mrb[0].mxu0
    %v945 = vpop.f32.mrb[0].mxu0
    %v946 = vpop.f32.mrb[0].mxu0
    %947 = vdwg.mxu0
    %v948 = vsel %vm634, %v891, -inf
    %949 = vmax.xlane.f32.xlu0 %v948
    %v950 = vpop.xlane.xlu0 %949
    %v951 = vsel %vm634, %v943, -inf
    %952 = vmax.xlane.f32.xlu0 %v951
    %v953 = vpop.xlane.xlu0 %952
    %v954 = vsub.f32 %v891, %v950
    %v955 = vsub.f32 %v943, %v953
    %v956 = vmul.f32 %v954, 1.442695
    %v957 = vpow.pop %v956
    %v958 = vmul.f32 %v955, 1.442695
    %v959 = vpow.pop %v958
    %v960 = vsel %vm634, %v957, 0.0
    %961 = vadd.xlane.f32.xlu0 %v960
    %v962 = vpop.xlane.xlu0 %961
    %v963 = vsel %vm634, %v959, 0.0
    %964 = vadd.xlane.f32.xlu0 %v963
    %v965 = vpop.xlane.xlu0 %964
    %v966 = vrcp.pop %v962
    %v967 = vrcp.pop %v965
    %v968 = vmul.f32 %v957, %v966
    %v969 = vmul.f32 %v959, %v967
    %v970 = vpack.c.bf16 %v968, %v968
    %v971 = vpack.c.bf16 %v969, %v969
    %973 = vrot.lane.b32.xlu0 %v628, 120
    %v974 = vpop.permute.xlu0 %973
    %v976 = vsel %vm634, %v970, 0
    %v979 = vsel %vm754, %v974, 0
    %981 = vmatprep.subr.bf16.mxu0 0
    %982 = vmatpush1.bf16.msra.mxu0 %v979
    %983 = vmatprep.subr.bf16.mxu0 0
    %984 = vmatpush1.bf16.msra.mxu0 0
    %985 = vmatprep.subr.bf16.mxu0 0
    %986 = vmatpush1.bf16.msra.mxu0 0
    %987 = vmatprep.subr.bf16.mxu0 0
    %988 = vmatpush1.bf16.msra.mxu0 0
    %989 = vmatprep.subr.bf16.mxu0 0
    %990 = vmatpush1.bf16.msra.mxu0 0
    %991 = vmatprep.subr.bf16.mxu0 0
    %992 = vmatpush1.bf16.msra.mxu0 0
    %993 = vmatprep.subr.bf16.mxu0 0
    %994 = vmatpush1.bf16.msra.mxu0 0
    %995 = vmatprep.subr.bf16.mxu0 0
    %996 = vmatpush1.bf16.msra.mxu0 0
    %997 = vmatprep.subr.bf16.mxu0 0
    %998 = vmatpush1.bf16.msra.mxu0 0
    %999 = vmatprep.subr.bf16.mxu0 0
    %1000 = vmatpush1.bf16.msra.mxu0 0
    %1001 = vmatprep.subr.bf16.mxu0 0
    %1002 = vmatpush1.bf16.msra.mxu0 0
    %1003 = vmatprep.subr.bf16.mxu0 0
    %1004 = vmatpush1.bf16.msra.mxu0 0
    %1005 = vmatprep.subr.bf16.mxu0 0
    %1006 = vmatpush1.bf16.msra.mxu0 0
    %1007 = vmatprep.subr.bf16.mxu0 0
    %1008 = vmatpush1.bf16.msra.mxu0 0
    %1009 = vmatprep.subr.bf16.mxu0 0
    %1010 = vmatpush1.bf16.msra.mxu0 0
    %1011 = vmatprep.subr.bf16.mxu0 0
    %1012 = vmatpush1.bf16.msra.mxu0 0
    %1013 = vmatprep.mubr.bf16.mxu0 0
    %1014 = vmatmul.mubr.bf16.gmra.mrb[0].mxu0 %v976
    %v1015 = vpop.f32.mrb[0].mxu0
    %v1016 = vadd.f32 0.0, %v1015
    %v1017 = vpop.f32.mrb[0].mxu0
    %v1018 = vpop.f32.mrb[0].mxu0
    %v1019 = vpop.f32.mrb[0].mxu0
    %1020 = vdwg.mxu0
    %1022 = vrot.lane.b32.xlu0 %v629, 120
    %v1023 = vpop.permute.xlu0 %1022
    %v1025 = vsel %vm634, %v971, 0
    %v1028 = vsel %vm754, %v1023, 0
    %1030 = vmatprep.subr.bf16.mxu0 0
    %1031 = vmatpush1.bf16.msra.mxu0 %v1028
    %1032 = vmatprep.subr.bf16.mxu0 0
    %1033 = vmatpush1.bf16.msra.mxu0 0
    %1034 = vmatprep.subr.bf16.mxu0 0
    %1035 = vmatpush1.bf16.msra.mxu0 0
    %1036 = vmatprep.subr.bf16.mxu0 0
    %1037 = vmatpush1.bf16.msra.mxu0 0
    %1038 = vmatprep.subr.bf16.mxu0 0
    %1039 = vmatpush1.bf16.msra.mxu0 0
    %1040 = vmatprep.subr.bf16.mxu0 0
    %1041 = vmatpush1.bf16.msra.mxu0 0
    %1042 = vmatprep.subr.bf16.mxu0 0
    %1043 = vmatpush1.bf16.msra.mxu0 0
    %1044 = vmatprep.subr.bf16.mxu0 0
    %1045 = vmatpush1.bf16.msra.mxu0 0
    %1046 = vmatprep.subr.bf16.mxu0 0
    %1047 = vmatpush1.bf16.msra.mxu0 0
    %1048 = vmatprep.subr.bf16.mxu0 0
    %1049 = vmatpush1.bf16.msra.mxu0 0
    %1050 = vmatprep.subr.bf16.mxu0 0
    %1051 = vmatpush1.bf16.msra.mxu0 0
    %1052 = vmatprep.subr.bf16.mxu0 0
    %1053 = vmatpush1.bf16.msra.mxu0 0
    %1054 = vmatprep.subr.bf16.mxu0 0
    %1055 = vmatpush1.bf16.msra.mxu0 0
    %1056 = vmatprep.subr.bf16.mxu0 0
    %1057 = vmatpush1.bf16.msra.mxu0 0
    %1058 = vmatprep.subr.bf16.mxu0 0
    %1059 = vmatpush1.bf16.msra.mxu0 0
    %1060 = vmatprep.subr.bf16.mxu0 0
    %1061 = vmatpush1.bf16.msra.mxu0 0
    %1062 = vmatprep.mubr.bf16.mxu0 0
    %1063 = vmatmul.mubr.bf16.gmra.mrb[0].mxu0 %v1025
    %v1064 = vpop.f32.mrb[0].mxu0
    %v1065 = vadd.f32 0.0, %v1064
    %v1066 = vpop.f32.mrb[0].mxu0
    %v1067 = vpop.f32.mrb[0].mxu0
    %v1068 = vpop.f32.mrb[0].mxu0
    %1069 = vdwg.mxu0
    %1070 = vrot.lane.b32.xlu0 %v624, 112
    %v1071 = vpop.permute.xlu0 %1070
    %1072 = vrot.lane.b32.xlu0 %v626, 112
    %v1073 = vpop.permute.xlu0 %1072
    %v1075 = vsel %vm634, %v1071, 0
    %v1078 = vsel %vm634, %v1073, 0
    %1080 = vmatprep.subr.bf16.mxu0 0
    %1081 = vmatpush1.bf16.xpose.msra.mxu0 %v1078
    %1082 = vmatprep.subr.bf16.mxu0 0
    %1083 = vmatpush1.bf16.xpose.msra.mxu0 0
    %1084 = vmatprep.subr.bf16.mxu0 0
    %1085 = vmatpush1.bf16.xpose.msra.mxu0 0
    %1086 = vmatprep.subr.bf16.mxu0 0
    %1087 = vmatpush1.bf16.xpose.msra.mxu0 0
    %1088 = vmatprep.subr.bf16.mxu0 0
    %1089 = vmatpush1.bf16.xpose.msra.mxu0 0
    %1090 = vmatprep.subr.bf16.mxu0 0
    %1091 = vmatpush1.bf16.xpose.msra.mxu0 0
    %1092 = vmatprep.subr.bf16.mxu0 0
    %1093 = vmatpush1.bf16.xpose.msra.mxu0 0
    %1094 = vmatprep.subr.bf16.mxu0 0
    %1095 = vmatpush1.bf16.xpose.msra.mxu0 0
    %1096 = vmatprep.subr.bf16.mxu0 0
    %1097 = vmatpush1.bf16.xpose.msra.mxu0 0
    %1098 = vmatprep.subr.bf16.mxu0 0
    %1099 = vmatpush1.bf16.xpose.msra.mxu0 0
    %1100 = vmatprep.subr.bf16.mxu0 0
    %1101 = vmatpush1.bf16.xpose.msra.mxu0 0
    %1102 = vmatprep.subr.bf16.mxu0 0
    %1103 = vmatpush1.bf16.xpose.msra.mxu0 0
    %1104 = vmatprep.subr.bf16.mxu0 0
    %1105 = vmatpush1.bf16.xpose.msra.mxu0 0
    %1106 = vmatprep.subr.bf16.mxu0 0
    %1107 = vmatpush1.bf16.xpose.msra.mxu0 0
    %1108 = vmatprep.subr.bf16.mxu0 0
    %1109 = vmatpush1.bf16.xpose.msra.mxu0 0
    %1110 = vmatprep.subr.bf16.mxu0 0
    %1111 = vmatpush1.bf16.xpose.msra.mxu0 0
    %1112 = vmatprep.mubr.bf16.mxu0 0
    %1113 = vmatmul.mubr.bf16.gmra.mrb[0].mxu0 %v1075
    %v1114 = vpop.f32.mrb[0].mxu0
    %v1115 = vadd.f32 %v632, %v1114
    %v1116 = vpop.f32.mrb[0].mxu0
    %v1117 = vpop.f32.mrb[0].mxu0
    %v1118 = vpop.f32.mrb[0].mxu0
    %1119 = vdwg.mxu0
    %1120 = vrot.lane.b32.xlu0 %v625, 112
    %v1121 = vpop.permute.xlu0 %1120
    %1122 = vrot.lane.b32.xlu0 %v627, 112
    %v1123 = vpop.permute.xlu0 %1122
    %v1125 = vsel %vm634, %v1121, 0
    %v1128 = vsel %vm634, %v1123, 0
    %1130 = vmatprep.subr.bf16.mxu0 0
    %1131 = vmatpush1.bf16.xpose.msra.mxu0 %v1128
    %1132 = vmatprep.subr.bf16.mxu0 0
    %1133 = vmatpush1.bf16.xpose.msra.mxu0 0
    %1134 = vmatprep.subr.bf16.mxu0 0
    %1135 = vmatpush1.bf16.xpose.msra.mxu0 0
    %1136 = vmatprep.subr.bf16.mxu0 0
    %1137 = vmatpush1.bf16.xpose.msra.mxu0 0
    %1138 = vmatprep.subr.bf16.mxu0 0
    %1139 = vmatpush1.bf16.xpose.msra.mxu0 0
    %1140 = vmatprep.subr.bf16.mxu0 0
    %1141 = vmatpush1.bf16.xpose.msra.mxu0 0
    %1142 = vmatprep.subr.bf16.mxu0 0
    %1143 = vmatpush1.bf16.xpose.msra.mxu0 0
    %1144 = vmatprep.subr.bf16.mxu0 0
    %1145 = vmatpush1.bf16.xpose.msra.mxu0 0
    %1146 = vmatprep.subr.bf16.mxu0 0
    %1147 = vmatpush1.bf16.xpose.msra.mxu0 0
    %1148 = vmatprep.subr.bf16.mxu0 0
    %1149 = vmatpush1.bf16.xpose.msra.mxu0 0
    %1150 = vmatprep.subr.bf16.mxu0 0
    %1151 = vmatpush1.bf16.xpose.msra.mxu0 0
    %1152 = vmatprep.subr.bf16.mxu0 0
    %1153 = vmatpush1.bf16.xpose.msra.mxu0 0
    %1154 = vmatprep.subr.bf16.mxu0 0
    %1155 = vmatpush1.bf16.xpose.msra.mxu0 0
    %1156 = vmatprep.subr.bf16.mxu0 0
    %1157 = vmatpush1.bf16.xpose.msra.mxu0 0
    %1158 = vmatprep.subr.bf16.mxu0 0
    %1159 = vmatpush1.bf16.xpose.msra.mxu0 0
    %1160 = vmatprep.subr.bf16.mxu0 0
    %1161 = vmatpush1.bf16.xpose.msra.mxu0 0
    %1162 = vmatprep.mubr.bf16.mxu0 0
    %1163 = vmatmul.mubr.bf16.gmra.mrb[0].mxu0 %v1125
    %v1164 = vpop.f32.mrb[0].mxu0
    %v1165 = vadd.f32 %v633, %v1164
    %v1166 = vpop.f32.mrb[0].mxu0
    %v1167 = vpop.f32.mrb[0].mxu0
    %v1168 = vpop.f32.mrb[0].mxu0
    %1169 = vdwg.mxu0
    %v1170 = vsel %vm634, %v1115, -inf
    %1171 = vmax.xlane.f32.xlu0 %v1170
    %v1172 = vpop.xlane.xlu0 %1171
    %v1173 = vsel %vm634, %v1165, -inf
    %1174 = vmax.xlane.f32.xlu0 %v1173
    %v1175 = vpop.xlane.xlu0 %1174
    %v1176 = vsub.f32 %v1115, %v1172
    %v1177 = vsub.f32 %v1165, %v1175
    %v1178 = vmul.f32 %v1176, 1.442695
    %v1179 = vpow.pop %v1178
    %v1180 = vmul.f32 %v1177, 1.442695
    %v1181 = vpow.pop %v1180
    %v1182 = vsel %vm634, %v1179, 0.0
    %1183 = vadd.xlane.f32.xlu0 %v1182
    %v1184 = vpop.xlane.xlu0 %1183
    %v1185 = vsel %vm634, %v1181, 0.0
    %1186 = vadd.xlane.f32.xlu0 %v1185
    %v1187 = vpop.xlane.xlu0 %1186
    %v1188 = vrcp.pop %v1184
    %v1189 = vrcp.pop %v1187
    %v1190 = vmul.f32 %v1179, %v1188
    %v1191 = vmul.f32 %v1181, %v1189
    %v1192 = vpack.c.bf16 %v1190, %v1190
    %v1193 = vpack.c.bf16 %v1191, %v1191
    %1194 = vrot.lane.b32.xlu0 %v628, 112
    %v1195 = vpop.permute.xlu0 %1194
    %v1197 = vsel %vm634, %v1192, 0
    %v1200 = vsel %vm754, %v1195, 0
    %1202 = vmatprep.subr.bf16.mxu0 0
    %1203 = vmatpush1.bf16.msra.mxu0 %v1200
    %1204 = vmatprep.subr.bf16.mxu0 0
    %1205 = vmatpush1.bf16.msra.mxu0 0
    %1206 = vmatprep.subr.bf16.mxu0 0
    %1207 = vmatpush1.bf16.msra.mxu0 0
    %1208 = vmatprep.subr.bf16.mxu0 0
    %1209 = vmatpush1.bf16.msra.mxu0 0
    %1210 = vmatprep.subr.bf16.mxu0 0
    %1211 = vmatpush1.bf16.msra.mxu0 0
    %1212 = vmatprep.subr.bf16.mxu0 0
    %1213 = vmatpush1.bf16.msra.mxu0 0
    %1214 = vmatprep.subr.bf16.mxu0 0
    %1215 = vmatpush1.bf16.msra.mxu0 0
    %1216 = vmatprep.subr.bf16.mxu0 0
    %1217 = vmatpush1.bf16.msra.mxu0 0
    %1218 = vmatprep.subr.bf16.mxu0 0
    %1219 = vmatpush1.bf16.msra.mxu0 0
    %1220 = vmatprep.subr.bf16.mxu0 0
    %1221 = vmatpush1.bf16.msra.mxu0 0
    %1222 = vmatprep.subr.bf16.mxu0 0
    %1223 = vmatpush1.bf16.msra.mxu0 0
    %1224 = vmatprep.subr.bf16.mxu0 0
    %1225 = vmatpush1.bf16.msra.mxu0 0
    %1226 = vmatprep.subr.bf16.mxu0 0
    %1227 = vmatpush1.bf16.msra.mxu0 0
    %1228 = vmatprep.subr.bf16.mxu0 0
    %1229 = vmatpush1.bf16.msra.mxu0 0
    %1230 = vmatprep.subr.bf16.mxu0 0
    %1231 = vmatpush1.bf16.msra.mxu0 0
    %1232 = vmatprep.subr.bf16.mxu0 0
    %1233 = vmatpush1.bf16.msra.mxu0 0
    %1234 = vmatprep.mubr.bf16.mxu0 0
    %1235 = vmatmul.mubr.bf16.gmra.mrb[0].mxu0 %v1197
    %v1236 = vpop.f32.mrb[0].mxu0
    %v1237 = vadd.f32 0.0, %v1236
    %v1238 = vpop.f32.mrb[0].mxu0
    %v1239 = vpop.f32.mrb[0].mxu0
    %v1240 = vpop.f32.mrb[0].mxu0
    %1241 = vdwg.mxu0
    %1242 = vrot.lane.b32.xlu0 %v629, 112
    %v1243 = vpop.permute.xlu0 %1242
    %v1245 = vsel %vm634, %v1193, 0
    %v1248 = vsel %vm754, %v1243, 0
    %1250 = vmatprep.subr.bf16.mxu0 0
    %1251 = vmatpush1.bf16.msra.mxu0 %v1248
    %1252 = vmatprep.subr.bf16.mxu0 0
    %1253 = vmatpush1.bf16.msra.mxu0 0
    %1254 = vmatprep.subr.bf16.mxu0 0
    %1255 = vmatpush1.bf16.msra.mxu0 0
    %1256 = vmatprep.subr.bf16.mxu0 0
    %1257 = vmatpush1.bf16.msra.mxu0 0
    %1258 = vmatprep.subr.bf16.mxu0 0
    %1259 = vmatpush1.bf16.msra.mxu0 0
    %1260 = vmatprep.subr.bf16.mxu0 0
    %1261 = vmatpush1.bf16.msra.mxu0 0
    %1262 = vmatprep.subr.bf16.mxu0 0
    %1263 = vmatpush1.bf16.msra.mxu0 0
    %1264 = vmatprep.subr.bf16.mxu0 0
    %1265 = vmatpush1.bf16.msra.mxu0 0
    %1266 = vmatprep.subr.bf16.mxu0 0
    %1267 = vmatpush1.bf16.msra.mxu0 0
    %1268 = vmatprep.subr.bf16.mxu0 0
    %1269 = vmatpush1.bf16.msra.mxu0 0
    %1270 = vmatprep.subr.bf16.mxu0 0
    %1271 = vmatpush1.bf16.msra.mxu0 0
    %1272 = vmatprep.subr.bf16.mxu0 0
    %1273 = vmatpush1.bf16.msra.mxu0 0
    %1274 = vmatprep.subr.bf16.mxu0 0
    %1275 = vmatpush1.bf16.msra.mxu0 0
    %1276 = vmatprep.subr.bf16.mxu0 0
    %1277 = vmatpush1.bf16.msra.mxu0 0
    %1278 = vmatprep.subr.bf16.mxu0 0
    %1279 = vmatpush1.bf16.msra.mxu0 0
    %1280 = vmatprep.subr.bf16.mxu0 0
    %1281 = vmatpush1.bf16.msra.mxu0 0
    %1282 = vmatprep.mubr.bf16.mxu0 0
    %1283 = vmatmul.mubr.bf16.gmra.mrb[0].mxu0 %v1245
    %v1284 = vpop.f32.mrb[0].mxu0
    %v1285 = vadd.f32 0.0, %v1284
    %v1286 = vpop.f32.mrb[0].mxu0
    %v1287 = vpop.f32.mrb[0].mxu0
    %v1288 = vpop.f32.mrb[0].mxu0
    %1289 = vdwg.mxu0
    %1290 = vrot.lane.b32.xlu0 %v624, 104
    %v1291 = vpop.permute.xlu0 %1290
    %1292 = vrot.lane.b32.xlu0 %v626, 104
    %v1293 = vpop.permute.xlu0 %1292
    %v1295 = vsel %vm634, %v1291, 0
    %v1298 = vsel %vm634, %v1293, 0
    %1300 = vmatprep.subr.bf16.mxu0 0
    %1301 = vmatpush1.bf16.xpose.msra.mxu0 %v1298
    %1302 = vmatprep.subr.bf16.mxu0 0
    %1303 = vmatpush1.bf16.xpose.msra.mxu0 0
    %1304 = vmatprep.subr.bf16.mxu0 0
    %1305 = vmatpush1.bf16.xpose.msra.mxu0 0
    %1306 = vmatprep.subr.bf16.mxu0 0
    %1307 = vmatpush1.bf16.xpose.msra.mxu0 0
    %1308 = vmatprep.subr.bf16.mxu0 0
    %1309 = vmatpush1.bf16.xpose.msra.mxu0 0
    %1310 = vmatprep.subr.bf16.mxu0 0
    %1311 = vmatpush1.bf16.xpose.msra.mxu0 0
    %1312 = vmatprep.subr.bf16.mxu0 0
    %1313 = vmatpush1.bf16.xpose.msra.mxu0 0
    %1314 = vmatprep.subr.bf16.mxu0 0
    %1315 = vmatpush1.bf16.xpose.msra.mxu0 0
    %1316 = vmatprep.subr.bf16.mxu0 0
    %1317 = vmatpush1.bf16.xpose.msra.mxu0 0
    %1318 = vmatprep.subr.bf16.mxu0 0
    %1319 = vmatpush1.bf16.xpose.msra.mxu0 0
    %1320 = vmatprep.subr.bf16.mxu0 0
    %1321 = vmatpush1.bf16.xpose.msra.mxu0 0
    %1322 = vmatprep.subr.bf16.mxu0 0
    %1323 = vmatpush1.bf16.xpose.msra.mxu0 0
    %1324 = vmatprep.subr.bf16.mxu0 0
    %1325 = vmatpush1.bf16.xpose.msra.mxu0 0
    %1326 = vmatprep.subr.bf16.mxu0 0
    %1327 = vmatpush1.bf16.xpose.msra.mxu0 0
    %1328 = vmatprep.subr.bf16.mxu0 0
    %1329 = vmatpush1.bf16.xpose.msra.mxu0 0
    %1330 = vmatprep.subr.bf16.mxu0 0
    %1331 = vmatpush1.bf16.xpose.msra.mxu0 0
    %1332 = vmatprep.mubr.bf16.mxu0 0
    %1333 = vmatmul.mubr.bf16.gmra.mrb[0].mxu0 %v1295
    %v1334 = vpop.f32.mrb[0].mxu0
    %v1335 = vadd.f32 %v632, %v1334
    %v1336 = vpop.f32.mrb[0].mxu0
    %v1337 = vpop.f32.mrb[0].mxu0
    %v1338 = vpop.f32.mrb[0].mxu0
    %1339 = vdwg.mxu0
    %1340 = vrot.lane.b32.xlu0 %v625, 104
    %v1341 = vpop.permute.xlu0 %1340
    %1342 = vrot.lane.b32.xlu0 %v627, 104
    %v1343 = vpop.permute.xlu0 %1342
    %v1345 = vsel %vm634, %v1341, 0
    %v1348 = vsel %vm634, %v1343, 0
    %1350 = vmatprep.subr.bf16.mxu0 0
    %1351 = vmatpush1.bf16.xpose.msra.mxu0 %v1348
    %1352 = vmatprep.subr.bf16.mxu0 0
    %1353 = vmatpush1.bf16.xpose.msra.mxu0 0
    %1354 = vmatprep.subr.bf16.mxu0 0
    %1355 = vmatpush1.bf16.xpose.msra.mxu0 0
    %1356 = vmatprep.subr.bf16.mxu0 0
    %1357 = vmatpush1.bf16.xpose.msra.mxu0 0
    %1358 = vmatprep.subr.bf16.mxu0 0
    %1359 = vmatpush1.bf16.xpose.msra.mxu0 0
    %1360 = vmatprep.subr.bf16.mxu0 0
    %1361 = vmatpush1.bf16.xpose.msra.mxu0 0
    %1362 = vmatprep.subr.bf16.mxu0 0
    %1363 = vmatpush1.bf16.xpose.msra.mxu0 0
    %1364 = vmatprep.subr.bf16.mxu0 0
    %1365 = vmatpush1.bf16.xpose.msra.mxu0 0
    %1366 = vmatprep.subr.bf16.mxu0 0
    %1367 = vmatpush1.bf16.xpose.msra.mxu0 0
    %1368 = vmatprep.subr.bf16.mxu0 0
    %1369 = vmatpush1.bf16.xpose.msra.mxu0 0
    %1370 = vmatprep.subr.bf16.mxu0 0
    %1371 = vmatpush1.bf16.xpose.msra.mxu0 0
    %1372 = vmatprep.subr.bf16.mxu0 0
    %1373 = vmatpush1.bf16.xpose.msra.mxu0 0
    %1374 = vmatprep.subr.bf16.mxu0 0
    %1375 = vmatpush1.bf16.xpose.msra.mxu0 0
    %1376 = vmatprep.subr.bf16.mxu0 0
    %1377 = vmatpush1.bf16.xpose.msra.mxu0 0
    %1378 = vmatprep.subr.bf16.mxu0 0
    %1379 = vmatpush1.bf16.xpose.msra.mxu0 0
    %1380 = vmatprep.subr.bf16.mxu0 0
    %1381 = vmatpush1.bf16.xpose.msra.mxu0 0
    %1382 = vmatprep.mubr.bf16.mxu0 0
    %1383 = vmatmul.mubr.bf16.gmra.mrb[0].mxu0 %v1345
    %v1384 = vpop.f32.mrb[0].mxu0
    %v1385 = vadd.f32 %v633, %v1384
    %v1386 = vpop.f32.mrb[0].mxu0
    %v1387 = vpop.f32.mrb[0].mxu0
    %v1388 = vpop.f32.mrb[0].mxu0
    %1389 = vdwg.mxu0
    %v1390 = vsel %vm634, %v1335, -inf
    %1391 = vmax.xlane.f32.xlu0 %v1390
    %v1392 = vpop.xlane.xlu0 %1391
    %v1393 = vsel %vm634, %v1385, -inf
    %1394 = vmax.xlane.f32.xlu0 %v1393
    %v1395 = vpop.xlane.xlu0 %1394
    %v1396 = vsub.f32 %v1335, %v1392
    %v1397 = vsub.f32 %v1385, %v1395
    %v1398 = vmul.f32 %v1396, 1.442695
    %v1399 = vpow.pop %v1398
    %v1400 = vmul.f32 %v1397, 1.442695
    %v1401 = vpow.pop %v1400
    %v1402 = vsel %vm634, %v1399, 0.0
    %1403 = vadd.xlane.f32.xlu0 %v1402
    %v1404 = vpop.xlane.xlu0 %1403
    %v1405 = vsel %vm634, %v1401, 0.0
    %1406 = vadd.xlane.f32.xlu0 %v1405
    %v1407 = vpop.xlane.xlu0 %1406
    %v1408 = vrcp.pop %v1404
    %v1409 = vrcp.pop %v1407
    %v1410 = vmul.f32 %v1399, %v1408
    %v1411 = vmul.f32 %v1401, %v1409
    %v1412 = vpack.c.bf16 %v1410, %v1410
    %v1413 = vpack.c.bf16 %v1411, %v1411
    %1414 = vrot.lane.b32.xlu0 %v628, 104
    %v1415 = vpop.permute.xlu0 %1414
    %v1417 = vsel %vm634, %v1412, 0
    %v1420 = vsel %vm754, %v1415, 0
    %1422 = vmatprep.subr.bf16.mxu0 0
    %1423 = vmatpush1.bf16.msra.mxu0 %v1420
    %1424 = vmatprep.subr.bf16.mxu0 0
    %1425 = vmatpush1.bf16.msra.mxu0 0
    %1426 = vmatprep.subr.bf16.mxu0 0
    %1427 = vmatpush1.bf16.msra.mxu0 0
    %1428 = vmatprep.subr.bf16.mxu0 0
    %1429 = vmatpush1.bf16.msra.mxu0 0
    %1430 = vmatprep.subr.bf16.mxu0 0
    %1431 = vmatpush1.bf16.msra.mxu0 0
    %1432 = vmatprep.subr.bf16.mxu0 0
    %1433 = vmatpush1.bf16.msra.mxu0 0
    %1434 = vmatprep.subr.bf16.mxu0 0
    %1435 = vmatpush1.bf16.msra.mxu0 0
    %1436 = vmatprep.subr.bf16.mxu0 0
    %1437 = vmatpush1.bf16.msra.mxu0 0
    %1438 = vmatprep.subr.bf16.mxu0 0
    %1439 = vmatpush1.bf16.msra.mxu0 0
    %1440 = vmatprep.subr.bf16.mxu0 0
    %1441 = vmatpush1.bf16.msra.mxu0 0
    %1442 = vmatprep.subr.bf16.mxu0 0
    %1443 = vmatpush1.bf16.msra.mxu0 0
    %1444 = vmatprep.subr.bf16.mxu0 0
    %1445 = vmatpush1.bf16.msra.mxu0 0
    %1446 = vmatprep.subr.bf16.mxu0 0
    %1447 = vmatpush1.bf16.msra.mxu0 0
    %1448 = vmatprep.subr.bf16.mxu0 0
    %1449 = vmatpush1.bf16.msra.mxu0 0
    %1450 = vmatprep.subr.bf16.mxu0 0
    %1451 = vmatpush1.bf16.msra.mxu0 0
    %1452 = vmatprep.subr.bf16.mxu0 0
    %1453 = vmatpush1.bf16.msra.mxu0 0
    %1454 = vmatprep.mubr.bf16.mxu0 0
    %1455 = vmatmul.mubr.bf16.gmra.mrb[0].mxu0 %v1417
    %v1456 = vpop.f32.mrb[0].mxu0
    %v1457 = vadd.f32 0.0, %v1456
    %v1458 = vpop.f32.mrb[0].mxu0
    %v1459 = vpop.f32.mrb[0].mxu0
    %v1460 = vpop.f32.mrb[0].mxu0
    %1461 = vdwg.mxu0
    %1462 = vrot.lane.b32.xlu0 %v629, 104
    %v1463 = vpop.permute.xlu0 %1462
    %v1465 = vsel %vm634, %v1413, 0
    %v1468 = vsel %vm754, %v1463, 0
    %1470 = vmatprep.subr.bf16.mxu0 0
    %1471 = vmatpush1.bf16.msra.mxu0 %v1468
    %1472 = vmatprep.subr.bf16.mxu0 0
    %1473 = vmatpush1.bf16.msra.mxu0 0
    %1474 = vmatprep.subr.bf16.mxu0 0
    %1475 = vmatpush1.bf16.msra.mxu0 0
    %1476 = vmatprep.subr.bf16.mxu0 0
    %1477 = vmatpush1.bf16.msra.mxu0 0
    %1478 = vmatprep.subr.bf16.mxu0 0
    %1479 = vmatpush1.bf16.msra.mxu0 0
    %1480 = vmatprep.subr.bf16.mxu0 0
    %1481 = vmatpush1.bf16.msra.mxu0 0
    %1482 = vmatprep.subr.bf16.mxu0 0
    %1483 = vmatpush1.bf16.msra.mxu0 0
    %1484 = vmatprep.subr.bf16.mxu0 0
    %1485 = vmatpush1.bf16.msra.mxu0 0
    %1486 = vmatprep.subr.bf16.mxu0 0
    %1487 = vmatpush1.bf16.msra.mxu0 0
    %1488 = vmatprep.subr.bf16.mxu0 0
    %1489 = vmatpush1.bf16.msra.mxu0 0
    %1490 = vmatprep.subr.bf16.mxu0 0
    %1491 = vmatpush1.bf16.msra.mxu0 0
    %1492 = vmatprep.subr.bf16.mxu0 0
    %1493 = vmatpush1.bf16.msra.mxu0 0
    %1494 = vmatprep.subr.bf16.mxu0 0
    %1495 = vmatpush1.bf16.msra.mxu0 0
    %1496 = vmatprep.subr.bf16.mxu0 0
    %1497 = vmatpush1.bf16.msra.mxu0 0
    %1498 = vmatprep.subr.bf16.mxu0 0
    %1499 = vmatpush1.bf16.msra.mxu0 0
    %1500 = vmatprep.subr.bf16.mxu0 0
    %1501 = vmatpush1.bf16.msra.mxu0 0
    %1502 = vmatprep.mubr.bf16.mxu0 0
    %1503 = vmatmul.mubr.bf16.gmra.mrb[0].mxu0 %v1465
    %v1504 = vpop.f32.mrb[0].mxu0
    %v1505 = vadd.f32 0.0, %v1504
    %v1506 = vpop.f32.mrb[0].mxu0
    %v1507 = vpop.f32.mrb[0].mxu0
    %v1508 = vpop.f32.mrb[0].mxu0
    %1509 = vdwg.mxu0
    %1512 = vrot.lane.b32.xlu0 %v1016, 8
    %v1513 = vpop.permute.xlu0 %1512
    %1514 = vrot.lane.b32.xlu0 %v1065, 8
    %v1515 = vpop.permute.xlu0 %1514
    %1520 = vrot.lane.b32.xlu0 %v1237, 16
    %v1521 = vpop.permute.xlu0 %1520
    %1522 = vrot.lane.b32.xlu0 %v1285, 16
    %v1523 = vpop.permute.xlu0 %1522
    %1528 = vrot.lane.b32.xlu0 %v1457, 24
    %v1529 = vpop.permute.xlu0 %1528
    %1530 = vrot.lane.b32.xlu0 %v1505, 24
    %v1531 = vpop.permute.xlu0 %1530
    %v1534 = vsel %vm634, %v793, %v1513
    %v1535 = vsel %vm634, %v839, %v1515
    %v1536 = vsel %vm335, %v1534, %v1521
    %v1537 = vsel %vm335, %v1535, %v1523
    %vm1538 = vcmask 195584
    %v1539 = vsel %vm1538, %v1536, %v1529
    %v1540 = vsel %vm1538, %v1537, %v1531
    %v1541 = vadd.f32 %v374, %v1539
    %v1542 = vadd.f32 %v377, %v1540
    %v1543 = vld [vmem:[#allocation21] sm:$0x1]
    %v1544 = vld [vmem:[#allocation22] sm:$0x1]
    %v1545 = vsel %vm382, %v1541, 0.0
    %1546 = vadd.xlane.f32.xlu0 %v1545
    %v1547 = vpop.xlane.xlu0 %1546
    %v1548 = vsel %vm382, %v1542, 0.0
    %1549 = vadd.xlane.f32.xlu0 %v1548
    %v1550 = vpop.xlane.xlu0 %1549
    %v1551 = vmul.f32 %v1547, %v389
    %v1552 = vmul.f32 %v1550, %v389
    %v1553 = vsub.f32 %v1541, %v1551
    %v1554 = vsub.f32 %v1542, %v1552
    %v1555 = vmul.f32 %v1553, %v1553
    %v1556 = vmul.f32 %v1554, %v1554
    %v1557 = vsel %vm382, %v1555, 0.0
    %1558 = vadd.xlane.f32.xlu0 %v1557
    %v1559 = vpop.xlane.xlu0 %1558
    %v1560 = vsel %vm382, %v1556, 0.0
    %1561 = vadd.xlane.f32.xlu0 %v1560
    %v1562 = vpop.xlane.xlu0 %1561
    %v1563 = vmul.f32 %v1559, %v389
    %v1564 = vmul.f32 %v1562, %v389
    %v1565 = vadd.f32 %v1563, 1e-05
    %v1566 = vadd.f32 %v1564, 1e-05
    %v1567 = vrsqrt.pop %v1565
    %v1568 = vrsqrt.pop %v1566
    %v1569 = vmul.f32 %v1553, %v1567
    %v1570 = vmul.f32 %v1554, %v1568
    %v1572 = vlaneseq
    %v1573 = vshrl.u32 %v1572, 7
    %v1574 = vsub.s32 0, %v1573
    %v1575 = vrot.slane %v1543, %v1574
    %v1577 = vmul.f32 %v1569, %v1575
    %v1578 = vmul.f32 %v1570, %v1575
    %v1580 = vlaneseq
    %v1581 = vshrl.u32 %v1580, 7
    %v1582 = vsub.s32 0, %v1581
    %v1583 = vrot.slane %v1544, %v1582
    %v1585 = vadd.f32 %v1577, %v1583
    %v1586 = vadd.f32 %v1578, %v1583
    %v1587 = vld [vmem:[#allocation24] sm:$0xf]
    %v1588 = vld [vmem:[#allocation24 + $0x4] sm:$0xf]
    %v1589 = vld [vmem:[#allocation24 + $0x8] sm:$0xf]
    %v1590 = vld [vmem:[#allocation24 + $0xc] sm:$0xf]
    %v1591 = vld [vmem:[#allocation25] sm:$0x1]
    %v1592 = vpack.c.bf16 %v1586, %v1585
    %v1594 = vlaneseq
    %v1595 = vshrl.u32 %v1594, 7
    %v1596 = vsub.s32 0, %v1595
    %v1597 = vrot.slane %v1591, %v1596
    %v1603 = vunpack.c.l.b16 %v1587
    %v1604 = vunpack.c.l.b16 %v1588
    %v1605 = vunpack.c.l.b16 %v1589
    %v1606 = vunpack.c.l.b16 %v1590
    %v1607 = vpack.c.b16 %v1604, %v1603
    %v1608 = vpack.c.b16 %v1606, %v1605
    %v1612 = vsel %vm382, %v1592, 0
    %1614 = vmatprep.subr.bf16.mxu0 0
    %1615 = vmatpush1.bf16.msra.mxu0 %v1607
    %1616 = vmatprep.subr.bf16.mxu0 0
    %1617 = vmatpush1.bf16.msra.mxu0 %v1608
    %1618 = vmatprep.subr.bf16.mxu0 0
    %1619 = vmatpush1.bf16.msra.mxu0 0
    %1620 = vmatprep.subr.bf16.mxu0 0
    %1621 = vmatpush1.bf16.msra.mxu0 0
    %1622 = vmatprep.subr.bf16.mxu0 0
    %1623 = vmatpush1.bf16.msra.mxu0 0
    %1624 = vmatprep.subr.bf16.mxu0 0
    %1625 = vmatpush1.bf16.msra.mxu0 0
    %1626 = vmatprep.subr.bf16.mxu0 0
    %1627 = vmatpush1.bf16.msra.mxu0 0
    %1628 = vmatprep.subr.bf16.mxu0 0
    %1629 = vmatpush1.bf16.msra.mxu0 0
    %1630 = vmatprep.subr.bf16.mxu0 0
    %1631 = vmatpush1.bf16.msra.mxu0 0
    %1632 = vmatprep.subr.bf16.mxu0 0
    %1633 = vmatpush1.bf16.msra.mxu0 0
    %1634 = vmatprep.subr.bf16.mxu0 0
    %1635 = vmatpush1.bf16.msra.mxu0 0
    %1636 = vmatprep.subr.bf16.mxu0 0
    %1637 = vmatpush1.bf16.msra.mxu0 0
    %1638 = vmatprep.subr.bf16.mxu0 0
    %1639 = vmatpush1.bf16.msra.mxu0 0
    %1640 = vmatprep.subr.bf16.mxu0 0
    %1641 = vmatpush1.bf16.msra.mxu0 0
    %1642 = vmatprep.subr.bf16.mxu0 0
    %1643 = vmatpush1.bf16.msra.mxu0 0
    %1644 = vmatprep.subr.bf16.mxu0 0
    %1645 = vmatpush1.bf16.msra.mxu0 0
    %1646 = vmatprep.mubr.bf16.mxu0 0
    %1647 = vmatmul.mubr.bf16.gmra.mrb[0].mxu0 %v1612
    %v1648 = vpop.f32.mrb[0].mxu0
    %v1649 = vadd.f32 %v1597, %v1648
    %v1650 = vpop.f32.mrb[0].mxu0
    %v1651 = vpop.f32.mrb[0].mxu0
    %v1652 = vadd.f32 %v1597, %v1651
    %v1653 = vpop.f32.mrb[0].mxu0
    %1654 = vdwg.mxu0
    %v1655 = vmax.f32 %v1649, 0.0
    %v1656 = vmax.f32 %v1652, 0.0
    %v1657 = vld [vmem:[%s17] sm:$0xf]
    %v1658 = vld [vmem:[%s17 + $0x4] sm:$0xf]
    %v1659 = vld [vmem:[%s17 + $0x8] sm:$0xf]
    %v1660 = vld [vmem:[%s17 + $0xc] sm:$0xf]
    %v1661 = vld [vmem:[%s17 + $0x10] sm:$0xf]
    %v1662 = vld [vmem:[%s17 + $0x14] sm:$0xf]
    %v1663 = vld [vmem:[%s17 + $0x18] sm:$0xf]
    %v1664 = vld [vmem:[%s17 + $0x1c] sm:$0xf]
    %v1665 = vld [vmem:[#allocation27] sm:$0x1]
    %v1666 = vpack.c.bf16 %v1656, %v1655
    %v1668 = vlaneseq
    %v1669 = vshrl.u32 %v1668, 7
    %v1670 = vsub.s32 0, %v1669
    %v1671 = vrot.slane %v1665, %v1670
    %v1681 = vunpack.c.l.b16 %v1657
    %v1682 = vunpack.c.l.b16 %v1658
    %v1683 = vunpack.c.l.b16 %v1659
    %v1684 = vunpack.c.l.b16 %v1660
    %v1685 = vunpack.c.l.b16 %v1661
    %v1686 = vunpack.c.l.b16 %v1662
    %v1687 = vunpack.c.l.b16 %v1663
    %v1688 = vunpack.c.l.b16 %v1664
    %v1689 = vpack.c.b16 %v1682, %v1681
    %v1690 = vpack.c.b16 %v1684, %v1683
    %v1691 = vpack.c.b16 %v1686, %v1685
    %v1692 = vpack.c.b16 %v1688, %v1687
    %vm1697 = vcmask 523264
    %v1699 = vsel %vm1697, %v1666, 0
    %1701 = vmatprep.subr.bf16.mxu0 0
    %1702 = vmatpush1.bf16.msra.mxu0 %v1689
    %1703 = vmatprep.subr.bf16.mxu0 0
    %1704 = vmatpush1.bf16.msra.mxu0 %v1690
    %1705 = vmatprep.subr.bf16.mxu0 0
    %1706 = vmatpush1.bf16.msra.mxu0 %v1691
    %1707 = vmatprep.subr.bf16.mxu0 0
    %1708 = vmatpush1.bf16.msra.mxu0 %v1692
    %1709 = vmatprep.subr.bf16.mxu0 0
    %1710 = vmatpush1.bf16.msra.mxu0 0
    %1711 = vmatprep.subr.bf16.mxu0 0
    %1712 = vmatpush1.bf16.msra.mxu0 0
    %1713 = vmatprep.subr.bf16.mxu0 0
    %1714 = vmatpush1.bf16.msra.mxu0 0
    %1715 = vmatprep.subr.bf16.mxu0 0
    %1716 = vmatpush1.bf16.msra.mxu0 0
    %1717 = vmatprep.subr.bf16.mxu0 0
    %1718 = vmatpush1.bf16.msra.mxu0 0
    %1719 = vmatprep.subr.bf16.mxu0 0
    %1720 = vmatpush1.bf16.msra.mxu0 0
    %1721 = vmatprep.subr.bf16.mxu0 0
    %1722 = vmatpush1.bf16.msra.mxu0 0
    %1723 = vmatprep.subr.bf16.mxu0 0
    %1724 = vmatpush1.bf16.msra.mxu0 0
    %1725 = vmatprep.subr.bf16.mxu0 0
    %1726 = vmatpush1.bf16.msra.mxu0 0
    %1727 = vmatprep.subr.bf16.mxu0 0
    %1728 = vmatpush1.bf16.msra.mxu0 0
    %1729 = vmatprep.subr.bf16.mxu0 0
    %1730 = vmatpush1.bf16.msra.mxu0 0
    %1731 = vmatprep.subr.bf16.mxu0 0
    %1732 = vmatpush1.bf16.msra.mxu0 0
    %1733 = vmatprep.mubr.bf16.mxu0 0
    %1734 = vmatmul.mubr.bf16.gmra.mrb[0].mxu0 %v1699
    %v1735 = vpop.f32.mrb[0].mxu0
    %v1736 = vadd.f32 %v1671, %v1735
    %v1737 = vpop.f32.mrb[0].mxu0
    %v1738 = vpop.f32.mrb[0].mxu0
    %v1739 = vadd.f32 %v1671, %v1738
    %v1740 = vpop.f32.mrb[0].mxu0
    %1741 = vdwg.mxu0
    %v1742 = vadd.f32 %v1541, %v1736
    %v1743 = vadd.f32 %v1542, %v1739
    %s1744 = scalar_lea.vmem [#allocation10], 1
    %v1745 = vld [vmem:[%s1744] sm:$0x1]
    %s1746 = scalar_lea.vmem [#allocation12], 1
    %v1747 = vld [vmem:[%s1746] sm:$0x1]
    %v1748 = vsel %vm382, %v1742, 0.0
    %1749 = vadd.xlane.f32.xlu0 %v1748
    %v1750 = vpop.xlane.xlu0 %1749
    %v1751 = vsel %vm382, %v1743, 0.0
    %1752 = vadd.xlane.f32.xlu0 %v1751
    %v1753 = vpop.xlane.xlu0 %1752
    %v1754 = vmul.f32 %v1750, %v389
    %v1755 = vmul.f32 %v1753, %v389
    %v1756 = vsub.f32 %v1742, %v1754
    %v1757 = vsub.f32 %v1743, %v1755
    %v1758 = vmul.f32 %v1756, %v1756
    %v1759 = vmul.f32 %v1757, %v1757
    %v1760 = vsel %vm382, %v1758, 0.0
    %1761 = vadd.xlane.f32.xlu0 %v1760
    %v1762 = vpop.xlane.xlu0 %1761
    %v1763 = vsel %vm382, %v1759, 0.0
    %1764 = vadd.xlane.f32.xlu0 %v1763
    %v1765 = vpop.xlane.xlu0 %1764
    %v1766 = vmul.f32 %v1762, %v389
    %v1767 = vmul.f32 %v1765, %v389
    %v1768 = vadd.f32 %v1766, 1e-05
    %v1769 = vadd.f32 %v1767, 1e-05
    %v1770 = vrsqrt.pop %v1768
    %v1771 = vrsqrt.pop %v1769
    %v1772 = vmul.f32 %v1756, %v1770
    %v1773 = vmul.f32 %v1757, %v1771
    %v1775 = vlaneseq
    %v1776 = vshrl.u32 %v1775, 7
    %v1777 = vsub.s32 0, %v1776
    %v1778 = vrot.slane %v1745, %v1777
    %v1780 = vmul.f32 %v1772, %v1778
    %v1781 = vmul.f32 %v1773, %v1778
    %v1783 = vlaneseq
    %v1784 = vshrl.u32 %v1783, 7
    %v1785 = vsub.s32 0, %v1784
    %v1786 = vrot.slane %v1747, %v1785
    %v1788 = vadd.f32 %v1780, %v1786
    %v1789 = vadd.f32 %v1781, %v1786
    %s1790 = scalar_lea.vmem %s7, 16
    %v1791 = vld [vmem:[%s1790] sm:$0xf]
    %v1792 = vld [vmem:[%s1790 + $0x4] sm:$0xf]
    %v1793 = vld [vmem:[%s1790 + $0x8] sm:$0xf]
    %v1794 = vld [vmem:[%s1790 + $0xc] sm:$0xf]
    %s1795 = scalar_lea.vmem [#allocation13], 1
    %v1796 = vld [vmem:[%s1795] sm:$0x1]
    %v1797 = vpack.c.bf16 %v1789, %v1788
    %v1799 = vlaneseq
    %v1800 = vshrl.u32 %v1799, 7
    %v1801 = vsub.s32 0, %v1800
    %v1802 = vrot.slane %v1796, %v1801
    %v1808 = vunpack.c.l.b16 %v1791
    %v1809 = vunpack.c.l.b16 %v1792
    %v1810 = vunpack.c.l.b16 %v1793
    %v1811 = vunpack.c.l.b16 %v1794
    %v1812 = vpack.c.b16 %v1809, %v1808
    %v1813 = vpack.c.b16 %v1811, %v1810
    %v1817 = vsel %vm382, %v1797, 0
    %1819 = vmatprep.subr.bf16.mxu0 0
    %1820 = vmatpush1.bf16.msra.mxu0 %v1812
    %1821 = vmatprep.subr.bf16.mxu0 0
    %1822 = vmatpush1.bf16.msra.mxu0 %v1813
    %1823 = vmatprep.subr.bf16.mxu0 0
    %1824 = vmatpush1.bf16.msra.mxu0 0
    %1825 = vmatprep.subr.bf16.mxu0 0
    %1826 = vmatpush1.bf16.msra.mxu0 0
    %1827 = vmatprep.subr.bf16.mxu0 0
    %1828 = vmatpush1.bf16.msra.mxu0 0
    %1829 = vmatprep.subr.bf16.mxu0 0
    %1830 = vmatpush1.bf16.msra.mxu0 0
    %1831 = vmatprep.subr.bf16.mxu0 0
    %1832 = vmatpush1.bf16.msra.mxu0 0
    %1833 = vmatprep.subr.bf16.mxu0 0
    %1834 = vmatpush1.bf16.msra.mxu0 0
    %1835 = vmatprep.subr.bf16.mxu0 0
    %1836 = vmatpush1.bf16.msra.mxu0 0
    %1837 = vmatprep.subr.bf16.mxu0 0
    %1838 = vmatpush1.bf16.msra.mxu0 0
    %1839 = vmatprep.subr.bf16.mxu0 0
    %1840 = vmatpush1.bf16.msra.mxu0 0
    %1841 = vmatprep.subr.bf16.mxu0 0
    %1842 = vmatpush1.bf16.msra.mxu0 0
    %1843 = vmatprep.subr.bf16.mxu0 0
    %1844 = vmatpush1.bf16.msra.mxu0 0
    %1845 = vmatprep.subr.bf16.mxu0 0
    %1846 = vmatpush1.bf16.msra.mxu0 0
    %1847 = vmatprep.subr.bf16.mxu0 0
    %1848 = vmatpush1.bf16.msra.mxu0 0
    %1849 = vmatprep.subr.bf16.mxu0 0
    %1850 = vmatpush1.bf16.msra.mxu0 0
    %1851 = vmatprep.mubr.bf16.mxu0 0
    %1852 = vmatmul.mubr.bf16.gmra.mrb[0].mxu0 %v1817
    %v1853 = vpop.f32.mrb[0].mxu0
    %v1854 = vadd.f32 %v1802, %v1853
    %v1855 = vpop.f32.mrb[0].mxu0
    %v1856 = vpop.f32.mrb[0].mxu0
    %v1857 = vadd.f32 %v1802, %v1856
    %v1858 = vpop.f32.mrb[0].mxu0
    %1859 = vdwg.mxu0
    %v1860 = vmul.f32 %v1854, 0.35355338
    %v1861 = vmul.f32 %v1857, 0.35355338
    %s1862 = scalar_lea.vmem [#allocation15], 16
    %v1863 = vld [vmem:[%s1862] sm:$0xf]
    %v1864 = vld [vmem:[%s1862 + $0x4] sm:$0xf]
    %v1865 = vld [vmem:[%s1862 + $0x8] sm:$0xf]
    %v1866 = vld [vmem:[%s1862 + $0xc] sm:$0xf]
    %s1867 = scalar_lea.vmem [#allocation16], 1
    %v1868 = vld [vmem:[%s1867] sm:$0x1]
    %v1870 = vlaneseq
    %v1871 = vshrl.u32 %v1870, 7
    %v1872 = vsub.s32 0, %v1871
    %v1873 = vrot.slane %v1868, %v1872
    %v1879 = vunpack.c.l.b16 %v1863
    %v1880 = vunpack.c.l.b16 %v1864
    %v1881 = vunpack.c.l.b16 %v1865
    %v1882 = vunpack.c.l.b16 %v1866
    %v1883 = vpack.c.b16 %v1880, %v1879
    %v1884 = vpack.c.b16 %v1882, %v1881
    %1887 = vmatprep.subr.bf16.mxu0 0
    %1888 = vmatpush1.bf16.msra.mxu0 %v1883
    %1889 = vmatprep.subr.bf16.mxu0 0
    %1890 = vmatpush1.bf16.msra.mxu0 %v1884
    %1891 = vmatprep.subr.bf16.mxu0 0
    %1892 = vmatpush1.bf16.msra.mxu0 0
    %1893 = vmatprep.subr.bf16.mxu0 0
    %1894 = vmatpush1.bf16.msra.mxu0 0
    %1895 = vmatprep.subr.bf16.mxu0 0
    %1896 = vmatpush1.bf16.msra.mxu0 0
    %1897 = vmatprep.subr.bf16.mxu0 0
    %1898 = vmatpush1.bf16.msra.mxu0 0
    %1899 = vmatprep.subr.bf16.mxu0 0
    %1900 = vmatpush1.bf16.msra.mxu0 0
    %1901 = vmatprep.subr.bf16.mxu0 0
    %1902 = vmatpush1.bf16.msra.mxu0 0
    %1903 = vmatprep.subr.bf16.mxu0 0
    %1904 = vmatpush1.bf16.msra.mxu0 0
    %1905 = vmatprep.subr.bf16.mxu0 0
    %1906 = vmatpush1.bf16.msra.mxu0 0
    %1907 = vmatprep.subr.bf16.mxu0 0
    %1908 = vmatpush1.bf16.msra.mxu0 0
    %1909 = vmatprep.subr.bf16.mxu0 0
    %1910 = vmatpush1.bf16.msra.mxu0 0
    %1911 = vmatprep.subr.bf16.mxu0 0
    %1912 = vmatpush1.bf16.msra.mxu0 0
    %1913 = vmatprep.subr.bf16.mxu0 0
    %1914 = vmatpush1.bf16.msra.mxu0 0
    %1915 = vmatprep.subr.bf16.mxu0 0
    %1916 = vmatpush1.bf16.msra.mxu0 0
    %1917 = vmatprep.subr.bf16.mxu0 0
    %1918 = vmatpush1.bf16.msra.mxu0 0
    %1919 = vmatprep.mubr.bf16.mxu0 0
    %1920 = vmatmul.mubr.bf16.gmra.mrb[0].mxu0 %v1817
    %v1921 = vpop.f32.mrb[0].mxu0
    %v1922 = vadd.f32 %v1873, %v1921
    %v1923 = vpop.f32.mrb[0].mxu0
    %v1924 = vpop.f32.mrb[0].mxu0
    %v1925 = vadd.f32 %v1873, %v1924
    %v1926 = vpop.f32.mrb[0].mxu0
    %1927 = vdwg.mxu0
    %s1928 = scalar_lea.vmem [#allocation18], 16
    %v1929 = vld [vmem:[%s1928] sm:$0xf]
    %v1930 = vld [vmem:[%s1928 + $0x4] sm:$0xf]
    %v1931 = vld [vmem:[%s1928 + $0x8] sm:$0xf]
    %v1932 = vld [vmem:[%s1928 + $0xc] sm:$0xf]
    %s1933 = scalar_lea.vmem [#allocation19], 1
    %v1934 = vld [vmem:[%s1933] sm:$0x1]
    %v1936 = vlaneseq
    %v1937 = vshrl.u32 %v1936, 7
    %v1938 = vsub.s32 0, %v1937
    %v1939 = vrot.slane %v1934, %v1938
    %v1945 = vunpack.c.l.b16 %v1929
    %v1946 = vunpack.c.l.b16 %v1930
    %v1947 = vunpack.c.l.b16 %v1931
    %v1948 = vunpack.c.l.b16 %v1932
    %v1949 = vpack.c.b16 %v1946, %v1945
    %v1950 = vpack.c.b16 %v1948, %v1947
    %1953 = vmatprep.subr.bf16.mxu0 0
    %1954 = vmatpush1.bf16.msra.mxu0 %v1949
    %1955 = vmatprep.subr.bf16.mxu0 0
    %1956 = vmatpush1.bf16.msra.mxu0 %v1950
    %1957 = vmatprep.subr.bf16.mxu0 0
    %1958 = vmatpush1.bf16.msra.mxu0 0
    %1959 = vmatprep.subr.bf16.mxu0 0
    %1960 = vmatpush1.bf16.msra.mxu0 0
    %1961 = vmatprep.subr.bf16.mxu0 0
    %1962 = vmatpush1.bf16.msra.mxu0 0
    %1963 = vmatprep.subr.bf16.mxu0 0
    %1964 = vmatpush1.bf16.msra.mxu0 0
    %1965 = vmatprep.subr.bf16.mxu0 0
    %1966 = vmatpush1.bf16.msra.mxu0 0
    %1967 = vmatprep.subr.bf16.mxu0 0
    %1968 = vmatpush1.bf16.msra.mxu0 0
    %1969 = vmatprep.subr.bf16.mxu0 0
    %1970 = vmatpush1.bf16.msra.mxu0 0
    %1971 = vmatprep.subr.bf16.mxu0 0
    %1972 = vmatpush1.bf16.msra.mxu0 0
    %1973 = vmatprep.subr.bf16.mxu0 0
    %1974 = vmatpush1.bf16.msra.mxu0 0
    %1975 = vmatprep.subr.bf16.mxu0 0
    %1976 = vmatpush1.bf16.msra.mxu0 0
    %1977 = vmatprep.subr.bf16.mxu0 0
    %1978 = vmatpush1.bf16.msra.mxu0 0
    %1979 = vmatprep.subr.bf16.mxu0 0
    %1980 = vmatpush1.bf16.msra.mxu0 0
    %1981 = vmatprep.subr.bf16.mxu0 0
    %1982 = vmatpush1.bf16.msra.mxu0 0
    %1983 = vmatprep.subr.bf16.mxu0 0
    %1984 = vmatpush1.bf16.msra.mxu0 0
    %1985 = vmatprep.mubr.bf16.mxu0 0
    %1986 = vmatmul.mubr.bf16.gmra.mrb[0].mxu0 %v1817
    %v1987 = vpop.f32.mrb[0].mxu0
    %v1988 = vadd.f32 %v1939, %v1987
    %v1989 = vpop.f32.mrb[0].mxu0
    %v1990 = vpop.f32.mrb[0].mxu0
    %v1991 = vadd.f32 %v1939, %v1990
    %v1992 = vpop.f32.mrb[0].mxu0
    %1993 = vdwg.mxu0
    %v1994 = vpack.c.bf16 %v1860, %v1860
    %v1995 = vpack.c.bf16 %v1861, %v1861
    %v1996 = vpack.c.bf16 %v1922, %v1922
    %v1997 = vpack.c.bf16 %v1925, %v1925
    %v1998 = vpack.c.bf16 %v1988, %v1988
    %v1999 = vpack.c.bf16 %v1991, %v1991
    %s2000 = sld [smem:[#allocation6 + $0x1]]
    %v2001 = vstv %s2000
    %v2002 = vmul.f32 %v2001, %v317
    %v2003 = vmul.f32 %v2001, %v318
    %v2005 = vsel %vm634, %v1994, 0
    %v2008 = vsel %vm634, %v1996, 0
    %2010 = vmatprep.subr.bf16.mxu0 0
    %2011 = vmatpush1.bf16.xpose.msra.mxu0 %v2008
    %2012 = vmatprep.subr.bf16.mxu0 0
    %2013 = vmatpush1.bf16.xpose.msra.mxu0 0
    %2014 = vmatprep.subr.bf16.mxu0 0
    %2015 = vmatpush1.bf16.xpose.msra.mxu0 0
    %2016 = vmatprep.subr.bf16.mxu0 0
    %2017 = vmatpush1.bf16.xpose.msra.mxu0 0
    %2018 = vmatprep.subr.bf16.mxu0 0
    %2019 = vmatpush1.bf16.xpose.msra.mxu0 0
    %2020 = vmatprep.subr.bf16.mxu0 0
    %2021 = vmatpush1.bf16.xpose.msra.mxu0 0
    %2022 = vmatprep.subr.bf16.mxu0 0
    %2023 = vmatpush1.bf16.xpose.msra.mxu0 0
    %2024 = vmatprep.subr.bf16.mxu0 0
    %2025 = vmatpush1.bf16.xpose.msra.mxu0 0
    %2026 = vmatprep.subr.bf16.mxu0 0
    %2027 = vmatpush1.bf16.xpose.msra.mxu0 0
    %2028 = vmatprep.subr.bf16.mxu0 0
    %2029 = vmatpush1.bf16.xpose.msra.mxu0 0
    %2030 = vmatprep.subr.bf16.mxu0 0
    %2031 = vmatpush1.bf16.xpose.msra.mxu0 0
    %2032 = vmatprep.subr.bf16.mxu0 0
    %2033 = vmatpush1.bf16.xpose.msra.mxu0 0
    %2034 = vmatprep.subr.bf16.mxu0 0
    %2035 = vmatpush1.bf16.xpose.msra.mxu0 0
    %2036 = vmatprep.subr.bf16.mxu0 0
    %2037 = vmatpush1.bf16.xpose.msra.mxu0 0
    %2038 = vmatprep.subr.bf16.mxu0 0
    %2039 = vmatpush1.bf16.xpose.msra.mxu0 0
    %2040 = vmatprep.subr.bf16.mxu0 0
    %2041 = vmatpush1.bf16.xpose.msra.mxu0 0
    %2042 = vmatprep.mubr.bf16.mxu0 0
    %2043 = vmatmul.mubr.bf16.gmra.mrb[0].mxu0 %v2005
    %v2044 = vpop.f32.mrb[0].mxu0
    %v2045 = vadd.f32 %v2002, %v2044
    %v2046 = vpop.f32.mrb[0].mxu0
    %v2047 = vpop.f32.mrb[0].mxu0
    %v2048 = vpop.f32.mrb[0].mxu0
    %2049 = vdwg.mxu0
    %v2051 = vsel %vm634, %v1995, 0
    %v2054 = vsel %vm634, %v1997, 0
    %2056 = vmatprep.subr.bf16.mxu0 0
    %2057 = vmatpush1.bf16.xpose.msra.mxu0 %v2054
    %2058 = vmatprep.subr.bf16.mxu0 0
    %2059 = vmatpush1.bf16.xpose.msra.mxu0 0
    %2060 = vmatprep.subr.bf16.mxu0 0
    %2061 = vmatpush1.bf16.xpose.msra.mxu0 0
    %2062 = vmatprep.subr.bf16.mxu0 0
    %2063 = vmatpush1.bf16.xpose.msra.mxu0 0
    %2064 = vmatprep.subr.bf16.mxu0 0
    %2065 = vmatpush1.bf16.xpose.msra.mxu0 0
    %2066 = vmatprep.subr.bf16.mxu0 0
    %2067 = vmatpush1.bf16.xpose.msra.mxu0 0
    %2068 = vmatprep.subr.bf16.mxu0 0
    %2069 = vmatpush1.bf16.xpose.msra.mxu0 0
    %2070 = vmatprep.subr.bf16.mxu0 0
    %2071 = vmatpush1.bf16.xpose.msra.mxu0 0
    %2072 = vmatprep.subr.bf16.mxu0 0
    %2073 = vmatpush1.bf16.xpose.msra.mxu0 0
    %2074 = vmatprep.subr.bf16.mxu0 0
    %2075 = vmatpush1.bf16.xpose.msra.mxu0 0
    %2076 = vmatprep.subr.bf16.mxu0 0
    %2077 = vmatpush1.bf16.xpose.msra.mxu0 0
    %2078 = vmatprep.subr.bf16.mxu0 0
    %2079 = vmatpush1.bf16.xpose.msra.mxu0 0
    %2080 = vmatprep.subr.bf16.mxu0 0
    %2081 = vmatpush1.bf16.xpose.msra.mxu0 0
    %2082 = vmatprep.subr.bf16.mxu0 0
    %2083 = vmatpush1.bf16.xpose.msra.mxu0 0
    %2084 = vmatprep.subr.bf16.mxu0 0
    %2085 = vmatpush1.bf16.xpose.msra.mxu0 0
    %2086 = vmatprep.subr.bf16.mxu0 0
    %2087 = vmatpush1.bf16.xpose.msra.mxu0 0
    %2088 = vmatprep.mubr.bf16.mxu0 0
    %2089 = vmatmul.mubr.bf16.gmra.mrb[0].mxu0 %v2051
    %v2090 = vpop.f32.mrb[0].mxu0
    %v2091 = vadd.f32 %v2003, %v2090
    %v2092 = vpop.f32.mrb[0].mxu0
    %v2093 = vpop.f32.mrb[0].mxu0
    %v2094 = vpop.f32.mrb[0].mxu0
    %2095 = vdwg.mxu0
    %v2096 = vsel %vm634, %v2045, -inf
    %2097 = vmax.xlane.f32.xlu0 %v2096
    %v2098 = vpop.xlane.xlu0 %2097
    %v2099 = vsel %vm634, %v2091, -inf
    %2100 = vmax.xlane.f32.xlu0 %v2099
    %v2101 = vpop.xlane.xlu0 %2100
    %v2102 = vsub.f32 %v2045, %v2098
    %v2103 = vsub.f32 %v2091, %v2101
    %v2104 = vmul.f32 %v2102, 1.442695
    %v2105 = vpow.pop %v2104
    %v2106 = vmul.f32 %v2103, 1.442695
    %v2107 = vpow.pop %v2106
    %v2108 = vsel %vm634, %v2105, 0.0
    %2109 = vadd.xlane.f32.xlu0 %v2108
    %v2110 = vpop.xlane.xlu0 %2109
    %v2111 = vsel %vm634, %v2107, 0.0
    %2112 = vadd.xlane.f32.xlu0 %v2111
    %v2113 = vpop.xlane.xlu0 %2112
    %v2114 = vrcp.pop %v2110
    %v2115 = vrcp.pop %v2113
    %v2116 = vmul.f32 %v2105, %v2114
    %v2117 = vmul.f32 %v2107, %v2115
    %v2118 = vpack.c.bf16 %v2116, %v2116
    %v2119 = vpack.c.bf16 %v2117, %v2117
    %v2121 = vsel %vm634, %v2118, 0
    %v2124 = vsel %vm754, %v1998, 0
    %2126 = vmatprep.subr.bf16.mxu0 0
    %2127 = vmatpush1.bf16.msra.mxu0 %v2124
    %2128 = vmatprep.subr.bf16.mxu0 0
    %2129 = vmatpush1.bf16.msra.mxu0 0
    %2130 = vmatprep.subr.bf16.mxu0 0
    %2131 = vmatpush1.bf16.msra.mxu0 0
    %2132 = vmatprep.subr.bf16.mxu0 0
    %2133 = vmatpush1.bf16.msra.mxu0 0
    %2134 = vmatprep.subr.bf16.mxu0 0
    %2135 = vmatpush1.bf16.msra.mxu0 0
    %2136 = vmatprep.subr.bf16.mxu0 0
    %2137 = vmatpush1.bf16.msra.mxu0 0
    %2138 = vmatprep.subr.bf16.mxu0 0
    %2139 = vmatpush1.bf16.msra.mxu0 0
    %2140 = vmatprep.subr.bf16.mxu0 0
    %2141 = vmatpush1.bf16.msra.mxu0 0
    %2142 = vmatprep.subr.bf16.mxu0 0
    %2143 = vmatpush1.bf16.msra.mxu0 0
    %2144 = vmatprep.subr.bf16.mxu0 0
    %2145 = vmatpush1.bf16.msra.mxu0 0
    %2146 = vmatprep.subr.bf16.mxu0 0
    %2147 = vmatpush1.bf16.msra.mxu0 0
    %2148 = vmatprep.subr.bf16.mxu0 0
    %2149 = vmatpush1.bf16.msra.mxu0 0
    %2150 = vmatprep.subr.bf16.mxu0 0
    %2151 = vmatpush1.bf16.msra.mxu0 0
    %2152 = vmatprep.subr.bf16.mxu0 0
    %2153 = vmatpush1.bf16.msra.mxu0 0
    %2154 = vmatprep.subr.bf16.mxu0 0
    %2155 = vmatpush1.bf16.msra.mxu0 0
    %2156 = vmatprep.subr.bf16.mxu0 0
    %2157 = vmatpush1.bf16.msra.mxu0 0
    %2158 = vmatprep.mubr.bf16.mxu0 0
    %2159 = vmatmul.mubr.bf16.gmra.mrb[0].mxu0 %v2121
    %v2160 = vpop.f32.mrb[0].mxu0
    %v2161 = vadd.f32 0.0, %v2160
    %v2162 = vpop.f32.mrb[0].mxu0
    %v2163 = vpop.f32.mrb[0].mxu0
    %v2164 = vpop.f32.mrb[0].mxu0
    %2165 = vdwg.mxu0
    %v2167 = vsel %vm634, %v2119, 0
    %v2170 = vsel %vm754, %v1999, 0
    %2172 = vmatprep.subr.bf16.mxu0 0
    %2173 = vmatpush1.bf16.msra.mxu0 %v2170
    %2174 = vmatprep.subr.bf16.mxu0 0
    %2175 = vmatpush1.bf16.msra.mxu0 0
    %2176 = vmatprep.subr.bf16.mxu0 0
    %2177 = vmatpush1.bf16.msra.mxu0 0
    %2178 = vmatprep.subr.bf16.mxu0 0
    %2179 = vmatpush1.bf16.msra.mxu0 0
    %2180 = vmatprep.subr.bf16.mxu0 0
    %2181 = vmatpush1.bf16.msra.mxu0 0
    %2182 = vmatprep.subr.bf16.mxu0 0
    %2183 = vmatpush1.bf16.msra.mxu0 0
    %2184 = vmatprep.subr.bf16.mxu0 0
    %2185 = vmatpush1.bf16.msra.mxu0 0
    %2186 = vmatprep.subr.bf16.mxu0 0
    %2187 = vmatpush1.bf16.msra.mxu0 0
    %2188 = vmatprep.subr.bf16.mxu0 0
    %2189 = vmatpush1.bf16.msra.mxu0 0
    %2190 = vmatprep.subr.bf16.mxu0 0
    %2191 = vmatpush1.bf16.msra.mxu0 0
    %2192 = vmatprep.subr.bf16.mxu0 0
    %2193 = vmatpush1.bf16.msra.mxu0 0
    %2194 = vmatprep.subr.bf16.mxu0 0
    %2195 = vmatpush1.bf16.msra.mxu0 0
    %2196 = vmatprep.subr.bf16.mxu0 0
    %2197 = vmatpush1.bf16.msra.mxu0 0
    %2198 = vmatprep.subr.bf16.mxu0 0
    %2199 = vmatpush1.bf16.msra.mxu0 0
    %2200 = vmatprep.subr.bf16.mxu0 0
    %2201 = vmatpush1.bf16.msra.mxu0 0
    %2202 = vmatprep.subr.bf16.mxu0 0
    %2203 = vmatpush1.bf16.msra.mxu0 0
    %2204 = vmatprep.mubr.bf16.mxu0 0
    %2205 = vmatmul.mubr.bf16.gmra.mrb[0].mxu0 %v2167
    %v2206 = vpop.f32.mrb[0].mxu0
    %v2207 = vadd.f32 0.0, %v2206
    %v2208 = vpop.f32.mrb[0].mxu0
    %v2209 = vpop.f32.mrb[0].mxu0
    %v2210 = vpop.f32.mrb[0].mxu0
    %2211 = vdwg.mxu0
    %2213 = vrot.lane.b32.xlu0 %v1994, 120
    %v2214 = vpop.permute.xlu0 %2213
    %2216 = vrot.lane.b32.xlu0 %v1996, 120
    %v2217 = vpop.permute.xlu0 %2216
    %v2219 = vsel %vm634, %v2214, 0
    %v2222 = vsel %vm634, %v2217, 0
    %2224 = vmatprep.subr.bf16.mxu0 0
    %2225 = vmatpush1.bf16.xpose.msra.mxu0 %v2222
    %2226 = vmatprep.subr.bf16.mxu0 0
    %2227 = vmatpush1.bf16.xpose.msra.mxu0 0
    %2228 = vmatprep.subr.bf16.mxu0 0
    %2229 = vmatpush1.bf16.xpose.msra.mxu0 0
    %2230 = vmatprep.subr.bf16.mxu0 0
    %2231 = vmatpush1.bf16.xpose.msra.mxu0 0
    %2232 = vmatprep.subr.bf16.mxu0 0
    %2233 = vmatpush1.bf16.xpose.msra.mxu0 0
    %2234 = vmatprep.subr.bf16.mxu0 0
    %2235 = vmatpush1.bf16.xpose.msra.mxu0 0
    %2236 = vmatprep.subr.bf16.mxu0 0
    %2237 = vmatpush1.bf16.xpose.msra.mxu0 0
    %2238 = vmatprep.subr.bf16.mxu0 0
    %2239 = vmatpush1.bf16.xpose.msra.mxu0 0
    %2240 = vmatprep.subr.bf16.mxu0 0
    %2241 = vmatpush1.bf16.xpose.msra.mxu0 0
    %2242 = vmatprep.subr.bf16.mxu0 0
    %2243 = vmatpush1.bf16.xpose.msra.mxu0 0
    %2244 = vmatprep.subr.bf16.mxu0 0
    %2245 = vmatpush1.bf16.xpose.msra.mxu0 0
    %2246 = vmatprep.subr.bf16.mxu0 0
    %2247 = vmatpush1.bf16.xpose.msra.mxu0 0
    %2248 = vmatprep.subr.bf16.mxu0 0
    %2249 = vmatpush1.bf16.xpose.msra.mxu0 0
    %2250 = vmatprep.subr.bf16.mxu0 0
    %2251 = vmatpush1.bf16.xpose.msra.mxu0 0
    %2252 = vmatprep.subr.bf16.mxu0 0
    %2253 = vmatpush1.bf16.xpose.msra.mxu0 0
    %2254 = vmatprep.subr.bf16.mxu0 0
    %2255 = vmatpush1.bf16.xpose.msra.mxu0 0
    %2256 = vmatprep.mubr.bf16.mxu0 0
    %2257 = vmatmul.mubr.bf16.gmra.mrb[0].mxu0 %v2219
    %v2258 = vpop.f32.mrb[0].mxu0
    %v2259 = vadd.f32 %v2002, %v2258
    %v2260 = vpop.f32.mrb[0].mxu0
    %v2261 = vpop.f32.mrb[0].mxu0
    %v2262 = vpop.f32.mrb[0].mxu0
    %2263 = vdwg.mxu0
    %2265 = vrot.lane.b32.xlu0 %v1995, 120
    %v2266 = vpop.permute.xlu0 %2265
    %2268 = vrot.lane.b32.xlu0 %v1997, 120
    %v2269 = vpop.permute.xlu0 %2268
    %v2271 = vsel %vm634, %v2266, 0
    %v2274 = vsel %vm634, %v2269, 0
    %2276 = vmatprep.subr.bf16.mxu0 0
    %2277 = vmatpush1.bf16.xpose.msra.mxu0 %v2274
    %2278 = vmatprep.subr.bf16.mxu0 0
    %2279 = vmatpush1.bf16.xpose.msra.mxu0 0
    %2280 = vmatprep.subr.bf16.mxu0 0
    %2281 = vmatpush1.bf16.xpose.msra.mxu0 0
    %2282 = vmatprep.subr.bf16.mxu0 0
    %2283 = vmatpush1.bf16.xpose.msra.mxu0 0
    %2284 = vmatprep.subr.bf16.mxu0 0
    %2285 = vmatpush1.bf16.xpose.msra.mxu0 0
    %2286 = vmatprep.subr.bf16.mxu0 0
    %2287 = vmatpush1.bf16.xpose.msra.mxu0 0
    %2288 = vmatprep.subr.bf16.mxu0 0
    %2289 = vmatpush1.bf16.xpose.msra.mxu0 0
    %2290 = vmatprep.subr.bf16.mxu0 0
    %2291 = vmatpush1.bf16.xpose.msra.mxu0 0
    %2292 = vmatprep.subr.bf16.mxu0 0
    %2293 = vmatpush1.bf16.xpose.msra.mxu0 0
    %2294 = vmatprep.subr.bf16.mxu0 0
    %2295 = vmatpush1.bf16.xpose.msra.mxu0 0
    %2296 = vmatprep.subr.bf16.mxu0 0
    %2297 = vmatpush1.bf16.xpose.msra.mxu0 0
    %2298 = vmatprep.subr.bf16.mxu0 0
    %2299 = vmatpush1.bf16.xpose.msra.mxu0 0
    %2300 = vmatprep.subr.bf16.mxu0 0
    %2301 = vmatpush1.bf16.xpose.msra.mxu0 0
    %2302 = vmatprep.subr.bf16.mxu0 0
    %2303 = vmatpush1.bf16.xpose.msra.mxu0 0
    %2304 = vmatprep.subr.bf16.mxu0 0
    %2305 = vmatpush1.bf16.xpose.msra.mxu0 0
    %2306 = vmatprep.subr.bf16.mxu0 0
    %2307 = vmatpush1.bf16.xpose.msra.mxu0 0
    %2308 = vmatprep.mubr.bf16.mxu0 0
    %2309 = vmatmul.mubr.bf16.gmra.mrb[0].mxu0 %v2271
    %v2310 = vpop.f32.mrb[0].mxu0
    %v2311 = vadd.f32 %v2003, %v2310
    %v2312 = vpop.f32.mrb[0].mxu0
    %v2313 = vpop.f32.mrb[0].mxu0
    %v2314 = vpop.f32.mrb[0].mxu0
    %2315 = vdwg.mxu0
    %v2316 = vsel %vm634, %v2259, -inf
    %2317 = vmax.xlane.f32.xlu0 %v2316
    %v2318 = vpop.xlane.xlu0 %2317
    %v2319 = vsel %vm634, %v2311, -inf
    %2320 = vmax.xlane.f32.xlu0 %v2319
    %v2321 = vpop.xlane.xlu0 %2320
    %v2322 = vsub.f32 %v2259, %v2318
    %v2323 = vsub.f32 %v2311, %v2321
    %v2324 = vmul.f32 %v2322, 1.442695
    %v2325 = vpow.pop %v2324
    %v2326 = vmul.f32 %v2323, 1.442695
    %v2327 = vpow.pop %v2326
    %v2328 = vsel %vm634, %v2325, 0.0
    %2329 = vadd.xlane.f32.xlu0 %v2328
    %v2330 = vpop.xlane.xlu0 %2329
    %v2331 = vsel %vm634, %v2327, 0.0
    %2332 = vadd.xlane.f32.xlu0 %v2331
    %v2333 = vpop.xlane.xlu0 %2332
    %v2334 = vrcp.pop %v2330
    %v2335 = vrcp.pop %v2333
    %v2336 = vmul.f32 %v2325, %v2334
    %v2337 = vmul.f32 %v2327, %v2335
    %v2338 = vpack.c.bf16 %v2336, %v2336
    %v2339 = vpack.c.bf16 %v2337, %v2337
    %2341 = vrot.lane.b32.xlu0 %v1998, 120
    %v2342 = vpop.permute.xlu0 %2341
    %v2344 = vsel %vm634, %v2338, 0
    %v2347 = vsel %vm754, %v2342, 0
    %2349 = vmatprep.subr.bf16.mxu0 0
    %2350 = vmatpush1.bf16.msra.mxu0 %v2347
    %2351 = vmatprep.subr.bf16.mxu0 0
    %2352 = vmatpush1.bf16.msra.mxu0 0
    %2353 = vmatprep.subr.bf16.mxu0 0
    %2354 = vmatpush1.bf16.msra.mxu0 0
    %2355 = vmatprep.subr.bf16.mxu0 0
    %2356 = vmatpush1.bf16.msra.mxu0 0
    %2357 = vmatprep.subr.bf16.mxu0 0
    %2358 = vmatpush1.bf16.msra.mxu0 0
    %2359 = vmatprep.subr.bf16.mxu0 0
    %2360 = vmatpush1.bf16.msra.mxu0 0
    %2361 = vmatprep.subr.bf16.mxu0 0
    %2362 = vmatpush1.bf16.msra.mxu0 0
    %2363 = vmatprep.subr.bf16.mxu0 0
    %2364 = vmatpush1.bf16.msra.mxu0 0
    %2365 = vmatprep.subr.bf16.mxu0 0
    %2366 = vmatpush1.bf16.msra.mxu0 0
    %2367 = vmatprep.subr.bf16.mxu0 0
    %2368 = vmatpush1.bf16.msra.mxu0 0
    %2369 = vmatprep.subr.bf16.mxu0 0
    %2370 = vmatpush1.bf16.msra.mxu0 0
    %2371 = vmatprep.subr.bf16.mxu0 0
    %2372 = vmatpush1.bf16.msra.mxu0 0
    %2373 = vmatprep.subr.bf16.mxu0 0
    %2374 = vmatpush1.bf16.msra.mxu0 0
    %2375 = vmatprep.subr.bf16.mxu0 0
    %2376 = vmatpush1.bf16.msra.mxu0 0
    %2377 = vmatprep.subr.bf16.mxu0 0
    %2378 = vmatpush1.bf16.msra.mxu0 0
    %2379 = vmatprep.subr.bf16.mxu0 0
    %2380 = vmatpush1.bf16.msra.mxu0 0
    %2381 = vmatprep.mubr.bf16.mxu0 0
    %2382 = vmatmul.mubr.bf16.gmra.mrb[0].mxu0 %v2344
    %v2383 = vpop.f32.mrb[0].mxu0
    %v2384 = vadd.f32 0.0, %v2383
    %v2385 = vpop.f32.mrb[0].mxu0
    %v2386 = vpop.f32.mrb[0].mxu0
    %v2387 = vpop.f32.mrb[0].mxu0
    %2388 = vdwg.mxu0
    %2390 = vrot.lane.b32.xlu0 %v1999, 120
    %v2391 = vpop.permute.xlu0 %2390
    %v2393 = vsel %vm634, %v2339, 0
    %v2396 = vsel %vm754, %v2391, 0
    %2398 = vmatprep.subr.bf16.mxu0 0
    %2399 = vmatpush1.bf16.msra.mxu0 %v2396
    %2400 = vmatprep.subr.bf16.mxu0 0
    %2401 = vmatpush1.bf16.msra.mxu0 0
    %2402 = vmatprep.subr.bf16.mxu0 0
    %2403 = vmatpush1.bf16.msra.mxu0 0
    %2404 = vmatprep.subr.bf16.mxu0 0
    %2405 = vmatpush1.bf16.msra.mxu0 0
    %2406 = vmatprep.subr.bf16.mxu0 0
    %2407 = vmatpush1.bf16.msra.mxu0 0
    %2408 = vmatprep.subr.bf16.mxu0 0
    %2409 = vmatpush1.bf16.msra.mxu0 0
    %2410 = vmatprep.subr.bf16.mxu0 0
    %2411 = vmatpush1.bf16.msra.mxu0 0
    %2412 = vmatprep.subr.bf16.mxu0 0
    %2413 = vmatpush1.bf16.msra.mxu0 0
    %2414 = vmatprep.subr.bf16.mxu0 0
    %2415 = vmatpush1.bf16.msra.mxu0 0
    %2416 = vmatprep.subr.bf16.mxu0 0
    %2417 = vmatpush1.bf16.msra.mxu0 0
    %2418 = vmatprep.subr.bf16.mxu0 0
    %2419 = vmatpush1.bf16.msra.mxu0 0
    %2420 = vmatprep.subr.bf16.mxu0 0
    %2421 = vmatpush1.bf16.msra.mxu0 0
    %2422 = vmatprep.subr.bf16.mxu0 0
    %2423 = vmatpush1.bf16.msra.mxu0 0
    %2424 = vmatprep.subr.bf16.mxu0 0
    %2425 = vmatpush1.bf16.msra.mxu0 0
    %2426 = vmatprep.subr.bf16.mxu0 0
    %2427 = vmatpush1.bf16.msra.mxu0 0
    %2428 = vmatprep.subr.bf16.mxu0 0
    %2429 = vmatpush1.bf16.msra.mxu0 0
    %2430 = vmatprep.mubr.bf16.mxu0 0
    %2431 = vmatmul.mubr.bf16.gmra.mrb[0].mxu0 %v2393
    %v2432 = vpop.f32.mrb[0].mxu0
    %v2433 = vadd.f32 0.0, %v2432
    %v2434 = vpop.f32.mrb[0].mxu0
    %v2435 = vpop.f32.mrb[0].mxu0
    %v2436 = vpop.f32.mrb[0].mxu0
    %2437 = vdwg.mxu0
    %2438 = vrot.lane.b32.xlu0 %v1994, 112
    %v2439 = vpop.permute.xlu0 %2438
    %2440 = vrot.lane.b32.xlu0 %v1996, 112
    %v2441 = vpop.permute.xlu0 %2440
    %v2443 = vsel %vm634, %v2439, 0
    %v2446 = vsel %vm634, %v2441, 0
    %2448 = vmatprep.subr.bf16.mxu0 0
    %2449 = vmatpush1.bf16.xpose.msra.mxu0 %v2446
    %2450 = vmatprep.subr.bf16.mxu0 0
    %2451 = vmatpush1.bf16.xpose.msra.mxu0 0
    %2452 = vmatprep.subr.bf16.mxu0 0
    %2453 = vmatpush1.bf16.xpose.msra.mxu0 0
    %2454 = vmatprep.subr.bf16.mxu0 0
    %2455 = vmatpush1.bf16.xpose.msra.mxu0 0
    %2456 = vmatprep.subr.bf16.mxu0 0
    %2457 = vmatpush1.bf16.xpose.msra.mxu0 0
    %2458 = vmatprep.subr.bf16.mxu0 0
    %2459 = vmatpush1.bf16.xpose.msra.mxu0 0
    %2460 = vmatprep.subr.bf16.mxu0 0
    %2461 = vmatpush1.bf16.xpose.msra.mxu0 0
    %2462 = vmatprep.subr.bf16.mxu0 0
    %2463 = vmatpush1.bf16.xpose.msra.mxu0 0
    %2464 = vmatprep.subr.bf16.mxu0 0
    %2465 = vmatpush1.bf16.xpose.msra.mxu0 0
    %2466 = vmatprep.subr.bf16.mxu0 0
    %2467 = vmatpush1.bf16.xpose.msra.mxu0 0
    %2468 = vmatprep.subr.bf16.mxu0 0
    %2469 = vmatpush1.bf16.xpose.msra.mxu0 0
    %2470 = vmatprep.subr.bf16.mxu0 0
    %2471 = vmatpush1.bf16.xpose.msra.mxu0 0
    %2472 = vmatprep.subr.bf16.mxu0 0
    %2473 = vmatpush1.bf16.xpose.msra.mxu0 0
    %2474 = vmatprep.subr.bf16.mxu0 0
    %2475 = vmatpush1.bf16.xpose.msra.mxu0 0
    %2476 = vmatprep.subr.bf16.mxu0 0
    %2477 = vmatpush1.bf16.xpose.msra.mxu0 0
    %2478 = vmatprep.subr.bf16.mxu0 0
    %2479 = vmatpush1.bf16.xpose.msra.mxu0 0
    %2480 = vmatprep.mubr.bf16.mxu0 0
    %2481 = vmatmul.mubr.bf16.gmra.mrb[0].mxu0 %v2443
    %v2482 = vpop.f32.mrb[0].mxu0
    %v2483 = vadd.f32 %v2002, %v2482
    %v2484 = vpop.f32.mrb[0].mxu0
    %v2485 = vpop.f32.mrb[0].mxu0
    %v2486 = vpop.f32.mrb[0].mxu0
    %2487 = vdwg.mxu0
    %2488 = vrot.lane.b32.xlu0 %v1995, 112
    %v2489 = vpop.permute.xlu0 %2488
    %2490 = vrot.lane.b32.xlu0 %v1997, 112
    %v2491 = vpop.permute.xlu0 %2490
    %v2493 = vsel %vm634, %v2489, 0
    %v2496 = vsel %vm634, %v2491, 0
    %2498 = vmatprep.subr.bf16.mxu0 0
    %2499 = vmatpush1.bf16.xpose.msra.mxu0 %v2496
    %2500 = vmatprep.subr.bf16.mxu0 0
    %2501 = vmatpush1.bf16.xpose.msra.mxu0 0
    %2502 = vmatprep.subr.bf16.mxu0 0
    %2503 = vmatpush1.bf16.xpose.msra.mxu0 0
    %2504 = vmatprep.subr.bf16.mxu0 0
    %2505 = vmatpush1.bf16.xpose.msra.mxu0 0
    %2506 = vmatprep.subr.bf16.mxu0 0
    %2507 = vmatpush1.bf16.xpose.msra.mxu0 0
    %2508 = vmatprep.subr.bf16.mxu0 0
    %2509 = vmatpush1.bf16.xpose.msra.mxu0 0
    %2510 = vmatprep.subr.bf16.mxu0 0
    %2511 = vmatpush1.bf16.xpose.msra.mxu0 0
    %2512 = vmatprep.subr.bf16.mxu0 0
    %2513 = vmatpush1.bf16.xpose.msra.mxu0 0
    %2514 = vmatprep.subr.bf16.mxu0 0
    %2515 = vmatpush1.bf16.xpose.msra.mxu0 0
    %2516 = vmatprep.subr.bf16.mxu0 0
    %2517 = vmatpush1.bf16.xpose.msra.mxu0 0
    %2518 = vmatprep.subr.bf16.mxu0 0
    %2519 = vmatpush1.bf16.xpose.msra.mxu0 0
    %2520 = vmatprep.subr.bf16.mxu0 0
    %2521 = vmatpush1.bf16.xpose.msra.mxu0 0
    %2522 = vmatprep.subr.bf16.mxu0 0
    %2523 = vmatpush1.bf16.xpose.msra.mxu0 0
    %2524 = vmatprep.subr.bf16.mxu0 0
    %2525 = vmatpush1.bf16.xpose.msra.mxu0 0
    %2526 = vmatprep.subr.bf16.mxu0 0
    %2527 = vmatpush1.bf16.xpose.msra.mxu0 0
    %2528 = vmatprep.subr.bf16.mxu0 0
    %2529 = vmatpush1.bf16.xpose.msra.mxu0 0
    %2530 = vmatprep.mubr.bf16.mxu0 0
    %2531 = vmatmul.mubr.bf16.gmra.mrb[0].mxu0 %v2493
    %v2532 = vpop.f32.mrb[0].mxu0
    %v2533 = vadd.f32 %v2003, %v2532
    %v2534 = vpop.f32.mrb[0].mxu0
    %v2535 = vpop.f32.mrb[0].mxu0
    %v2536 = vpop.f32.mrb[0].mxu0
    %2537 = vdwg.mxu0
    %v2538 = vsel %vm634, %v2483, -inf
    %2539 = vmax.xlane.f32.xlu0 %v2538
    %v2540 = vpop.xlane.xlu0 %2539
    %v2541 = vsel %vm634, %v2533, -inf
    %2542 = vmax.xlane.f32.xlu0 %v2541
    %v2543 = vpop.xlane.xlu0 %2542
    %v2544 = vsub.f32 %v2483, %v2540
    %v2545 = vsub.f32 %v2533, %v2543
    %v2546 = vmul.f32 %v2544, 1.442695
    %v2547 = vpow.pop %v2546
    %v2548 = vmul.f32 %v2545, 1.442695
    %v2549 = vpow.pop %v2548
    %v2550 = vsel %vm634, %v2547, 0.0
    %2551 = vadd.xlane.f32.xlu0 %v2550
    %v2552 = vpop.xlane.xlu0 %2551
    %v2553 = vsel %vm634, %v2549, 0.0
    %2554 = vadd.xlane.f32.xlu0 %v2553
    %v2555 = vpop.xlane.xlu0 %2554
    %v2556 = vrcp.pop %v2552
    %v2557 = vrcp.pop %v2555
    %v2558 = vmul.f32 %v2547, %v2556
    %v2559 = vmul.f32 %v2549, %v2557
    %v2560 = vpack.c.bf16 %v2558, %v2558
    %v2561 = vpack.c.bf16 %v2559, %v2559
    %2562 = vrot.lane.b32.xlu0 %v1998, 112
    %v2563 = vpop.permute.xlu0 %2562
    %v2565 = vsel %vm634, %v2560, 0
    %v2568 = vsel %vm754, %v2563, 0
    %2570 = vmatprep.subr.bf16.mxu0 0
    %2571 = vmatpush1.bf16.msra.mxu0 %v2568
    %2572 = vmatprep.subr.bf16.mxu0 0
    %2573 = vmatpush1.bf16.msra.mxu0 0
    %2574 = vmatprep.subr.bf16.mxu0 0
    %2575 = vmatpush1.bf16.msra.mxu0 0
    %2576 = vmatprep.subr.bf16.mxu0 0
    %2577 = vmatpush1.bf16.msra.mxu0 0
    %2578 = vmatprep.subr.bf16.mxu0 0
    %2579 = vmatpush1.bf16.msra.mxu0 0
    %2580 = vmatprep.subr.bf16.mxu0 0
    %2581 = vmatpush1.bf16.msra.mxu0 0
    %2582 = vmatprep.subr.bf16.mxu0 0
    %2583 = vmatpush1.bf16.msra.mxu0 0
    %2584 = vmatprep.subr.bf16.mxu0 0
    %2585 = vmatpush1.bf16.msra.mxu0 0
    %2586 = vmatprep.subr.bf16.mxu0 0
    %2587 = vmatpush1.bf16.msra.mxu0 0
    %2588 = vmatprep.subr.bf16.mxu0 0
    %2589 = vmatpush1.bf16.msra.mxu0 0
    %2590 = vmatprep.subr.bf16.mxu0 0
    %2591 = vmatpush1.bf16.msra.mxu0 0
    %2592 = vmatprep.subr.bf16.mxu0 0
    %2593 = vmatpush1.bf16.msra.mxu0 0
    %2594 = vmatprep.subr.bf16.mxu0 0
    %2595 = vmatpush1.bf16.msra.mxu0 0
    %2596 = vmatprep.subr.bf16.mxu0 0
    %2597 = vmatpush1.bf16.msra.mxu0 0
    %2598 = vmatprep.subr.bf16.mxu0 0
    %2599 = vmatpush1.bf16.msra.mxu0 0
    %2600 = vmatprep.subr.bf16.mxu0 0
    %2601 = vmatpush1.bf16.msra.mxu0 0
    %2602 = vmatprep.mubr.bf16.mxu0 0
    %2603 = vmatmul.mubr.bf16.gmra.mrb[0].mxu0 %v2565
    %v2604 = vpop.f32.mrb[0].mxu0
    %v2605 = vadd.f32 0.0, %v2604
    %v2606 = vpop.f32.mrb[0].mxu0
    %v2607 = vpop.f32.mrb[0].mxu0
    %v2608 = vpop.f32.mrb[0].mxu0
    %2609 = vdwg.mxu0
    %2610 = vrot.lane.b32.xlu0 %v1999, 112
    %v2611 = vpop.permute.xlu0 %2610
    %v2613 = vsel %vm634, %v2561, 0
    %v2616 = vsel %vm754, %v2611, 0
    %2618 = vmatprep.subr.bf16.mxu0 0
    %2619 = vmatpush1.bf16.msra.mxu0 %v2616
    %2620 = vmatprep.subr.bf16.mxu0 0
    %2621 = vmatpush1.bf16.msra.mxu0 0
    %2622 = vmatprep.subr.bf16.mxu0 0
    %2623 = vmatpush1.bf16.msra.mxu0 0
    %2624 = vmatprep.subr.bf16.mxu0 0
    %2625 = vmatpush1.bf16.msra.mxu0 0
    %2626 = vmatprep.subr.bf16.mxu0 0
    %2627 = vmatpush1.bf16.msra.mxu0 0
    %2628 = vmatprep.subr.bf16.mxu0 0
    %2629 = vmatpush1.bf16.msra.mxu0 0
    %2630 = vmatprep.subr.bf16.mxu0 0
    %2631 = vmatpush1.bf16.msra.mxu0 0
    %2632 = vmatprep.subr.bf16.mxu0 0
    %2633 = vmatpush1.bf16.msra.mxu0 0
    %2634 = vmatprep.subr.bf16.mxu0 0
    %2635 = vmatpush1.bf16.msra.mxu0 0
    %2636 = vmatprep.subr.bf16.mxu0 0
    %2637 = vmatpush1.bf16.msra.mxu0 0
    %2638 = vmatprep.subr.bf16.mxu0 0
    %2639 = vmatpush1.bf16.msra.mxu0 0
    %2640 = vmatprep.subr.bf16.mxu0 0
    %2641 = vmatpush1.bf16.msra.mxu0 0
    %2642 = vmatprep.subr.bf16.mxu0 0
    %2643 = vmatpush1.bf16.msra.mxu0 0
    %2644 = vmatprep.subr.bf16.mxu0 0
    %2645 = vmatpush1.bf16.msra.mxu0 0
    %2646 = vmatprep.subr.bf16.mxu0 0
    %2647 = vmatpush1.bf16.msra.mxu0 0
    %2648 = vmatprep.subr.bf16.mxu0 0
    %2649 = vmatpush1.bf16.msra.mxu0 0
    %2650 = vmatprep.mubr.bf16.mxu0 0
    %2651 = vmatmul.mubr.bf16.gmra.mrb[0].mxu0 %v2613
    %v2652 = vpop.f32.mrb[0].mxu0
    %v2653 = vadd.f32 0.0, %v2652
    %v2654 = vpop.f32.mrb[0].mxu0
    %v2655 = vpop.f32.mrb[0].mxu0
    %v2656 = vpop.f32.mrb[0].mxu0
    %2657 = vdwg.mxu0
    %2658 = vrot.lane.b32.xlu0 %v1994, 104
    %v2659 = vpop.permute.xlu0 %2658
    %2660 = vrot.lane.b32.xlu0 %v1996, 104
    %v2661 = vpop.permute.xlu0 %2660
    %v2663 = vsel %vm634, %v2659, 0
    %v2666 = vsel %vm634, %v2661, 0
    %2668 = vmatprep.subr.bf16.mxu0 0
    %2669 = vmatpush1.bf16.xpose.msra.mxu0 %v2666
    %2670 = vmatprep.subr.bf16.mxu0 0
    %2671 = vmatpush1.bf16.xpose.msra.mxu0 0
    %2672 = vmatprep.subr.bf16.mxu0 0
    %2673 = vmatpush1.bf16.xpose.msra.mxu0 0
    %2674 = vmatprep.subr.bf16.mxu0 0
    %2675 = vmatpush1.bf16.xpose.msra.mxu0 0
    %2676 = vmatprep.subr.bf16.mxu0 0
    %2677 = vmatpush1.bf16.xpose.msra.mxu0 0
    %2678 = vmatprep.subr.bf16.mxu0 0
    %2679 = vmatpush1.bf16.xpose.msra.mxu0 0
    %2680 = vmatprep.subr.bf16.mxu0 0
    %2681 = vmatpush1.bf16.xpose.msra.mxu0 0
    %2682 = vmatprep.subr.bf16.mxu0 0
    %2683 = vmatpush1.bf16.xpose.msra.mxu0 0
    %2684 = vmatprep.subr.bf16.mxu0 0
    %2685 = vmatpush1.bf16.xpose.msra.mxu0 0
    %2686 = vmatprep.subr.bf16.mxu0 0
    %2687 = vmatpush1.bf16.xpose.msra.mxu0 0
    %2688 = vmatprep.subr.bf16.mxu0 0
    %2689 = vmatpush1.bf16.xpose.msra.mxu0 0
    %2690 = vmatprep.subr.bf16.mxu0 0
    %2691 = vmatpush1.bf16.xpose.msra.mxu0 0
    %2692 = vmatprep.subr.bf16.mxu0 0
    %2693 = vmatpush1.bf16.xpose.msra.mxu0 0
    %2694 = vmatprep.subr.bf16.mxu0 0
    %2695 = vmatpush1.bf16.xpose.msra.mxu0 0
    %2696 = vmatprep.subr.bf16.mxu0 0
    %2697 = vmatpush1.bf16.xpose.msra.mxu0 0
    %2698 = vmatprep.subr.bf16.mxu0 0
    %2699 = vmatpush1.bf16.xpose.msra.mxu0 0
    %2700 = vmatprep.mubr.bf16.mxu0 0
    %2701 = vmatmul.mubr.bf16.gmra.mrb[0].mxu0 %v2663
    %v2702 = vpop.f32.mrb[0].mxu0
    %v2703 = vadd.f32 %v2002, %v2702
    %v2704 = vpop.f32.mrb[0].mxu0
    %v2705 = vpop.f32.mrb[0].mxu0
    %v2706 = vpop.f32.mrb[0].mxu0
    %2707 = vdwg.mxu0
    %2708 = vrot.lane.b32.xlu0 %v1995, 104
    %v2709 = vpop.permute.xlu0 %2708
    %2710 = vrot.lane.b32.xlu0 %v1997, 104
    %v2711 = vpop.permute.xlu0 %2710
    %v2713 = vsel %vm634, %v2709, 0
    %v2716 = vsel %vm634, %v2711, 0
    %2718 = vmatprep.subr.bf16.mxu0 0
    %2719 = vmatpush1.bf16.xpose.msra.mxu0 %v2716
    %2720 = vmatprep.subr.bf16.mxu0 0
    %2721 = vmatpush1.bf16.xpose.msra.mxu0 0
    %2722 = vmatprep.subr.bf16.mxu0 0
    %2723 = vmatpush1.bf16.xpose.msra.mxu0 0
    %2724 = vmatprep.subr.bf16.mxu0 0
    %2725 = vmatpush1.bf16.xpose.msra.mxu0 0
    %2726 = vmatprep.subr.bf16.mxu0 0
    %2727 = vmatpush1.bf16.xpose.msra.mxu0 0
    %2728 = vmatprep.subr.bf16.mxu0 0
    %2729 = vmatpush1.bf16.xpose.msra.mxu0 0
    %2730 = vmatprep.subr.bf16.mxu0 0
    %2731 = vmatpush1.bf16.xpose.msra.mxu0 0
    %2732 = vmatprep.subr.bf16.mxu0 0
    %2733 = vmatpush1.bf16.xpose.msra.mxu0 0
    %2734 = vmatprep.subr.bf16.mxu0 0
    %2735 = vmatpush1.bf16.xpose.msra.mxu0 0
    %2736 = vmatprep.subr.bf16.mxu0 0
    %2737 = vmatpush1.bf16.xpose.msra.mxu0 0
    %2738 = vmatprep.subr.bf16.mxu0 0
    %2739 = vmatpush1.bf16.xpose.msra.mxu0 0
    %2740 = vmatprep.subr.bf16.mxu0 0
    %2741 = vmatpush1.bf16.xpose.msra.mxu0 0
    %2742 = vmatprep.subr.bf16.mxu0 0
    %2743 = vmatpush1.bf16.xpose.msra.mxu0 0
    %2744 = vmatprep.subr.bf16.mxu0 0
    %2745 = vmatpush1.bf16.xpose.msra.mxu0 0
    %2746 = vmatprep.subr.bf16.mxu0 0
    %2747 = vmatpush1.bf16.xpose.msra.mxu0 0
    %2748 = vmatprep.subr.bf16.mxu0 0
    %2749 = vmatpush1.bf16.xpose.msra.mxu0 0
    %2750 = vmatprep.mubr.bf16.mxu0 0
    %2751 = vmatmul.mubr.bf16.gmra.mrb[0].mxu0 %v2713
    %v2752 = vpop.f32.mrb[0].mxu0
    %v2753 = vadd.f32 %v2003, %v2752
    %v2754 = vpop.f32.mrb[0].mxu0
    %v2755 = vpop.f32.mrb[0].mxu0
    %v2756 = vpop.f32.mrb[0].mxu0
    %2757 = vdwg.mxu0
    %v2758 = vsel %vm634, %v2703, -inf
    %2759 = vmax.xlane.f32.xlu0 %v2758
    %v2760 = vpop.xlane.xlu0 %2759
    %v2761 = vsel %vm634, %v2753, -inf
    %2762 = vmax.xlane.f32.xlu0 %v2761
    %v2763 = vpop.xlane.xlu0 %2762
    %v2764 = vsub.f32 %v2703, %v2760
    %v2765 = vsub.f32 %v2753, %v2763
    %v2766 = vmul.f32 %v2764, 1.442695
    %v2767 = vpow.pop %v2766
    %v2768 = vmul.f32 %v2765, 1.442695
    %v2769 = vpow.pop %v2768
    %v2770 = vsel %vm634, %v2767, 0.0
    %2771 = vadd.xlane.f32.xlu0 %v2770
    %v2772 = vpop.xlane.xlu0 %2771
    %v2773 = vsel %vm634, %v2769, 0.0
    %2774 = vadd.xlane.f32.xlu0 %v2773
    %v2775 = vpop.xlane.xlu0 %2774
    %v2776 = vrcp.pop %v2772
    %v2777 = vrcp.pop %v2775
    %v2778 = vmul.f32 %v2767, %v2776
    %v2779 = vmul.f32 %v2769, %v2777
    %v2780 = vpack.c.bf16 %v2778, %v2778
    %v2781 = vpack.c.bf16 %v2779, %v2779
    %2782 = vrot.lane.b32.xlu0 %v1998, 104
    %v2783 = vpop.permute.xlu0 %2782
    %v2785 = vsel %vm634, %v2780, 0
    %v2788 = vsel %vm754, %v2783, 0
    %2790 = vmatprep.subr.bf16.mxu0 0
    %2791 = vmatpush1.bf16.msra.mxu0 %v2788
    %2792 = vmatprep.subr.bf16.mxu0 0
    %2793 = vmatpush1.bf16.msra.mxu0 0
    %2794 = vmatprep.subr.bf16.mxu0 0
    %2795 = vmatpush1.bf16.msra.mxu0 0
    %2796 = vmatprep.subr.bf16.mxu0 0
    %2797 = vmatpush1.bf16.msra.mxu0 0
    %2798 = vmatprep.subr.bf16.mxu0 0
    %2799 = vmatpush1.bf16.msra.mxu0 0
    %2800 = vmatprep.subr.bf16.mxu0 0
    %2801 = vmatpush1.bf16.msra.mxu0 0
    %2802 = vmatprep.subr.bf16.mxu0 0
    %2803 = vmatpush1.bf16.msra.mxu0 0
    %2804 = vmatprep.subr.bf16.mxu0 0
    %2805 = vmatpush1.bf16.msra.mxu0 0
    %2806 = vmatprep.subr.bf16.mxu0 0
    %2807 = vmatpush1.bf16.msra.mxu0 0
    %2808 = vmatprep.subr.bf16.mxu0 0
    %2809 = vmatpush1.bf16.msra.mxu0 0
    %2810 = vmatprep.subr.bf16.mxu0 0
    %2811 = vmatpush1.bf16.msra.mxu0 0
    %2812 = vmatprep.subr.bf16.mxu0 0
    %2813 = vmatpush1.bf16.msra.mxu0 0
    %2814 = vmatprep.subr.bf16.mxu0 0
    %2815 = vmatpush1.bf16.msra.mxu0 0
    %2816 = vmatprep.subr.bf16.mxu0 0
    %2817 = vmatpush1.bf16.msra.mxu0 0
    %2818 = vmatprep.subr.bf16.mxu0 0
    %2819 = vmatpush1.bf16.msra.mxu0 0
    %2820 = vmatprep.subr.bf16.mxu0 0
    %2821 = vmatpush1.bf16.msra.mxu0 0
    %2822 = vmatprep.mubr.bf16.mxu0 0
    %2823 = vmatmul.mubr.bf16.gmra.mrb[0].mxu0 %v2785
    %v2824 = vpop.f32.mrb[0].mxu0
    %v2825 = vadd.f32 0.0, %v2824
    %v2826 = vpop.f32.mrb[0].mxu0
    %v2827 = vpop.f32.mrb[0].mxu0
    %v2828 = vpop.f32.mrb[0].mxu0
    %2829 = vdwg.mxu0
    %2830 = vrot.lane.b32.xlu0 %v1999, 104
    %v2831 = vpop.permute.xlu0 %2830
    %v2833 = vsel %vm634, %v2781, 0
    %v2836 = vsel %vm754, %v2831, 0
    %2838 = vmatprep.subr.bf16.mxu0 0
    %2839 = vmatpush1.bf16.msra.mxu0 %v2836
    %2840 = vmatprep.subr.bf16.mxu0 0
    %2841 = vmatpush1.bf16.msra.mxu0 0
    %2842 = vmatprep.subr.bf16.mxu0 0
    %2843 = vmatpush1.bf16.msra.mxu0 0
    %2844 = vmatprep.subr.bf16.mxu0 0
    %2845 = vmatpush1.bf16.msra.mxu0 0
    %2846 = vmatprep.subr.bf16.mxu0 0
    %2847 = vmatpush1.bf16.msra.mxu0 0
    %2848 = vmatprep.subr.bf16.mxu0 0
    %2849 = vmatpush1.bf16.msra.mxu0 0
    %2850 = vmatprep.subr.bf16.mxu0 0
    %2851 = vmatpush1.bf16.msra.mxu0 0
    %2852 = vmatprep.subr.bf16.mxu0 0
    %2853 = vmatpush1.bf16.msra.mxu0 0
    %2854 = vmatprep.subr.bf16.mxu0 0
    %2855 = vmatpush1.bf16.msra.mxu0 0
    %2856 = vmatprep.subr.bf16.mxu0 0
    %2857 = vmatpush1.bf16.msra.mxu0 0
    %2858 = vmatprep.subr.bf16.mxu0 0
    %2859 = vmatpush1.bf16.msra.mxu0 0
    %2860 = vmatprep.subr.bf16.mxu0 0
    %2861 = vmatpush1.bf16.msra.mxu0 0
    %2862 = vmatprep.subr.bf16.mxu0 0
    %2863 = vmatpush1.bf16.msra.mxu0 0
    %2864 = vmatprep.subr.bf16.mxu0 0
    %2865 = vmatpush1.bf16.msra.mxu0 0
    %2866 = vmatprep.subr.bf16.mxu0 0
    %2867 = vmatpush1.bf16.msra.mxu0 0
    %2868 = vmatprep.subr.bf16.mxu0 0
    %2869 = vmatpush1.bf16.msra.mxu0 0
    %2870 = vmatprep.mubr.bf16.mxu0 0
    %2871 = vmatmul.mubr.bf16.gmra.mrb[0].mxu0 %v2833
    %v2872 = vpop.f32.mrb[0].mxu0
    %v2873 = vadd.f32 0.0, %v2872
    %v2874 = vpop.f32.mrb[0].mxu0
    %v2875 = vpop.f32.mrb[0].mxu0
    %v2876 = vpop.f32.mrb[0].mxu0
    %2877 = vdwg.mxu0
    %2880 = vrot.lane.b32.xlu0 %v2384, 8
    %v2881 = vpop.permute.xlu0 %2880
    %2882 = vrot.lane.b32.xlu0 %v2433, 8
    %v2883 = vpop.permute.xlu0 %2882
    %2888 = vrot.lane.b32.xlu0 %v2605, 16
    %v2889 = vpop.permute.xlu0 %2888
    %2890 = vrot.lane.b32.xlu0 %v2653, 16
    %v2891 = vpop.permute.xlu0 %2890
    %2896 = vrot.lane.b32.xlu0 %v2825, 24
    %v2897 = vpop.permute.xlu0 %2896
    %2898 = vrot.lane.b32.xlu0 %v2873, 24
    %v2899 = vpop.permute.xlu0 %2898
    %v2902 = vsel %vm634, %v2161, %v2881
    %v2903 = vsel %vm634, %v2207, %v2883
    %v2904 = vsel %vm335, %v2902, %v2889
    %v2905 = vsel %vm335, %v2903, %v2891
    %v2906 = vsel %vm1538, %v2904, %v2897
    %v2907 = vsel %vm1538, %v2905, %v2899
    %v2908 = vadd.f32 %v1742, %v2906
    %v2909 = vadd.f32 %v1743, %v2907
    %s2910 = scalar_lea.vmem [#allocation21], 1
    %v2911 = vld [vmem:[%s2910] sm:$0x1]
    %s2912 = scalar_lea.vmem [#allocation22], 1
    %v2913 = vld [vmem:[%s2912] sm:$0x1]
    %v2914 = vsel %vm382, %v2908, 0.0
    %2915 = vadd.xlane.f32.xlu0 %v2914
    %v2916 = vpop.xlane.xlu0 %2915
    %v2917 = vsel %vm382, %v2909, 0.0
    %2918 = vadd.xlane.f32.xlu0 %v2917
    %v2919 = vpop.xlane.xlu0 %2918
    %v2920 = vmul.f32 %v2916, %v389
    %v2921 = vmul.f32 %v2919, %v389
    %v2922 = vsub.f32 %v2908, %v2920
    %v2923 = vsub.f32 %v2909, %v2921
    %v2924 = vmul.f32 %v2922, %v2922
    %v2925 = vmul.f32 %v2923, %v2923
    %v2926 = vsel %vm382, %v2924, 0.0
    %2927 = vadd.xlane.f32.xlu0 %v2926
    %v2928 = vpop.xlane.xlu0 %2927
    %v2929 = vsel %vm382, %v2925, 0.0
    %2930 = vadd.xlane.f32.xlu0 %v2929
    %v2931 = vpop.xlane.xlu0 %2930
    %v2932 = vmul.f32 %v2928, %v389
    %v2933 = vmul.f32 %v2931, %v389
    %v2934 = vadd.f32 %v2932, 1e-05
    %v2935 = vadd.f32 %v2933, 1e-05
    %v2936 = vrsqrt.pop %v2934
    %v2937 = vrsqrt.pop %v2935
    %v2938 = vmul.f32 %v2922, %v2936
    %v2939 = vmul.f32 %v2923, %v2937
    %v2941 = vlaneseq
    %v2942 = vshrl.u32 %v2941, 7
    %v2943 = vsub.s32 0, %v2942
    %v2944 = vrot.slane %v2911, %v2943
    %v2946 = vmul.f32 %v2938, %v2944
    %v2947 = vmul.f32 %v2939, %v2944
    %v2949 = vlaneseq
    %v2950 = vshrl.u32 %v2949, 7
    %v2951 = vsub.s32 0, %v2950
    %v2952 = vrot.slane %v2913, %v2951
    %v2954 = vadd.f32 %v2946, %v2952
    %v2955 = vadd.f32 %v2947, %v2952
    %s2956 = scalar_lea.vmem [#allocation24], 16
    %v2957 = vld [vmem:[%s2956] sm:$0xf]
    %v2958 = vld [vmem:[%s2956 + $0x4] sm:$0xf]
    %v2959 = vld [vmem:[%s2956 + $0x8] sm:$0xf]
    %v2960 = vld [vmem:[%s2956 + $0xc] sm:$0xf]
    %s2961 = scalar_lea.vmem [#allocation25], 1
    %v2962 = vld [vmem:[%s2961] sm:$0x1]
    %v2963 = vpack.c.bf16 %v2955, %v2954
    %v2965 = vlaneseq
    %v2966 = vshrl.u32 %v2965, 7
    %v2967 = vsub.s32 0, %v2966
    %v2968 = vrot.slane %v2962, %v2967
    %v2974 = vunpack.c.l.b16 %v2957
    %v2975 = vunpack.c.l.b16 %v2958
    %v2976 = vunpack.c.l.b16 %v2959
    %v2977 = vunpack.c.l.b16 %v2960
    %v2978 = vpack.c.b16 %v2975, %v2974
    %v2979 = vpack.c.b16 %v2977, %v2976
    %v2983 = vsel %vm382, %v2963, 0
    %2985 = vmatprep.subr.bf16.mxu0 0
    %2986 = vmatpush1.bf16.msra.mxu0 %v2978
    %2987 = vmatprep.subr.bf16.mxu0 0
    %2988 = vmatpush1.bf16.msra.mxu0 %v2979
    %2989 = vmatprep.subr.bf16.mxu0 0
    %2990 = vmatpush1.bf16.msra.mxu0 0
    %2991 = vmatprep.subr.bf16.mxu0 0
    %2992 = vmatpush1.bf16.msra.mxu0 0
    %2993 = vmatprep.subr.bf16.mxu0 0
    %2994 = vmatpush1.bf16.msra.mxu0 0
    %2995 = vmatprep.subr.bf16.mxu0 0
    %2996 = vmatpush1.bf16.msra.mxu0 0
    %2997 = vmatprep.subr.bf16.mxu0 0
    %2998 = vmatpush1.bf16.msra.mxu0 0
    %2999 = vmatprep.subr.bf16.mxu0 0
    %3000 = vmatpush1.bf16.msra.mxu0 0
    %3001 = vmatprep.subr.bf16.mxu0 0
    %3002 = vmatpush1.bf16.msra.mxu0 0
    %3003 = vmatprep.subr.bf16.mxu0 0
    %3004 = vmatpush1.bf16.msra.mxu0 0
    %3005 = vmatprep.subr.bf16.mxu0 0
    %3006 = vmatpush1.bf16.msra.mxu0 0
    %3007 = vmatprep.subr.bf16.mxu0 0
    %3008 = vmatpush1.bf16.msra.mxu0 0
    %3009 = vmatprep.subr.bf16.mxu0 0
    %3010 = vmatpush1.bf16.msra.mxu0 0
    %3011 = vmatprep.subr.bf16.mxu0 0
    %3012 = vmatpush1.bf16.msra.mxu0 0
    %3013 = vmatprep.subr.bf16.mxu0 0
    %3014 = vmatpush1.bf16.msra.mxu0 0
    %3015 = vmatprep.subr.bf16.mxu0 0
    %3016 = vmatpush1.bf16.msra.mxu0 0
    %3017 = vmatprep.mubr.bf16.mxu0 0
    %3018 = vmatmul.mubr.bf16.gmra.mrb[0].mxu0 %v2983
    %v3019 = vpop.f32.mrb[0].mxu0
    %v3020 = vadd.f32 %v2968, %v3019
    %v3021 = vpop.f32.mrb[0].mxu0
    %v3022 = vpop.f32.mrb[0].mxu0
    %v3023 = vadd.f32 %v2968, %v3022
    %v3024 = vpop.f32.mrb[0].mxu0
    %3025 = vdwg.mxu0
    %v3026 = vmax.f32 %v3020, 0.0
    %v3027 = vmax.f32 %v3023, 0.0
    %s3028 = scalar_lea.vmem %s17, 32
    %v3029 = vld [vmem:[%s3028] sm:$0xf]
    %v3030 = vld [vmem:[%s3028 + $0x4] sm:$0xf]
    %v3031 = vld [vmem:[%s3028 + $0x8] sm:$0xf]
    %v3032 = vld [vmem:[%s3028 + $0xc] sm:$0xf]
    %v3033 = vld [vmem:[%s3028 + $0x10] sm:$0xf]
    %v3034 = vld [vmem:[%s3028 + $0x14] sm:$0xf]
    %v3035 = vld [vmem:[%s3028 + $0x18] sm:$0xf]
    %v3036 = vld [vmem:[%s3028 + $0x1c] sm:$0xf]
    %s3037 = scalar_lea.vmem [#allocation27], 1
    %v3038 = vld [vmem:[%s3037] sm:$0x1]
    %v3039 = vpack.c.bf16 %v3027, %v3026
    %v3041 = vlaneseq
    %v3042 = vshrl.u32 %v3041, 7
    %v3043 = vsub.s32 0, %v3042
    %v3044 = vrot.slane %v3038, %v3043
    %v3054 = vunpack.c.l.b16 %v3029
    %v3055 = vunpack.c.l.b16 %v3030
    %v3056 = vunpack.c.l.b16 %v3031
    %v3057 = vunpack.c.l.b16 %v3032
    %v3058 = vunpack.c.l.b16 %v3033
    %v3059 = vunpack.c.l.b16 %v3034
    %v3060 = vunpack.c.l.b16 %v3035
    %v3061 = vunpack.c.l.b16 %v3036
    %v3062 = vpack.c.b16 %v3055, %v3054
    %v3063 = vpack.c.b16 %v3057, %v3056
    %v3064 = vpack.c.b16 %v3059, %v3058
    %v3065 = vpack.c.b16 %v3061, %v3060
    %v3071 = vsel %vm1697, %v3039, 0
    %3073 = vmatprep.subr.bf16.mxu0 0
    %3074 = vmatpush1.bf16.msra.mxu0 %v3062
    %3075 = vmatprep.subr.bf16.mxu0 0
    %3076 = vmatpush1.bf16.msra.mxu0 %v3063
    %3077 = vmatprep.subr.bf16.mxu0 0
    %3078 = vmatpush1.bf16.msra.mxu0 %v3064
    %3079 = vmatprep.subr.bf16.mxu0 0
    %3080 = vmatpush1.bf16.msra.mxu0 %v3065
    %3081 = vmatprep.subr.bf16.mxu0 0
    %3082 = vmatpush1.bf16.msra.mxu0 0
    %3083 = vmatprep.subr.bf16.mxu0 0
    %3084 = vmatpush1.bf16.msra.mxu0 0
    %3085 = vmatprep.subr.bf16.mxu0 0
    %3086 = vmatpush1.bf16.msra.mxu0 0
    %3087 = vmatprep.subr.bf16.mxu0 0
    %3088 = vmatpush1.bf16.msra.mxu0 0
    %3089 = vmatprep.subr.bf16.mxu0 0
    %3090 = vmatpush1.bf16.msra.mxu0 0
    %3091 = vmatprep.subr.bf16.mxu0 0
    %3092 = vmatpush1.bf16.msra.mxu0 0
    %3093 = vmatprep.subr.bf16.mxu0 0
    %3094 = vmatpush1.bf16.msra.mxu0 0
    %3095 = vmatprep.subr.bf16.mxu0 0
    %3096 = vmatpush1.bf16.msra.mxu0 0
    %3097 = vmatprep.subr.bf16.mxu0 0
    %3098 = vmatpush1.bf16.msra.mxu0 0
    %3099 = vmatprep.subr.bf16.mxu0 0
    %3100 = vmatpush1.bf16.msra.mxu0 0
    %3101 = vmatprep.subr.bf16.mxu0 0
    %3102 = vmatpush1.bf16.msra.mxu0 0
    %3103 = vmatprep.subr.bf16.mxu0 0
    %3104 = vmatpush1.bf16.msra.mxu0 0
    %3105 = vmatprep.mubr.bf16.mxu0 0
    %3106 = vmatmul.mubr.bf16.gmra.mrb[0].mxu0 %v3071
    %v3107 = vpop.f32.mrb[0].mxu0
    %v3108 = vadd.f32 %v3044, %v3107
    %v3109 = vpop.f32.mrb[0].mxu0
    %v3110 = vpop.f32.mrb[0].mxu0
    %v3111 = vadd.f32 %v3044, %v3110
    %v3112 = vpop.f32.mrb[0].mxu0
    %3113 = vdwg.mxu0
    %v3114 = vadd.f32 %v2908, %v3108
    %v3115 = vadd.f32 %v2909, %v3111
    %v3116 = vld [vmem:[%s19] sm:$0xf]
    %v3117 = vld [vmem:[%s19 + $0x4] sm:$0xf]
    %v3118 = vld [vmem:[%s19 + $0x8] sm:$0xf]
    %v3119 = vld [vmem:[%s19 + $0xc] sm:$0xf]
    %v3120 = vpack.c.bf16 %v3114, %v3114
    %v3121 = vpack.c.bf16 %v3115, %v3115
    %s3122 = scalar_lea.vmem %s19, 16
    %v3123 = vld [vmem:[%s3122] sm:$0xf]
    %v3124 = vld [vmem:[%s3122 + $0x4] sm:$0xf]
    %v3125 = vld [vmem:[%s3122 + $0x8] sm:$0xf]
    %v3126 = vld [vmem:[%s3122 + $0xc] sm:$0xf]
    %v3129 = vunpack.c.l.b16 %v3120
    %v3130 = vunpack.c.l.b16 %v3121
    %v3131 = vrot.slane %v3129, 1
    %vm3132 = vcmask 1041409
    %v3133 = vsel %vm3132, %v3130, %v3131
    %v3134 = vpack.c.b16 %v3133, %v3133
    %v3139 = vunpack.c.l.b16 %v3123
    %v3140 = vunpack.c.l.b16 %v3124
    %v3141 = vunpack.c.l.b16 %v3125
    %v3142 = vunpack.c.l.b16 %v3126
    %v3143 = vpack.c.b16 %v3140, %v3139
    %v3144 = vpack.c.b16 %v3142, %v3141
    %v3148 = vsel %vm382, %v3134, 0
    %3150 = vmatprep.subr.bf16.mxu0 0
    %3151 = vmatpush1.bf16.msra.mxu0 %v3143
    %3152 = vmatprep.subr.bf16.mxu0 0
    %3153 = vmatpush1.bf16.msra.mxu0 %v3144
    %3154 = vmatprep.subr.bf16.mxu0 0
    %3155 = vmatpush1.bf16.msra.mxu0 0
    %3156 = vmatprep.subr.bf16.mxu0 0
    %3157 = vmatpush1.bf16.msra.mxu0 0
    %3158 = vmatprep.subr.bf16.mxu0 0
    %3159 = vmatpush1.bf16.msra.mxu0 0
    %3160 = vmatprep.subr.bf16.mxu0 0
    %3161 = vmatpush1.bf16.msra.mxu0 0
    %3162 = vmatprep.subr.bf16.mxu0 0
    %3163 = vmatpush1.bf16.msra.mxu0 0
    %3164 = vmatprep.subr.bf16.mxu0 0
    %3165 = vmatpush1.bf16.msra.mxu0 0
    %3166 = vmatprep.subr.bf16.mxu0 0
    %3167 = vmatpush1.bf16.msra.mxu0 0
    %3168 = vmatprep.subr.bf16.mxu0 0
    %3169 = vmatpush1.bf16.msra.mxu0 0
    %3170 = vmatprep.subr.bf16.mxu0 0
    %3171 = vmatpush1.bf16.msra.mxu0 0
    %3172 = vmatprep.subr.bf16.mxu0 0
    %3173 = vmatpush1.bf16.msra.mxu0 0
    %3174 = vmatprep.subr.bf16.mxu0 0
    %3175 = vmatpush1.bf16.msra.mxu0 0
    %3176 = vmatprep.subr.bf16.mxu0 0
    %3177 = vmatpush1.bf16.msra.mxu0 0
    %3178 = vmatprep.subr.bf16.mxu0 0
    %3179 = vmatpush1.bf16.msra.mxu0 0
    %3180 = vmatprep.subr.bf16.mxu0 0
    %3181 = vmatpush1.bf16.msra.mxu0 0
    %3182 = vmatprep.mubr.bf16.mxu0 0
    %3183 = vmatmul.mubr.bf16.gmra.mrb[0].mxu0 %v3148
    %v3184 = vpop.f32.mrb[0].mxu0
    %v3185 = vadd.f32 0.0, %v3184
    %v3186 = vpop.f32.mrb[0].mxu0
    %v3187 = vpop.f32.mrb[0].mxu0
    %v3188 = vpop.f32.mrb[0].mxu0
    %3189 = vdwg.mxu0
    %v3190 = vrot.slane %v3130, 7
    %v3191 = vsel %vm3132, %v3190, %v3129
    %v3192 = vpack.c.b16 %v3191, %v3191
    %v3197 = vunpack.c.l.b16 %v3116
    %v3198 = vunpack.c.l.b16 %v3117
    %v3199 = vunpack.c.l.b16 %v3118
    %v3200 = vunpack.c.l.b16 %v3119
    %v3201 = vpack.c.b16 %v3198, %v3197
    %v3202 = vpack.c.b16 %v3200, %v3199
    %v3206 = vsel %vm382, %v3192, 0
    %3208 = vmatprep.subr.bf16.mxu0 0
    %3209 = vmatpush1.bf16.msra.mxu0 %v3201
    %3210 = vmatprep.subr.bf16.mxu0 0
    %3211 = vmatpush1.bf16.msra.mxu0 %v3202
    %3212 = vmatprep.subr.bf16.mxu0 0
    %3213 = vmatpush1.bf16.msra.mxu0 0
    %3214 = vmatprep.subr.bf16.mxu0 0
    %3215 = vmatpush1.bf16.msra.mxu0 0
    %3216 = vmatprep.subr.bf16.mxu0 0
    %3217 = vmatpush1.bf16.msra.mxu0 0
    %3218 = vmatprep.subr.bf16.mxu0 0
    %3219 = vmatpush1.bf16.msra.mxu0 0
    %3220 = vmatprep.subr.bf16.mxu0 0
    %3221 = vmatpush1.bf16.msra.mxu0 0
    %3222 = vmatprep.subr.bf16.mxu0 0
    %3223 = vmatpush1.bf16.msra.mxu0 0
    %3224 = vmatprep.subr.bf16.mxu0 0
    %3225 = vmatpush1.bf16.msra.mxu0 0
    %3226 = vmatprep.subr.bf16.mxu0 0
    %3227 = vmatpush1.bf16.msra.mxu0 0
    %3228 = vmatprep.subr.bf16.mxu0 0
    %3229 = vmatpush1.bf16.msra.mxu0 0
    %3230 = vmatprep.subr.bf16.mxu0 0
    %3231 = vmatpush1.bf16.msra.mxu0 0
    %3232 = vmatprep.subr.bf16.mxu0 0
    %3233 = vmatpush1.bf16.msra.mxu0 0
    %3234 = vmatprep.subr.bf16.mxu0 0
    %3235 = vmatpush1.bf16.msra.mxu0 0
    %3236 = vmatprep.subr.bf16.mxu0 0
    %3237 = vmatpush1.bf16.msra.mxu0 0
    %3238 = vmatprep.subr.bf16.mxu0 0
    %3239 = vmatpush1.bf16.msra.mxu0 0
    %3240 = vmatprep.mubr.bf16.mxu0 0
    %3241 = vmatmul.mubr.bf16.gmra.mrb[0].mxu0 %v3206
    %v3242 = vpop.f32.mrb[0].mxu0
    %v3243 = vadd.f32 %v3185, %v3242
    %v3244 = vpop.f32.mrb[0].mxu0
    %v3245 = vpop.f32.mrb[0].mxu0
    %v3246 = vpop.f32.mrb[0].mxu0
    %3247 = vdwg.mxu0
    %s3248 = scalar_lea.vmem %s19, 32
    %v3249 = vld [vmem:[%s3248] sm:$0xf]
    %v3250 = vld [vmem:[%s3248 + $0x4] sm:$0xf]
    %v3251 = vld [vmem:[%s3248 + $0x8] sm:$0xf]
    %v3252 = vld [vmem:[%s3248 + $0xc] sm:$0xf]
    %v3253 = vrot.slane %v3129, 2
    %v3254 = vrot.slane %v3130, 1
    %v3255 = vsel %vm3132, %v3254, %v3253
    %v3256 = vpack.c.b16 %v3255, %v3255
    %v3261 = vunpack.c.l.b16 %v3249
    %v3262 = vunpack.c.l.b16 %v3250
    %v3263 = vunpack.c.l.b16 %v3251
    %v3264 = vunpack.c.l.b16 %v3252
    %v3265 = vpack.c.b16 %v3262, %v3261
    %v3266 = vpack.c.b16 %v3264, %v3263
    %v3270 = vsel %vm382, %v3256, 0
    %3272 = vmatprep.subr.bf16.mxu0 0
    %3273 = vmatpush1.bf16.msra.mxu0 %v3265
    %3274 = vmatprep.subr.bf16.mxu0 0
    %3275 = vmatpush1.bf16.msra.mxu0 %v3266
    %3276 = vmatprep.subr.bf16.mxu0 0
    %3277 = vmatpush1.bf16.msra.mxu0 0
    %3278 = vmatprep.subr.bf16.mxu0 0
    %3279 = vmatpush1.bf16.msra.mxu0 0
    %3280 = vmatprep.subr.bf16.mxu0 0
    %3281 = vmatpush1.bf16.msra.mxu0 0
    %3282 = vmatprep.subr.bf16.mxu0 0
    %3283 = vmatpush1.bf16.msra.mxu0 0
    %3284 = vmatprep.subr.bf16.mxu0 0
    %3285 = vmatpush1.bf16.msra.mxu0 0
    %3286 = vmatprep.subr.bf16.mxu0 0
    %3287 = vmatpush1.bf16.msra.mxu0 0
    %3288 = vmatprep.subr.bf16.mxu0 0
    %3289 = vmatpush1.bf16.msra.mxu0 0
    %3290 = vmatprep.subr.bf16.mxu0 0
    %3291 = vmatpush1.bf16.msra.mxu0 0
    %3292 = vmatprep.subr.bf16.mxu0 0
    %3293 = vmatpush1.bf16.msra.mxu0 0
    %3294 = vmatprep.subr.bf16.mxu0 0
    %3295 = vmatpush1.bf16.msra.mxu0 0
    %3296 = vmatprep.subr.bf16.mxu0 0
    %3297 = vmatpush1.bf16.msra.mxu0 0
    %3298 = vmatprep.subr.bf16.mxu0 0
    %3299 = vmatpush1.bf16.msra.mxu0 0
    %3300 = vmatprep.subr.bf16.mxu0 0
    %3301 = vmatpush1.bf16.msra.mxu0 0
    %3302 = vmatprep.subr.bf16.mxu0 0
    %3303 = vmatpush1.bf16.msra.mxu0 0
    %3304 = vmatprep.mubr.bf16.mxu0 0
    %3305 = vmatmul.mubr.bf16.gmra.mrb[0].mxu0 %v3270
    %v3306 = vpop.f32.mrb[0].mxu0
    %v3307 = vadd.f32 0.0, %v3306
    %v3308 = vpop.f32.mrb[0].mxu0
    %v3309 = vpop.f32.mrb[0].mxu0
    %v3310 = vpop.f32.mrb[0].mxu0
    %3311 = vdwg.mxu0
    %v3312 = vadd.f32 %v3243, %v3307
    %s3313 = scalar_lea.vmem %s19, 48
    %v3314 = vld [vmem:[%s3313] sm:$0xf]
    %v3315 = vld [vmem:[%s3313 + $0x4] sm:$0xf]
    %v3316 = vld [vmem:[%s3313 + $0x8] sm:$0xf]
    %v3317 = vld [vmem:[%s3313 + $0xc] sm:$0xf]
    %v3318 = vrot.slane %v3129, 3
    %v3319 = vrot.slane %v3130, 2
    %v3320 = vsel %vm3132, %v3319, %v3318
    %v3321 = vpack.c.b16 %v3320, %v3320
    %v3326 = vunpack.c.l.b16 %v3314
    %v3327 = vunpack.c.l.b16 %v3315
    %v3328 = vunpack.c.l.b16 %v3316
    %v3329 = vunpack.c.l.b16 %v3317
    %v3330 = vpack.c.b16 %v3327, %v3326
    %v3331 = vpack.c.b16 %v3329, %v3328
    %v3335 = vsel %vm382, %v3321, 0
    %3337 = vmatprep.subr.bf16.mxu0 0
    %3338 = vmatpush1.bf16.msra.mxu0 %v3330
    %3339 = vmatprep.subr.bf16.mxu0 0
    %3340 = vmatpush1.bf16.msra.mxu0 %v3331
    %3341 = vmatprep.subr.bf16.mxu0 0
    %3342 = vmatpush1.bf16.msra.mxu0 0
    %3343 = vmatprep.subr.bf16.mxu0 0
    %3344 = vmatpush1.bf16.msra.mxu0 0
    %3345 = vmatprep.subr.bf16.mxu0 0
    %3346 = vmatpush1.bf16.msra.mxu0 0
    %3347 = vmatprep.subr.bf16.mxu0 0
    %3348 = vmatpush1.bf16.msra.mxu0 0
    %3349 = vmatprep.subr.bf16.mxu0 0
    %3350 = vmatpush1.bf16.msra.mxu0 0
    %3351 = vmatprep.subr.bf16.mxu0 0
    %3352 = vmatpush1.bf16.msra.mxu0 0
    %3353 = vmatprep.subr.bf16.mxu0 0
    %3354 = vmatpush1.bf16.msra.mxu0 0
    %3355 = vmatprep.subr.bf16.mxu0 0
    %3356 = vmatpush1.bf16.msra.mxu0 0
    %3357 = vmatprep.subr.bf16.mxu0 0
    %3358 = vmatpush1.bf16.msra.mxu0 0
    %3359 = vmatprep.subr.bf16.mxu0 0
    %3360 = vmatpush1.bf16.msra.mxu0 0
    %3361 = vmatprep.subr.bf16.mxu0 0
    %3362 = vmatpush1.bf16.msra.mxu0 0
    %3363 = vmatprep.subr.bf16.mxu0 0
    %3364 = vmatpush1.bf16.msra.mxu0 0
    %3365 = vmatprep.subr.bf16.mxu0 0
    %3366 = vmatpush1.bf16.msra.mxu0 0
    %3367 = vmatprep.subr.bf16.mxu0 0
    %3368 = vmatpush1.bf16.msra.mxu0 0
    %3369 = vmatprep.mubr.bf16.mxu0 0
    %3370 = vmatmul.mubr.bf16.gmra.mrb[0].mxu0 %v3335
    %v3371 = vpop.f32.mrb[0].mxu0
    %v3372 = vadd.f32 0.0, %v3371
    %v3373 = vpop.f32.mrb[0].mxu0
    %v3374 = vpop.f32.mrb[0].mxu0
    %v3375 = vpop.f32.mrb[0].mxu0
    %3376 = vdwg.mxu0
    %v3377 = vadd.f32 %v3312, %v3372
    %s3378 = scalar_lea.vmem %s19, 64
    %v3379 = vld [vmem:[%s3378] sm:$0xf]
    %v3380 = vld [vmem:[%s3378 + $0x4] sm:$0xf]
    %v3381 = vld [vmem:[%s3378 + $0x8] sm:$0xf]
    %v3382 = vld [vmem:[%s3378 + $0xc] sm:$0xf]
    %v3383 = vrot.slane %v3129, 4
    %v3384 = vrot.slane %v3130, 3
    %v3385 = vsel %vm3132, %v3384, %v3383
    %v3386 = vpack.c.b16 %v3385, %v3385
    %v3391 = vunpack.c.l.b16 %v3379
    %v3392 = vunpack.c.l.b16 %v3380
    %v3393 = vunpack.c.l.b16 %v3381
    %v3394 = vunpack.c.l.b16 %v3382
    %v3395 = vpack.c.b16 %v3392, %v3391
    %v3396 = vpack.c.b16 %v3394, %v3393
    %v3400 = vsel %vm382, %v3386, 0
    %3402 = vmatprep.subr.bf16.mxu0 0
    %3403 = vmatpush1.bf16.msra.mxu0 %v3395
    %3404 = vmatprep.subr.bf16.mxu0 0
    %3405 = vmatpush1.bf16.msra.mxu0 %v3396
    %3406 = vmatprep.subr.bf16.mxu0 0
    %3407 = vmatpush1.bf16.msra.mxu0 0
    %3408 = vmatprep.subr.bf16.mxu0 0
    %3409 = vmatpush1.bf16.msra.mxu0 0
    %3410 = vmatprep.subr.bf16.mxu0 0
    %3411 = vmatpush1.bf16.msra.mxu0 0
    %3412 = vmatprep.subr.bf16.mxu0 0
    %3413 = vmatpush1.bf16.msra.mxu0 0
    %3414 = vmatprep.subr.bf16.mxu0 0
    %3415 = vmatpush1.bf16.msra.mxu0 0
    %3416 = vmatprep.subr.bf16.mxu0 0
    %3417 = vmatpush1.bf16.msra.mxu0 0
    %3418 = vmatprep.subr.bf16.mxu0 0
    %3419 = vmatpush1.bf16.msra.mxu0 0
    %3420 = vmatprep.subr.bf16.mxu0 0
    %3421 = vmatpush1.bf16.msra.mxu0 0
    %3422 = vmatprep.subr.bf16.mxu0 0
    %3423 = vmatpush1.bf16.msra.mxu0 0
    %3424 = vmatprep.subr.bf16.mxu0 0
    %3425 = vmatpush1.bf16.msra.mxu0 0
    %3426 = vmatprep.subr.bf16.mxu0 0
    %3427 = vmatpush1.bf16.msra.mxu0 0
    %3428 = vmatprep.subr.bf16.mxu0 0
    %3429 = vmatpush1.bf16.msra.mxu0 0
    %3430 = vmatprep.subr.bf16.mxu0 0
    %3431 = vmatpush1.bf16.msra.mxu0 0
    %3432 = vmatprep.subr.bf16.mxu0 0
    %3433 = vmatpush1.bf16.msra.mxu0 0
    %3434 = vmatprep.mubr.bf16.mxu0 0
    %3435 = vmatmul.mubr.bf16.gmra.mrb[0].mxu0 %v3400
    %v3436 = vpop.f32.mrb[0].mxu0
    %v3437 = vadd.f32 0.0, %v3436
    %v3438 = vpop.f32.mrb[0].mxu0
    %v3439 = vpop.f32.mrb[0].mxu0
    %v3440 = vpop.f32.mrb[0].mxu0
    %3441 = vdwg.mxu0
    %v3442 = vadd.f32 %v3377, %v3437
    %s3443 = scalar_lea.vmem %s19, 80
    %v3444 = vld [vmem:[%s3443] sm:$0xf]
    %v3445 = vld [vmem:[%s3443 + $0x4] sm:$0xf]
    %v3446 = vld [vmem:[%s3443 + $0x8] sm:$0xf]
    %v3447 = vld [vmem:[%s3443 + $0xc] sm:$0xf]
    %v3448 = vrot.slane %v3129, 5
    %v3449 = vrot.slane %v3130, 4
    %v3450 = vsel %vm3132, %v3449, %v3448
    %v3451 = vpack.c.b16 %v3450, %v3450
    %v3456 = vunpack.c.l.b16 %v3444
    %v3457 = vunpack.c.l.b16 %v3445
    %v3458 = vunpack.c.l.b16 %v3446
    %v3459 = vunpack.c.l.b16 %v3447
    %v3460 = vpack.c.b16 %v3457, %v3456
    %v3461 = vpack.c.b16 %v3459, %v3458
    %v3465 = vsel %vm382, %v3451, 0
    %3467 = vmatprep.subr.bf16.mxu0 0
    %3468 = vmatpush1.bf16.msra.mxu0 %v3460
    %3469 = vmatprep.subr.bf16.mxu0 0
    %3470 = vmatpush1.bf16.msra.mxu0 %v3461
    %3471 = vmatprep.subr.bf16.mxu0 0
    %3472 = vmatpush1.bf16.msra.mxu0 0
    %3473 = vmatprep.subr.bf16.mxu0 0
    %3474 = vmatpush1.bf16.msra.mxu0 0
    %3475 = vmatprep.subr.bf16.mxu0 0
    %3476 = vmatpush1.bf16.msra.mxu0 0
    %3477 = vmatprep.subr.bf16.mxu0 0
    %3478 = vmatpush1.bf16.msra.mxu0 0
    %3479 = vmatprep.subr.bf16.mxu0 0
    %3480 = vmatpush1.bf16.msra.mxu0 0
    %3481 = vmatprep.subr.bf16.mxu0 0
    %3482 = vmatpush1.bf16.msra.mxu0 0
    %3483 = vmatprep.subr.bf16.mxu0 0
    %3484 = vmatpush1.bf16.msra.mxu0 0
    %3485 = vmatprep.subr.bf16.mxu0 0
    %3486 = vmatpush1.bf16.msra.mxu0 0
    %3487 = vmatprep.subr.bf16.mxu0 0
    %3488 = vmatpush1.bf16.msra.mxu0 0
    %3489 = vmatprep.subr.bf16.mxu0 0
    %3490 = vmatpush1.bf16.msra.mxu0 0
    %3491 = vmatprep.subr.bf16.mxu0 0
    %3492 = vmatpush1.bf16.msra.mxu0 0
    %3493 = vmatprep.subr.bf16.mxu0 0
    %3494 = vmatpush1.bf16.msra.mxu0 0
    %3495 = vmatprep.subr.bf16.mxu0 0
    %3496 = vmatpush1.bf16.msra.mxu0 0
    %3497 = vmatprep.subr.bf16.mxu0 0
    %3498 = vmatpush1.bf16.msra.mxu0 0
    %3499 = vmatprep.mubr.bf16.mxu0 0
    %3500 = vmatmul.mubr.bf16.gmra.mrb[0].mxu0 %v3465
    %v3501 = vpop.f32.mrb[0].mxu0
    %v3502 = vadd.f32 0.0, %v3501
    %v3503 = vpop.f32.mrb[0].mxu0
    %v3504 = vpop.f32.mrb[0].mxu0
    %v3505 = vpop.f32.mrb[0].mxu0
    %3506 = vdwg.mxu0
    %v3507 = vadd.f32 %v3442, %v3502
    %s3508 = scalar_lea.vmem %s19, 96
    %v3509 = vld [vmem:[%s3508] sm:$0xf]
    %v3510 = vld [vmem:[%s3508 + $0x4] sm:$0xf]
    %v3511 = vld [vmem:[%s3508 + $0x8] sm:$0xf]
    %v3512 = vld [vmem:[%s3508 + $0xc] sm:$0xf]
    %v3513 = vrot.slane %v3129, 6
    %v3514 = vrot.slane %v3130, 5
    %v3515 = vsel %vm3132, %v3514, %v3513
    %v3516 = vpack.c.b16 %v3515, %v3515
    %v3521 = vunpack.c.l.b16 %v3509
    %v3522 = vunpack.c.l.b16 %v3510
    %v3523 = vunpack.c.l.b16 %v3511
    %v3524 = vunpack.c.l.b16 %v3512
    %v3525 = vpack.c.b16 %v3522, %v3521
    %v3526 = vpack.c.b16 %v3524, %v3523
    %v3530 = vsel %vm382, %v3516, 0
    %3532 = vmatprep.subr.bf16.mxu0 0
    %3533 = vmatpush1.bf16.msra.mxu0 %v3525
    %3534 = vmatprep.subr.bf16.mxu0 0
    %3535 = vmatpush1.bf16.msra.mxu0 %v3526
    %3536 = vmatprep.subr.bf16.mxu0 0
    %3537 = vmatpush1.bf16.msra.mxu0 0
    %3538 = vmatprep.subr.bf16.mxu0 0
    %3539 = vmatpush1.bf16.msra.mxu0 0
    %3540 = vmatprep.subr.bf16.mxu0 0
    %3541 = vmatpush1.bf16.msra.mxu0 0
    %3542 = vmatprep.subr.bf16.mxu0 0
    %3543 = vmatpush1.bf16.msra.mxu0 0
    %3544 = vmatprep.subr.bf16.mxu0 0
    %3545 = vmatpush1.bf16.msra.mxu0 0
    %3546 = vmatprep.subr.bf16.mxu0 0
    %3547 = vmatpush1.bf16.msra.mxu0 0
    %3548 = vmatprep.subr.bf16.mxu0 0
    %3549 = vmatpush1.bf16.msra.mxu0 0
    %3550 = vmatprep.subr.bf16.mxu0 0
    %3551 = vmatpush1.bf16.msra.mxu0 0
    %3552 = vmatprep.subr.bf16.mxu0 0
    %3553 = vmatpush1.bf16.msra.mxu0 0
    %3554 = vmatprep.subr.bf16.mxu0 0
    %3555 = vmatpush1.bf16.msra.mxu0 0
    %3556 = vmatprep.subr.bf16.mxu0 0
    %3557 = vmatpush1.bf16.msra.mxu0 0
    %3558 = vmatprep.subr.bf16.mxu0 0
    %3559 = vmatpush1.bf16.msra.mxu0 0
    %3560 = vmatprep.subr.bf16.mxu0 0
    %3561 = vmatpush1.bf16.msra.mxu0 0
    %3562 = vmatprep.subr.bf16.mxu0 0
    %3563 = vmatpush1.bf16.msra.mxu0 0
    %3564 = vmatprep.mubr.bf16.mxu0 0
    %3565 = vmatmul.mubr.bf16.gmra.mrb[0].mxu0 %v3530
    %v3566 = vpop.f32.mrb[0].mxu0
    %v3567 = vadd.f32 0.0, %v3566
    %v3568 = vpop.f32.mrb[0].mxu0
    %v3569 = vpop.f32.mrb[0].mxu0
    %v3570 = vpop.f32.mrb[0].mxu0
    %3571 = vdwg.mxu0
    %v3572 = vadd.f32 %v3507, %v3567
    %s3573 = scalar_lea.vmem %s19, 112
    %v3574 = vld [vmem:[%s3573] sm:$0xf]
    %v3575 = vld [vmem:[%s3573 + $0x4] sm:$0xf]
    %v3576 = vld [vmem:[%s3573 + $0x8] sm:$0xf]
    %v3577 = vld [vmem:[%s3573 + $0xc] sm:$0xf]
    %v3578 = vrot.slane %v3129, 7
    %v3579 = vrot.slane %v3130, 6
    %v3580 = vsel %vm3132, %v3579, %v3578
    %v3581 = vpack.c.b16 %v3580, %v3580
    %v3586 = vunpack.c.l.b16 %v3574
    %v3587 = vunpack.c.l.b16 %v3575
    %v3588 = vunpack.c.l.b16 %v3576
    %v3589 = vunpack.c.l.b16 %v3577
    %v3590 = vpack.c.b16 %v3587, %v3586
    %v3591 = vpack.c.b16 %v3589, %v3588
    %v3595 = vsel %vm382, %v3581, 0
    %3597 = vmatprep.subr.bf16.mxu0 0
    %3598 = vmatpush1.bf16.msra.mxu0 %v3590
    %3599 = vmatprep.subr.bf16.mxu0 0
    %3600 = vmatpush1.bf16.msra.mxu0 %v3591
    %3601 = vmatprep.subr.bf16.mxu0 0
    %3602 = vmatpush1.bf16.msra.mxu0 0
    %3603 = vmatprep.subr.bf16.mxu0 0
    %3604 = vmatpush1.bf16.msra.mxu0 0
    %3605 = vmatprep.subr.bf16.mxu0 0
    %3606 = vmatpush1.bf16.msra.mxu0 0
    %3607 = vmatprep.subr.bf16.mxu0 0
    %3608 = vmatpush1.bf16.msra.mxu0 0
    %3609 = vmatprep.subr.bf16.mxu0 0
    %3610 = vmatpush1.bf16.msra.mxu0 0
    %3611 = vmatprep.subr.bf16.mxu0 0
    %3612 = vmatpush1.bf16.msra.mxu0 0
    %3613 = vmatprep.subr.bf16.mxu0 0
    %3614 = vmatpush1.bf16.msra.mxu0 0
    %3615 = vmatprep.subr.bf16.mxu0 0
    %3616 = vmatpush1.bf16.msra.mxu0 0
    %3617 = vmatprep.subr.bf16.mxu0 0
    %3618 = vmatpush1.bf16.msra.mxu0 0
    %3619 = vmatprep.subr.bf16.mxu0 0
    %3620 = vmatpush1.bf16.msra.mxu0 0
    %3621 = vmatprep.subr.bf16.mxu0 0
    %3622 = vmatpush1.bf16.msra.mxu0 0
    %3623 = vmatprep.subr.bf16.mxu0 0
    %3624 = vmatpush1.bf16.msra.mxu0 0
    %3625 = vmatprep.subr.bf16.mxu0 0
    %3626 = vmatpush1.bf16.msra.mxu0 0
    %3627 = vmatprep.subr.bf16.mxu0 0
    %3628 = vmatpush1.bf16.msra.mxu0 0
    %3629 = vmatprep.mubr.bf16.mxu0 0
    %3630 = vmatmul.mubr.bf16.gmra.mrb[0].mxu0 %v3595
    %v3631 = vpop.f32.mrb[0].mxu0
    %v3632 = vadd.f32 0.0, %v3631
    %v3633 = vpop.f32.mrb[0].mxu0
    %v3634 = vpop.f32.mrb[0].mxu0
    %v3635 = vpop.f32.mrb[0].mxu0
    %3636 = vdwg.mxu0
    %v3637 = vadd.f32 %v3572, %v3632
    %v3638 = vld [vmem:[#allocation28] sm:$0x1]
    %v3640 = vlaneseq
    %v3641 = vshrl.u32 %v3640, 7
    %v3642 = vsub.s32 0, %v3641
    %v3643 = vrot.slane %v3638, %v3642
    %v3645 = vadd.f32 %v3637, %v3643
    %v3646 = vmax.f32 %v3645, 0.0
    %v3647 = vld [vmem:[%s21] sm:$0xf]
    %v3648 = vld [vmem:[%s21 + $0x4] sm:$0xf]
    %v3649 = vld [vmem:[%s21 + $0x8] sm:$0xf]
    %v3650 = vld [vmem:[%s21 + $0xc] sm:$0xf]
    %v3651 = vld [vmem:[%s21 + $0x10] sm:$0xf]
    %v3652 = vld [vmem:[%s21 + $0x14] sm:$0xf]
    %v3653 = vld [vmem:[%s21 + $0x18] sm:$0xf]
    %v3654 = vld [vmem:[%s21 + $0x1c] sm:$0xf]
    %v3655 = vpack.c.bf16 %v3646, %v3646
    %v3656 = vld [vmem:[#allocation30] sm:$0x1]
    %v3658 = vlaneseq
    %v3659 = vshrl.u32 %v3658, 7
    %v3660 = vsub.s32 0, %v3659
    %v3661 = vrot.slane %v3656, %v3660
    %v3671 = vunpack.c.l.b16 %v3647
    %v3672 = vunpack.c.l.b16 %v3648
    %v3673 = vunpack.c.l.b16 %v3649
    %v3674 = vunpack.c.l.b16 %v3650
    %v3675 = vunpack.c.l.b16 %v3651
    %v3676 = vunpack.c.l.b16 %v3652
    %v3677 = vunpack.c.l.b16 %v3653
    %v3678 = vunpack.c.l.b16 %v3654
    %v3679 = vpack.c.b16 %v3672, %v3671
    %v3680 = vpack.c.b16 %v3674, %v3673
    %v3681 = vpack.c.b16 %v3676, %v3675
    %v3682 = vpack.c.b16 %v3678, %v3677
    %v3688 = vsel %vm1697, %v3655, 0
    %3690 = vmatprep.subr.bf16.mxu0 0
    %3691 = vmatpush1.bf16.msra.mxu0 %v3679
    %3692 = vmatprep.subr.bf16.mxu0 0
    %3693 = vmatpush1.bf16.msra.mxu0 %v3680
    %3694 = vmatprep.subr.bf16.mxu0 0
    %3695 = vmatpush1.bf16.msra.mxu0 %v3681
    %3696 = vmatprep.subr.bf16.mxu0 0
    %3697 = vmatpush1.bf16.msra.mxu0 %v3682
    %3698 = vmatprep.subr.bf16.mxu0 0
    %3699 = vmatpush1.bf16.msra.mxu0 0
    %3700 = vmatprep.subr.bf16.mxu0 0
    %3701 = vmatpush1.bf16.msra.mxu0 0
    %3702 = vmatprep.subr.bf16.mxu0 0
    %3703 = vmatpush1.bf16.msra.mxu0 0
    %3704 = vmatprep.subr.bf16.mxu0 0
    %3705 = vmatpush1.bf16.msra.mxu0 0
    %3706 = vmatprep.subr.bf16.mxu0 0
    %3707 = vmatpush1.bf16.msra.mxu0 0
    %3708 = vmatprep.subr.bf16.mxu0 0
    %3709 = vmatpush1.bf16.msra.mxu0 0
    %3710 = vmatprep.subr.bf16.mxu0 0
    %3711 = vmatpush1.bf16.msra.mxu0 0
    %3712 = vmatprep.subr.bf16.mxu0 0
    %3713 = vmatpush1.bf16.msra.mxu0 0
    %3714 = vmatprep.subr.bf16.mxu0 0
    %3715 = vmatpush1.bf16.msra.mxu0 0
    %3716 = vmatprep.subr.bf16.mxu0 0
    %3717 = vmatpush1.bf16.msra.mxu0 0
    %3718 = vmatprep.subr.bf16.mxu0 0
    %3719 = vmatpush1.bf16.msra.mxu0 0
    %3720 = vmatprep.subr.bf16.mxu0 0
    %3721 = vmatpush1.bf16.msra.mxu0 0
    %3722 = vmatprep.mubr.bf16.mxu0 0
    %3723 = vmatmul.mubr.bf16.gmra.mrb[0].mxu0 %v3688
    %v3724 = vpop.f32.mrb[0].mxu0
    %v3725 = vadd.f32 %v3661, %v3724
    %v3726 = vpop.f32.mrb[0].mxu0
    %v3727 = vpop.f32.mrb[0].mxu0
    %v3728 = vpop.f32.mrb[0].mxu0
    %3729 = vdwg.mxu0
    %vm3730 = vcmask 17408
    %3731 = vst.msk [vmem:[#allocation31] sm:$0x3] %vm3730, %v3725
    // Predicated region
    $region166: #{prior_transformer_forward.1} parent=1 // pred_check
      _
    $region167: #{prior_transformer_forward.1} parent=1 // pred_check_branch
      %3733 = sbr.rel (0) target = $region169
    $region168: #{prior_transformer_forward.1} parent=1 // pred_region
      %s3735 = ssub.s32 32, 32
      %3736 = vsyncadd [#allocation4], %s3735
      %s3738 = sshll.u32 [#allocation31], 4
      %s3739 = int_to_ptr.vmem [resolvable:$true] %s3738
      %3741 = dma.vmem_to_hbm [thread:$0]  %s3739, 32, %s23, [#allocation4]
    $region169: #{prior_transformer_forward.1} parent=1 // pred_fallthru
      _
    // Predicated region
    $region170: #{prior_transformer_forward.1} parent=1 // pred_check
      _
    $region171: #{prior_transformer_forward.1} parent=1 // pred_check_branch
      %3743 = sbr.rel (0) target = $region173
    $region172: #{prior_transformer_forward.1} parent=1 // pred_region
      %3744 = dma.done [#allocation4], 32
    $region173: #{prior_transformer_forward.1} parent=1 // pred_fallthru
      _
    %3745 = vsyncpa [#allocation3], 1
    %3746 = vsyncpa [#allocation8], 1
    %3747 = vsyncpa [#allocation11], 1
    %3748 = vsyncpa [#allocation14], 1
    %3749 = vsyncpa [#allocation17], 1
    %3750 = vsyncpa [#allocation20], 1
    %3751 = vsyncpa [#allocation23], 1
    %3752 = vsyncpa [#allocation26], 1
    %3753 = vsyncpa [#allocation29], 1
    %3754 = vsyncpa [#allocation4], 1
    %3755 = vsyncpa [#allocation5], 1

</llo_original>
